<compile_context>
chip_gen: v7x
topology: tpu7x:2x2x1
jax: 0.10.0
libtpu: 0.0.40
codegen_flags: <defaults>
</compile_context>

<pallas_src>
import functools
import math

import jax
import jax.numpy as jnp
import numpy as np
from jax import lax
from jax.experimental import pallas as pl
from jax.experimental.pallas import tpu as pltpu

REL_STATE_DIM = 6
EDGE_TYPE_DIM = 4
FUSE_IN = REL_STATE_DIM + EDGE_TYPE_DIM + 9     # 19
HIDDEN = 128                                    # LSTM hidden / fusion out
ATT = 64                                        # k/q/v dim
RESHAPE_DIM = 16
OUT_DIM = 64
SLOTS = 9
LANE = 128


def _edge_history_kernel(x_ref, w_in_ref, b_in_ref, whh_ref,
                         wk_ref, bk_ref, wq_ref, bq_ref, wv_ref, bv_ref,
                         wr_ref, br_ref, wo_ref, bo_ref, mask_ref,
                         out_ref, pre_scr, flat_scr,
                         *, bs, seq_len, nr_pad):
    H = HIDDEN

    # ---- hoisted LSTM input path: ALL timesteps in one matmul --------------
    # pre_gates[t*nr + r, :] = x[t, r] @ (Wf.T @ Wih.T) + (bf @ Wih.T + bih + bhh)
    pre_scr[...] = (jnp.dot(x_ref[...], w_in_ref[...],
                            preferred_element_type=jnp.float32) + b_in_ref[...])

    whh = whh_ref[...]                           # (128, 512), gate order i|f|o|g

    # ---- recurrence: only h @ Whh + gate math stays in the serial chain ----
    def step(t, carry):
        h, c = carry
        row0 = pl.multiple_of(t * nr_pad, 8)
        gates = pre_scr[pl.ds(row0, nr_pad), :] + jnp.dot(
            h, whh, preferred_element_type=jnp.float32)          # (nr, 512)
        sig = jax.nn.sigmoid(gates[:, 0:3 * H])   # i, f, o in one contiguous slice
        i_g = sig[:, 0:H]
        f_g = sig[:, H:2 * H]
        o_g = sig[:, 2 * H:3 * H]
        g_g = jnp.tanh(gates[:, 3 * H:4 * H])
        c_new = f_g * c + i_g * g_g
        h_new = o_g * jnp.tanh(c_new)
        return (h_new, c_new)

    zero = jnp.zeros((nr_pad, H), jnp.float32)
    h_last, _ = lax.fori_loop(0, seq_len, step, (zero, zero), unroll=True)

    # ---- k / q / v projections for all rows at once -------------------------
    key = jnp.dot(h_last, wk_ref[...], preferred_element_type=jnp.float32) + bk_ref[...]
    query = jnp.dot(h_last, wq_ref[...], preferred_element_type=jnp.float32) + bq_ref[...]
    value = jnp.dot(h_last, wv_ref[...], preferred_element_type=jnp.float32) + bv_ref[...]

    # ---- batched 9x9 attention via one block-diagonal-masked softmax --------
    logits = lax.dot_general(key, query, (((1,), (1,)), ((), ())),
                             preferred_element_type=jnp.float32)
    logits = logits * (1.0 / math.sqrt(ATT)) + mask_ref[...]      # (nr, nr)
    att = jax.nn.softmax(logits, axis=-1)
    ctx = jnp.dot(att, value, preferred_element_type=jnp.float32)  # (nr, 64)

    resh = jnp.dot(ctx, wr_ref[...], preferred_element_type=jnp.float32) + br_ref[...]
    resh = jnp.where(resh > 0, resh, 0.01 * resh)                  # leaky_relu

    # ---- output head: lane-contiguous (bs_pad, 144) slab, single matmul -----
    flat_scr[...] = jnp.zeros_like(flat_scr)
    for j in range(SLOTS):                       # slot-major rows -> static slices
        flat_scr[0:bs, j * RESHAPE_DIM:(j + 1) * RESHAPE_DIM] = (
            resh[j * bs:(j + 1) * bs, :])
    out_ref[...] = (jnp.dot(flat_scr[...], wo_ref[...],
                            preferred_element_type=jnp.float32) + bo_ref[...])


def edge_history_encoder(input_seqs, input_edge_types, params):
    """input_seqs: (bs, seq, 3, 3, 6); input_edge_types: (bs, seq, 3, 3, 4).

    Equivalent to EdgeHistoryEncoder.forward(..., mode='eval') (dropout = id).
    """
    bs, seq_len = input_seqs.shape[0], input_seqs.shape[1]
    n_real = bs * SLOTS
    nr_pad = ((n_real + 7) // 8) * 8            # pad rows to a sublane multiple
    bs_pad = max(8, ((bs + 7) // 8) * 8)

    # Glue: build (rel_state | edge_type | loc_onehot), slot-major/batch-minor.
    loc = jnp.broadcast_to(
        jnp.eye(SLOTS, dtype=jnp.float32).reshape(1, 1, 3, 3, SLOTS),
        (bs, seq_len, 3, 3, SLOTS))
    edge = jnp.concatenate(
        [input_seqs.astype(jnp.float32), input_edge_types.astype(jnp.float32), loc],
        axis=-1)                                               # (bs, seq, 3, 3, 19)
    edge = edge.reshape(bs, seq_len, SLOTS, FUSE_IN)
    edge = jnp.transpose(edge, (1, 2, 0, 3)).reshape(seq_len, n_real, FUSE_IN)
    edge = jnp.pad(edge, ((0, 0), (0, nr_pad - n_real), (0, 0)))
    x2d = edge.reshape(seq_len * nr_pad, FUSE_IN)              # (seq*nr_pad, 19)

    # Reorder PyTorch LSTM gates (i, f, g, o) -> (i, f, o, g): one sigmoid slice.
    def reorder(w):
        i, f, g, o = jnp.split(w, 4, axis=0)
        return jnp.concatenate([i, f, o, g], axis=0)

    wih = reorder(params['Wih'])
    whh = reorder(params['Whh'])
    bih = reorder(params['bih'])
    bhh = reorder(params['bhh'])

    # Fold edge_info_fusion into the LSTM input projection (exact linear fold).
    w_in = params['Wf'].T @ wih.T                               # (19, 512)
    b_in = (params['bf'].reshape(1, -1) @ wih.T
            + bih.reshape(1, -1) + bhh.reshape(1, -1))          # (1, 512)

    # Block-diagonal attention mask (additive bias). Padding rows attend to
    # everything (keeps their softmax finite); their outputs are never used.
    rows = np.arange(nr_pad)
    batch_of = rows % bs
    is_pad = rows >= n_real
    same = (batch_of[:, None] == batch_of[None, :]) & ~is_pad[:, None] & ~is_pad[None, :]
    allow = same | is_pad[:, None]
    mask = jnp.asarray(np.where(allow, 0.0, -1e30).astype(np.float32))

    def b2(v):  # biases as (1, dim) rows for clean broadcasting in VMEM
        return v.reshape(1, -1)

    wo = jnp.pad(params['Wo'].T, ((0, 0), (0, LANE - OUT_DIM)))  # (144, 128)
    bo = jnp.pad(b2(params['bo']), ((0, 0), (0, LANE - OUT_DIM)))

    args = (x2d, w_in, b_in, whh.T,
            params['Wk'].T, b2(params['bk']),
            params['Wq'].T, b2(params['bq']),
            params['Wv'].T, b2(params['bv']),
            params['Wr'].T, b2(params['br']),
            wo, bo, mask)

    flops = 2 * (seq_len * nr_pad * (FUSE_IN * 4 * HIDDEN + HIDDEN * 4 * HIDDEN)
                 + 3 * nr_pad * HIDDEN * ATT
                 + 2 * nr_pad * nr_pad * ATT
                 + nr_pad * ATT * RESHAPE_DIM
                 + bs_pad * SLOTS * RESHAPE_DIM * LANE)
    transcendentals = seq_len * nr_pad * 5 * HIDDEN + nr_pad * nr_pad
    bytes_accessed = sum(int(np.prod(a.shape)) * 4 for a in args) + bs_pad * LANE * 4

    kernel = functools.partial(_edge_history_kernel,
                               bs=bs, seq_len=seq_len, nr_pad=nr_pad)

    out = pl.pallas_call(
        kernel,
        out_shape=jax.ShapeDtypeStruct((bs_pad, LANE), jnp.float32),
        in_specs=[pl.BlockSpec(memory_space=pltpu.MemorySpace.VMEM)] * len(args),
        out_specs=pl.BlockSpec(memory_space=pltpu.MemorySpace.VMEM),
        scratch_shapes=[pltpu.VMEM((seq_len * nr_pad, 4 * HIDDEN), jnp.float32),
                        pltpu.VMEM((bs_pad, SLOTS * RESHAPE_DIM), jnp.float32)],
        cost_estimate=pl.CostEstimate(flops=flops,
                                      transcendentals=transcendentals,
                                      bytes_accessed=bytes_accessed),
    )(*args)
    return out[:bs, :OUT_DIM]


# ---------------------------------------------------------------------------
# Deterministic parameter init (PyTorch-default-style uniform, synthetic).
# ---------------------------------------------------------------------------
def init_params(key):
    ks = jax.random.split(key, 10)

    def lin(k, out_d, in_d):
        bound = 1.0 / math.sqrt(in_d)
        kw, kb = jax.random.split(k)
        W = jax.random.uniform(kw, (out_d, in_d), jnp.float32, -bound, bound)
        b = jax.random.uniform(kb, (out_d,), jnp.float32, -bound, bound)
        return W, b

    p = {}
    p['Wf'], p['bf'] = lin(ks[0], HIDDEN, FUSE_IN)          # edge_info_fusion
    bound = 1.0 / math.sqrt(HIDDEN)
    p['Wih'] = jax.random.uniform(ks[1], (4 * HIDDEN, HIDDEN), jnp.float32, -bound, bound)
    p['Whh'] = jax.random.uniform(ks[2], (4 * HIDDEN, HIDDEN), jnp.float32, -bound, bound)
    p['bih'] = jax.random.uniform(ks[3], (4 * HIDDEN,), jnp.float32, -bound, bound)
    p['bhh'] = jax.random.uniform(ks[4], (4 * HIDDEN,), jnp.float32, -bound, bound)
    p['Wk'], p['bk'] = lin(ks[5], ATT, HIDDEN)
    p['Wq'], p['bq'] = lin(ks[6], ATT, HIDDEN)
    p['Wv'], p['bv'] = lin(ks[7], ATT, HIDDEN)
    p['Wr'], p['br'] = lin(ks[8], RESHAPE_DIM, ATT)         # output_reshaper
    p['Wo'], p['bo'] = lin(ks[9], OUT_DIM, SLOTS * RESHAPE_DIM)  # output
    return p


# ---------------------------------------------------------------------------
# Pure-JAX reference of the PyTorch forward (eval mode) for verification.
# ---------------------------------------------------------------------------
def reference(input_seqs, input_edge_types, p):
    bs, seq_len = input_seqs.shape[0], input_seqs.shape[1]
    loc = jnp.broadcast_to(jnp.eye(9, dtype=jnp.float32).reshape(1, 1, 3, 3, 9),
                           (bs, seq_len, 3, 3, 9))
    edge = jnp.concatenate([input_seqs, input_edge_types, loc], axis=-1)
    edge = edge.reshape(bs, seq_len, 9, FUSE_IN)
    edge = jnp.transpose(edge, (1, 0, 2, 3)).reshape(seq_len, bs * 9, FUSE_IN)
    x = edge @ p['Wf'].T + p['bf']
    h = jnp.zeros((bs * 9, HIDDEN), jnp.float32)
    c = jnp.zeros((bs * 9, HIDDEN), jnp.float32)
    for t in range(seq_len):
        g = x[t] @ p['Wih'].T + h @ p['Whh'].T + p['bih'] + p['bhh']
        i = jax.nn.sigmoid(g[:, :HIDDEN])
        f = jax.nn.sigmoid(g[:, HIDDEN:2 * HIDDEN])
        gg = jnp.tanh(g[:, 2 * HIDDEN:3 * HIDDEN])
        o = jax.nn.sigmoid(g[:, 3 * HIDDEN:])
        c = f * c + i * gg
        h = o * jnp.tanh(c)
    h = h.reshape(bs, 9, HIDDEN)
    key = h @ p['Wk'].T + p['bk']
    query = h @ p['Wq'].T + p['bq']
    value = h @ p['Wv'].T + p['bv']
    att = jax.nn.softmax(key @ jnp.swapaxes(query, 1, 2) / math.sqrt(ATT), axis=-1)
    e = att @ value
    r = e @ p['Wr'].T + p['br']
    r = jnp.where(r > 0, r, 0.01 * r)
    return r.reshape(bs, 9 * RESHAPE_DIM) @ p['Wo'].T + p['bo']


if __name__ == "__main__":
    key = jax.random.PRNGKey(0)
    k_params, k_seq, k_type = jax.random.split(key, 3)

    bs, seq_len = 2, 8
    params = init_params(k_params)
    input_seqs = jax.random.normal(k_seq, (bs, seq_len, 3, 3, REL_STATE_DIM), jnp.float32)
    input_edge_types = jax.random.normal(k_type, (bs, seq_len, 3, 3, EDGE_TYPE_DIM), jnp.float32)

    out = edge_history_encoder(input_seqs, input_edge_types, params)
    out = jax.block_until_ready(out)

    ref = jax.block_until_ready(reference(input_seqs, input_edge_types, params))
    assert out.shape == (bs, OUT_DIM)
    np.testing.assert_allclose(np.asarray(out), np.asarray(ref), rtol=2e-3, atol=2e-3)
    print("KERNEL_OK")
</pallas_src>

<mosaic_0001>
module attributes {stable_mosaic.version = 11 : i64} {
  func.func @_edge_history_kernel(%arg0: memref<192x19xf32, #tpu.memory_space<vmem>>, %arg1: memref<19x512xf32, #tpu.memory_space<vmem>>, %arg2: memref<1x512xf32, #tpu.memory_space<vmem>>, %arg3: memref<128x512xf32, #tpu.memory_space<vmem>>, %arg4: memref<128x64xf32, #tpu.memory_space<vmem>>, %arg5: memref<1x64xf32, #tpu.memory_space<vmem>>, %arg6: memref<128x64xf32, #tpu.memory_space<vmem>>, %arg7: memref<1x64xf32, #tpu.memory_space<vmem>>, %arg8: memref<128x64xf32, #tpu.memory_space<vmem>>, %arg9: memref<1x64xf32, #tpu.memory_space<vmem>>, %arg10: memref<64x16xf32, #tpu.memory_space<vmem>>, %arg11: memref<1x16xf32, #tpu.memory_space<vmem>>, %arg12: memref<144x128xf32, #tpu.memory_space<vmem>>, %arg13: memref<1x128xf32, #tpu.memory_space<vmem>>, %arg14: memref<24x24xf32, #tpu.memory_space<vmem>>, %arg15: memref<8x128xf32, #tpu.memory_space<vmem>>, %arg16: memref<192x512xf32, #tpu.memory_space<vmem>>, %arg17: memref<8x144xf32, #tpu.memory_space<vmem>>) attributes {dimension_semantics = [], scalar_prefetch = 0 : i64, scratch_operands = 2 : i64, tpu.core_type = #tpu.core_type<tc>} {
    %c0 = arith.constant 0 : index
    %c0_0 = arith.constant 0 : index
    %0 = vector.load %arg0[%c0, %c0_0] : memref<192x19xf32, #tpu.memory_space<vmem>>, vector<192x19xf32>
    %c0_1 = arith.constant 0 : index
    %c0_2 = arith.constant 0 : index
    %1 = vector.load %arg1[%c0_1, %c0_2] : memref<19x512xf32, #tpu.memory_space<vmem>>, vector<19x512xf32>
    %cst = arith.constant dense<0.000000e+00> : vector<192x512xf32>
    %2 = tpu.matmul %0, %1, %cst {dimension_numbers = #tpu.dot_dimension_numbers<[1], [0], [0], [1], [0, 0, 1, 1], [], []>} : vector<192x19xf32>, vector<19x512xf32>, vector<192x512xf32> -> vector<192x512xf32>
    %c0_3 = arith.constant 0 : index
    %c0_4 = arith.constant 0 : index
    %3 = vector.load %arg2[%c0_3, %c0_4] : memref<1x512xf32, #tpu.memory_space<vmem>>, vector<1x512xf32>
    %4 = vector.broadcast %3 : vector<1x512xf32> to vector<192x512xf32>
    %5 = arith.addf %2, %4 : vector<192x512xf32>
    %c0_5 = arith.constant 0 : index
    %c0_6 = arith.constant 0 : index
    %6 = vector.load %arg16[%c0_5, %c0_6] : memref<192x512xf32, #tpu.memory_space<vmem>>, vector<192x512xf32>
    tpu.vector_store %arg16[%c0_5, %c0_6], %5 {strides = array<i32>} : memref<192x512xf32, #tpu.memory_space<vmem>>, vector<192x512xf32>,
    %c0_7 = arith.constant 0 : index
    %c0_8 = arith.constant 0 : index
    %7 = vector.load %arg3[%c0_7, %c0_8] : memref<128x512xf32, #tpu.memory_space<vmem>>, vector<128x512xf32>
    %cst_9 = arith.constant 0.000000e+00 : f32
    %8 = vector.broadcast %cst_9 : f32 to vector<24x128xf32>
    %c0_i32 = arith.constant 0 : i32
    %c24_i32 = arith.constant 24 : i32
    %9 = arith.muli %c0_i32, %c24_i32 : i32
    %10 = tpu.assume_multiple %9, 8 : i32
    %11 = arith.index_cast %10 : i32 to index
    %c0_10 = arith.constant 0 : index
    %12 = vector.load %arg16[%11, %c0_10] : memref<192x512xf32, #tpu.memory_space<vmem>>, vector<24x512xf32>
    %cst_11 = arith.constant dense<0.000000e+00> : vector<24x512xf32>
    %13 = tpu.matmul %8, %7, %cst_11 {dimension_numbers = #tpu.dot_dimension_numbers<[1], [0], [0], [1], [0, 0, 1, 1], [], []>} : vector<24x128xf32>, vector<128x512xf32>, vector<24x512xf32> -> vector<24x512xf32>
    %14 = arith.addf %12, %13 : vector<24x512xf32>
    %15 = vector.extract_strided_slice %14 {offsets = [0, 0], sizes = [24, 384], strides = [1, 1]} : vector<24x512xf32> to vector<24x384xf32>
    %16 = arith.negf %15 : vector<24x384xf32>
    %17 = math.exp %16 : vector<24x384xf32>
    %cst_12 = arith.constant 1.000000e+00 : f32
    %18 = vector.broadcast %cst_12 : f32 to vector<24x384xf32>
    %19 = arith.addf %18, %17 : vector<24x384xf32>
    %20 = arith.divf %18, %19 : vector<24x384xf32>
    %21 = vector.extract_strided_slice %20 {offsets = [0, 0], sizes = [24, 128], strides = [1, 1]} : vector<24x384xf32> to vector<24x128xf32>
    %22 = vector.extract_strided_slice %20 {offsets = [0, 128], sizes = [24, 128], strides = [1, 1]} : vector<24x384xf32> to vector<24x128xf32>
    %23 = vector.extract_strided_slice %20 {offsets = [0, 256], sizes = [24, 128], strides = [1, 1]} : vector<24x384xf32> to vector<24x128xf32>
    %24 = vector.extract_strided_slice %14 {offsets = [0, 384], sizes = [24, 128], strides = [1, 1]} : vector<24x512xf32> to vector<24x128xf32>
    %25 = math.tanh %24 : vector<24x128xf32>
    %26 = arith.mulf %22, %8 : vector<24x128xf32>
    %27 = arith.mulf %21, %25 : vector<24x128xf32>
    %28 = arith.addf %26, %27 : vector<24x128xf32>
    %29 = math.tanh %28 : vector<24x128xf32>
    %30 = arith.mulf %23, %29 : vector<24x128xf32>
    %c1_i32 = arith.constant 1 : i32
    %c24_i32_13 = arith.constant 24 : i32
    %31 = arith.muli %c1_i32, %c24_i32_13 : i32
    %32 = tpu.assume_multiple %31, 8 : i32
    %33 = arith.index_cast %32 : i32 to index
    %c0_14 = arith.constant 0 : index
    %34 = vector.load %arg16[%33, %c0_14] : memref<192x512xf32, #tpu.memory_space<vmem>>, vector<24x512xf32>
    %cst_15 = arith.constant dense<0.000000e+00> : vector<24x512xf32>
    %35 = tpu.matmul %30, %7, %cst_15 {dimension_numbers = #tpu.dot_dimension_numbers<[1], [0], [0], [1], [0, 0, 1, 1], [], []>} : vector<24x128xf32>, vector<128x512xf32>, vector<24x512xf32> -> vector<24x512xf32>
    %36 = arith.addf %34, %35 : vector<24x512xf32>
    %37 = vector.extract_strided_slice %36 {offsets = [0, 0], sizes = [24, 384], strides = [1, 1]} : vector<24x512xf32> to vector<24x384xf32>
    %38 = arith.negf %37 : vector<24x384xf32>
    %39 = math.exp %38 : vector<24x384xf32>
    %cst_16 = arith.constant 1.000000e+00 : f32
    %40 = vector.broadcast %cst_16 : f32 to vector<24x384xf32>
    %41 = arith.addf %40, %39 : vector<24x384xf32>
    %42 = arith.divf %40, %41 : vector<24x384xf32>
    %43 = vector.extract_strided_slice %42 {offsets = [0, 0], sizes = [24, 128], strides = [1, 1]} : vector<24x384xf32> to vector<24x128xf32>
    %44 = vector.extract_strided_slice %42 {offsets = [0, 128], sizes = [24, 128], strides = [1, 1]} : vector<24x384xf32> to vector<24x128xf32>
    %45 = vector.extract_strided_slice %42 {offsets = [0, 256], sizes = [24, 128], strides = [1, 1]} : vector<24x384xf32> to vector<24x128xf32>
    %46 = vector.extract_strided_slice %36 {offsets = [0, 384], sizes = [24, 128], strides = [1, 1]} : vector<24x512xf32> to vector<24x128xf32>
    %47 = math.tanh %46 : vector<24x128xf32>
    %48 = arith.mulf %44, %28 : vector<24x128xf32>
    %49 = arith.mulf %43, %47 : vector<24x128xf32>
    %50 = arith.addf %48, %49 : vector<24x128xf32>
    %51 = math.tanh %50 : vector<24x128xf32>
    %52 = arith.mulf %45, %51 : vector<24x128xf32>
    %c2_i32 = arith.constant 2 : i32
    %c24_i32_17 = arith.constant 24 : i32
    %53 = arith.muli %c2_i32, %c24_i32_17 : i32
    %54 = tpu.assume_multiple %53, 8 : i32
    %55 = arith.index_cast %54 : i32 to index
    %c0_18 = arith.constant 0 : index
    %56 = vector.load %arg16[%55, %c0_18] : memref<192x512xf32, #tpu.memory_space<vmem>>, vector<24x512xf32>
    %cst_19 = arith.constant dense<0.000000e+00> : vector<24x512xf32>
    %57 = tpu.matmul %52, %7, %cst_19 {dimension_numbers = #tpu.dot_dimension_numbers<[1], [0], [0], [1], [0, 0, 1, 1], [], []>} : vector<24x128xf32>, vector<128x512xf32>, vector<24x512xf32> -> vector<24x512xf32>
    %58 = arith.addf %56, %57 : vector<24x512xf32>
    %59 = vector.extract_strided_slice %58 {offsets = [0, 0], sizes = [24, 384], strides = [1, 1]} : vector<24x512xf32> to vector<24x384xf32>
    %60 = arith.negf %59 : vector<24x384xf32>
    %61 = math.exp %60 : vector<24x384xf32>
    %cst_20 = arith.constant 1.000000e+00 : f32
    %62 = vector.broadcast %cst_20 : f32 to vector<24x384xf32>
    %63 = arith.addf %62, %61 : vector<24x384xf32>
    %64 = arith.divf %62, %63 : vector<24x384xf32>
    %65 = vector.extract_strided_slice %64 {offsets = [0, 0], sizes = [24, 128], strides = [1, 1]} : vector<24x384xf32> to vector<24x128xf32>
    %66 = vector.extract_strided_slice %64 {offsets = [0, 128], sizes = [24, 128], strides = [1, 1]} : vector<24x384xf32> to vector<24x128xf32>
    %67 = vector.extract_strided_slice %64 {offsets = [0, 256], sizes = [24, 128], strides = [1, 1]} : vector<24x384xf32> to vector<24x128xf32>
    %68 = vector.extract_strided_slice %58 {offsets = [0, 384], sizes = [24, 128], strides = [1, 1]} : vector<24x512xf32> to vector<24x128xf32>
    %69 = math.tanh %68 : vector<24x128xf32>
    %70 = arith.mulf %66, %50 : vector<24x128xf32>
    %71 = arith.mulf %65, %69 : vector<24x128xf32>
    %72 = arith.addf %70, %71 : vector<24x128xf32>
    %73 = math.tanh %72 : vector<24x128xf32>
    %74 = arith.mulf %67, %73 : vector<24x128xf32>
    %c3_i32 = arith.constant 3 : i32
    %c24_i32_21 = arith.constant 24 : i32
    %75 = arith.muli %c3_i32, %c24_i32_21 : i32
    %76 = tpu.assume_multiple %75, 8 : i32
    %77 = arith.index_cast %76 : i32 to index
    %c0_22 = arith.constant 0 : index
    %78 = vector.load %arg16[%77, %c0_22] : memref<192x512xf32, #tpu.memory_space<vmem>>, vector<24x512xf32>
    %cst_23 = arith.constant dense<0.000000e+00> : vector<24x512xf32>
    %79 = tpu.matmul %74, %7, %cst_23 {dimension_numbers = #tpu.dot_dimension_numbers<[1], [0], [0], [1], [0, 0, 1, 1], [], []>} : vector<24x128xf32>, vector<128x512xf32>, vector<24x512xf32> -> vector<24x512xf32>
    %80 = arith.addf %78, %79 : vector<24x512xf32>
    %81 = vector.extract_strided_slice %80 {offsets = [0, 0], sizes = [24, 384], strides = [1, 1]} : vector<24x512xf32> to vector<24x384xf32>
    %82 = arith.negf %81 : vector<24x384xf32>
    %83 = math.exp %82 : vector<24x384xf32>
    %cst_24 = arith.constant 1.000000e+00 : f32
    %84 = vector.broadcast %cst_24 : f32 to vector<24x384xf32>
    %85 = arith.addf %84, %83 : vector<24x384xf32>
    %86 = arith.divf %84, %85 : vector<24x384xf32>
    %87 = vector.extract_strided_slice %86 {offsets = [0, 0], sizes = [24, 128], strides = [1, 1]} : vector<24x384xf32> to vector<24x128xf32>
    %88 = vector.extract_strided_slice %86 {offsets = [0, 128], sizes = [24, 128], strides = [1, 1]} : vector<24x384xf32> to vector<24x128xf32>
    %89 = vector.extract_strided_slice %86 {offsets = [0, 256], sizes = [24, 128], strides = [1, 1]} : vector<24x384xf32> to vector<24x128xf32>
    %90 = vector.extract_strided_slice %80 {offsets = [0, 384], sizes = [24, 128], strides = [1, 1]} : vector<24x512xf32> to vector<24x128xf32>
    %91 = math.tanh %90 : vector<24x128xf32>
    %92 = arith.mulf %88, %72 : vector<24x128xf32>
    %93 = arith.mulf %87, %91 : vector<24x128xf32>
    %94 = arith.addf %92, %93 : vector<24x128xf32>
    %95 = math.tanh %94 : vector<24x128xf32>
    %96 = arith.mulf %89, %95 : vector<24x128xf32>
    %c4_i32 = arith.constant 4 : i32
    %c24_i32_25 = arith.constant 24 : i32
    %97 = arith.muli %c4_i32, %c24_i32_25 : i32
    %98 = tpu.assume_multiple %97, 8 : i32
    %99 = arith.index_cast %98 : i32 to index
    %c0_26 = arith.constant 0 : index
    %100 = vector.load %arg16[%99, %c0_26] : memref<192x512xf32, #tpu.memory_space<vmem>>, vector<24x512xf32>
    %cst_27 = arith.constant dense<0.000000e+00> : vector<24x512xf32>
    %101 = tpu.matmul %96, %7, %cst_27 {dimension_numbers = #tpu.dot_dimension_numbers<[1], [0], [0], [1], [0, 0, 1, 1], [], []>} : vector<24x128xf32>, vector<128x512xf32>, vector<24x512xf32> -> vector<24x512xf32>
    %102 = arith.addf %100, %101 : vector<24x512xf32>
    %103 = vector.extract_strided_slice %102 {offsets = [0, 0], sizes = [24, 384], strides = [1, 1]} : vector<24x512xf32> to vector<24x384xf32>
    %104 = arith.negf %103 : vector<24x384xf32>
    %105 = math.exp %104 : vector<24x384xf32>
    %cst_28 = arith.constant 1.000000e+00 : f32
    %106 = vector.broadcast %cst_28 : f32 to vector<24x384xf32>
    %107 = arith.addf %106, %105 : vector<24x384xf32>
    %108 = arith.divf %106, %107 : vector<24x384xf32>
    %109 = vector.extract_strided_slice %108 {offsets = [0, 0], sizes = [24, 128], strides = [1, 1]} : vector<24x384xf32> to vector<24x128xf32>
    %110 = vector.extract_strided_slice %108 {offsets = [0, 128], sizes = [24, 128], strides = [1, 1]} : vector<24x384xf32> to vector<24x128xf32>
    %111 = vector.extract_strided_slice %108 {offsets = [0, 256], sizes = [24, 128], strides = [1, 1]} : vector<24x384xf32> to vector<24x128xf32>
    %112 = vector.extract_strided_slice %102 {offsets = [0, 384], sizes = [24, 128], strides = [1, 1]} : vector<24x512xf32> to vector<24x128xf32>
    %113 = math.tanh %112 : vector<24x128xf32>
    %114 = arith.mulf %110, %94 : vector<24x128xf32>
    %115 = arith.mulf %109, %113 : vector<24x128xf32>
    %116 = arith.addf %114, %115 : vector<24x128xf32>
    %117 = math.tanh %116 : vector<24x128xf32>
    %118 = arith.mulf %111, %117 : vector<24x128xf32>
    %c5_i32 = arith.constant 5 : i32
    %c24_i32_29 = arith.constant 24 : i32
    %119 = arith.muli %c5_i32, %c24_i32_29 : i32
    %120 = tpu.assume_multiple %119, 8 : i32
    %121 = arith.index_cast %120 : i32 to index
    %c0_30 = arith.constant 0 : index
    %122 = vector.load %arg16[%121, %c0_30] : memref<192x512xf32, #tpu.memory_space<vmem>>, vector<24x512xf32>
    %cst_31 = arith.constant dense<0.000000e+00> : vector<24x512xf32>
    %123 = tpu.matmul %118, %7, %cst_31 {dimension_numbers = #tpu.dot_dimension_numbers<[1], [0], [0], [1], [0, 0, 1, 1], [], []>} : vector<24x128xf32>, vector<128x512xf32>, vector<24x512xf32> -> vector<24x512xf32>
    %124 = arith.addf %122, %123 : vector<24x512xf32>
    %125 = vector.extract_strided_slice %124 {offsets = [0, 0], sizes = [24, 384], strides = [1, 1]} : vector<24x512xf32> to vector<24x384xf32>
    %126 = arith.negf %125 : vector<24x384xf32>
    %127 = math.exp %126 : vector<24x384xf32>
    %cst_32 = arith.constant 1.000000e+00 : f32
    %128 = vector.broadcast %cst_32 : f32 to vector<24x384xf32>
    %129 = arith.addf %128, %127 : vector<24x384xf32>
    %130 = arith.divf %128, %129 : vector<24x384xf32>
    %131 = vector.extract_strided_slice %130 {offsets = [0, 0], sizes = [24, 128], strides = [1, 1]} : vector<24x384xf32> to vector<24x128xf32>
    %132 = vector.extract_strided_slice %130 {offsets = [0, 128], sizes = [24, 128], strides = [1, 1]} : vector<24x384xf32> to vector<24x128xf32>
    %133 = vector.extract_strided_slice %130 {offsets = [0, 256], sizes = [24, 128], strides = [1, 1]} : vector<24x384xf32> to vector<24x128xf32>
    %134 = vector.extract_strided_slice %124 {offsets = [0, 384], sizes = [24, 128], strides = [1, 1]} : vector<24x512xf32> to vector<24x128xf32>
    %135 = math.tanh %134 : vector<24x128xf32>
    %136 = arith.mulf %132, %116 : vector<24x128xf32>
    %137 = arith.mulf %131, %135 : vector<24x128xf32>
    %138 = arith.addf %136, %137 : vector<24x128xf32>
    %139 = math.tanh %138 : vector<24x128xf32>
    %140 = arith.mulf %133, %139 : vector<24x128xf32>
    %c6_i32 = arith.constant 6 : i32
    %c24_i32_33 = arith.constant 24 : i32
    %141 = arith.muli %c6_i32, %c24_i32_33 : i32
    %142 = tpu.assume_multiple %141, 8 : i32
    %143 = arith.index_cast %142 : i32 to index
    %c0_34 = arith.constant 0 : index
    %144 = vector.load %arg16[%143, %c0_34] : memref<192x512xf32, #tpu.memory_space<vmem>>, vector<24x512xf32>
    %cst_35 = arith.constant dense<0.000000e+00> : vector<24x512xf32>
    %145 = tpu.matmul %140, %7, %cst_35 {dimension_numbers = #tpu.dot_dimension_numbers<[1], [0], [0], [1], [0, 0, 1, 1], [], []>} : vector<24x128xf32>, vector<128x512xf32>, vector<24x512xf32> -> vector<24x512xf32>
    %146 = arith.addf %144, %145 : vector<24x512xf32>
    %147 = vector.extract_strided_slice %146 {offsets = [0, 0], sizes = [24, 384], strides = [1, 1]} : vector<24x512xf32> to vector<24x384xf32>
    %148 = arith.negf %147 : vector<24x384xf32>
    %149 = math.exp %148 : vector<24x384xf32>
    %cst_36 = arith.constant 1.000000e+00 : f32
    %150 = vector.broadcast %cst_36 : f32 to vector<24x384xf32>
    %151 = arith.addf %150, %149 : vector<24x384xf32>
    %152 = arith.divf %150, %151 : vector<24x384xf32>
    %153 = vector.extract_strided_slice %152 {offsets = [0, 0], sizes = [24, 128], strides = [1, 1]} : vector<24x384xf32> to vector<24x128xf32>
    %154 = vector.extract_strided_slice %152 {offsets = [0, 128], sizes = [24, 128], strides = [1, 1]} : vector<24x384xf32> to vector<24x128xf32>
    %155 = vector.extract_strided_slice %152 {offsets = [0, 256], sizes = [24, 128], strides = [1, 1]} : vector<24x384xf32> to vector<24x128xf32>
    %156 = vector.extract_strided_slice %146 {offsets = [0, 384], sizes = [24, 128], strides = [1, 1]} : vector<24x512xf32> to vector<24x128xf32>
    %157 = math.tanh %156 : vector<24x128xf32>
    %158 = arith.mulf %154, %138 : vector<24x128xf32>
    %159 = arith.mulf %153, %157 : vector<24x128xf32>
    %160 = arith.addf %158, %159 : vector<24x128xf32>
    %161 = math.tanh %160 : vector<24x128xf32>
    %162 = arith.mulf %155, %161 : vector<24x128xf32>
    %c7_i32 = arith.constant 7 : i32
    %c24_i32_37 = arith.constant 24 : i32
    %163 = arith.muli %c7_i32, %c24_i32_37 : i32
    %164 = tpu.assume_multiple %163, 8 : i32
    %165 = arith.index_cast %164 : i32 to index
    %c0_38 = arith.constant 0 : index
    %166 = vector.load %arg16[%165, %c0_38] : memref<192x512xf32, #tpu.memory_space<vmem>>, vector<24x512xf32>
    %cst_39 = arith.constant dense<0.000000e+00> : vector<24x512xf32>
    %167 = tpu.matmul %162, %7, %cst_39 {dimension_numbers = #tpu.dot_dimension_numbers<[1], [0], [0], [1], [0, 0, 1, 1], [], []>} : vector<24x128xf32>, vector<128x512xf32>, vector<24x512xf32> -> vector<24x512xf32>
    %168 = arith.addf %166, %167 : vector<24x512xf32>
    %169 = vector.extract_strided_slice %168 {offsets = [0, 0], sizes = [24, 384], strides = [1, 1]} : vector<24x512xf32> to vector<24x384xf32>
    %170 = arith.negf %169 : vector<24x384xf32>
    %171 = math.exp %170 : vector<24x384xf32>
    %cst_40 = arith.constant 1.000000e+00 : f32
    %172 = vector.broadcast %cst_40 : f32 to vector<24x384xf32>
    %173 = arith.addf %172, %171 : vector<24x384xf32>
    %174 = arith.divf %172, %173 : vector<24x384xf32>
    %175 = vector.extract_strided_slice %174 {offsets = [0, 0], sizes = [24, 128], strides = [1, 1]} : vector<24x384xf32> to vector<24x128xf32>
    %176 = vector.extract_strided_slice %174 {offsets = [0, 128], sizes = [24, 128], strides = [1, 1]} : vector<24x384xf32> to vector<24x128xf32>
    %177 = vector.extract_strided_slice %174 {offsets = [0, 256], sizes = [24, 128], strides = [1, 1]} : vector<24x384xf32> to vector<24x128xf32>
    %178 = vector.extract_strided_slice %168 {offsets = [0, 384], sizes = [24, 128], strides = [1, 1]} : vector<24x512xf32> to vector<24x128xf32>
    %179 = math.tanh %178 : vector<24x128xf32>
    %180 = arith.mulf %176, %160 : vector<24x128xf32>
    %181 = arith.mulf %175, %179 : vector<24x128xf32>
    %182 = arith.addf %180, %181 : vector<24x128xf32>
    %183 = math.tanh %182 : vector<24x128xf32>
    %184 = arith.mulf %177, %183 : vector<24x128xf32>
    %c8_i32 = arith.constant 8 : i32
    %c0_41 = arith.constant 0 : index
    %c0_42 = arith.constant 0 : index
    %185 = vector.load %arg4[%c0_41, %c0_42] : memref<128x64xf32, #tpu.memory_space<vmem>>, vector<128x64xf32>
    %cst_43 = arith.constant dense<0.000000e+00> : vector<24x64xf32>
    %186 = tpu.matmul %184, %185, %cst_43 {dimension_numbers = #tpu.dot_dimension_numbers<[1], [0], [0], [1], [0, 0, 1, 1], [], []>} : vector<24x128xf32>, vector<128x64xf32>, vector<24x64xf32> -> vector<24x64xf32>
    %c0_44 = arith.constant 0 : index
    %c0_45 = arith.constant 0 : index
    %187 = vector.load %arg5[%c0_44, %c0_45] : memref<1x64xf32, #tpu.memory_space<vmem>>, vector<1x64xf32>
    %188 = vector.broadcast %187 : vector<1x64xf32> to vector<24x64xf32>
    %189 = arith.addf %186, %188 : vector<24x64xf32>
    %c0_46 = arith.constant 0 : index
    %c0_47 = arith.constant 0 : index
    %190 = vector.load %arg6[%c0_46, %c0_47] : memref<128x64xf32, #tpu.memory_space<vmem>>, vector<128x64xf32>
    %cst_48 = arith.constant dense<0.000000e+00> : vector<24x64xf32>
    %191 = tpu.matmul %184, %190, %cst_48 {dimension_numbers = #tpu.dot_dimension_numbers<[1], [0], [0], [1], [0, 0, 1, 1], [], []>} : vector<24x128xf32>, vector<128x64xf32>, vector<24x64xf32> -> vector<24x64xf32>
    %c0_49 = arith.constant 0 : index
    %c0_50 = arith.constant 0 : index
    %192 = vector.load %arg7[%c0_49, %c0_50] : memref<1x64xf32, #tpu.memory_space<vmem>>, vector<1x64xf32>
    %193 = vector.broadcast %192 : vector<1x64xf32> to vector<24x64xf32>
    %194 = arith.addf %191, %193 : vector<24x64xf32>
    %c0_51 = arith.constant 0 : index
    %c0_52 = arith.constant 0 : index
    %195 = vector.load %arg8[%c0_51, %c0_52] : memref<128x64xf32, #tpu.memory_space<vmem>>, vector<128x64xf32>
    %cst_53 = arith.constant dense<0.000000e+00> : vector<24x64xf32>
    %196 = tpu.matmul %184, %195, %cst_53 {dimension_numbers = #tpu.dot_dimension_numbers<[1], [0], [0], [1], [0, 0, 1, 1], [], []>} : vector<24x128xf32>, vector<128x64xf32>, vector<24x64xf32> -> vector<24x64xf32>
    %c0_54 = arith.constant 0 : index
    %c0_55 = arith.constant 0 : index
    %197 = vector.load %arg9[%c0_54, %c0_55] : memref<1x64xf32, #tpu.memory_space<vmem>>, vector<1x64xf32>
    %198 = vector.broadcast %197 : vector<1x64xf32> to vector<24x64xf32>
    %199 = arith.addf %196, %198 : vector<24x64xf32>
    %cst_56 = arith.constant dense<0.000000e+00> : vector<24x24xf32>
    %200 = tpu.matmul %189, %194, %cst_56 {dimension_numbers = #tpu.dot_dimension_numbers<[1], [1], [0], [0], [0, 0, 1, 0], [], []>} : vector<24x64xf32>, vector<24x64xf32>, vector<24x24xf32> -> vector<24x24xf32>
    %cst_57 = arith.constant 1.250000e-01 : f32
    %201 = vector.broadcast %cst_57 : f32 to vector<24x24xf32>
    %202 = arith.mulf %200, %201 : vector<24x24xf32>
    %c0_58 = arith.constant 0 : index
    %c0_59 = arith.constant 0 : index
    %203 = vector.load %arg14[%c0_58, %c0_59] : memref<24x24xf32, #tpu.memory_space<vmem>>, vector<24x24xf32>
    %204 = arith.addf %202, %203 : vector<24x24xf32>
    %cst_60 = arith.constant dense<0xFF800000> : vector<24xf32>
    %205 = vector.multi_reduction <maximumf>, %204, %cst_60 [1] : vector<24x24xf32> to vector<24xf32>
    %cst_61 = arith.constant 0xFF800000 : f32
    %206 = vector.broadcast %cst_61 : f32 to vector<24xf32>
    %207 = arith.maximumf %206, %205 : vector<24xf32>
    %208 = vector.shape_cast %207 : vector<24xf32> to vector<24x1xf32>
    %209 = vector.broadcast %208 : vector<24x1xf32> to vector<24x24xf32>
    %210 = arith.subf %204, %209 : vector<24x24xf32>
    %211 = math.exp %210 : vector<24x24xf32>
    %cst_62 = arith.constant dense<0.000000e+00> : vector<24xf32>
    %212 = vector.multi_reduction <add>, %211, %cst_62 [1] : vector<24x24xf32> to vector<24xf32>
    %213 = vector.shape_cast %212 : vector<24xf32> to vector<24x1xf32>
    %214 = vector.broadcast %213 : vector<24x1xf32> to vector<24x24xf32>
    %215 = arith.divf %211, %214 : vector<24x24xf32>
    %cst_63 = arith.constant dense<0.000000e+00> : vector<24x64xf32>
    %216 = tpu.matmul %215, %199, %cst_63 {dimension_numbers = #tpu.dot_dimension_numbers<[1], [0], [0], [1], [0, 0, 1, 1], [], []>} : vector<24x24xf32>, vector<24x64xf32>, vector<24x64xf32> -> vector<24x64xf32>
    %c0_64 = arith.constant 0 : index
    %c0_65 = arith.constant 0 : index
    %217 = vector.load %arg10[%c0_64, %c0_65] : memref<64x16xf32, #tpu.memory_space<vmem>>, vector<64x16xf32>
    %cst_66 = arith.constant dense<0.000000e+00> : vector<24x16xf32>
    %218 = tpu.matmul %216, %217, %cst_66 {dimension_numbers = #tpu.dot_dimension_numbers<[1], [0], [0], [1], [0, 0, 1, 1], [], []>} : vector<24x64xf32>, vector<64x16xf32>, vector<24x16xf32> -> vector<24x16xf32>
    %c0_67 = arith.constant 0 : index
    %c0_68 = arith.constant 0 : index
    %219 = vector.load %arg11[%c0_67, %c0_68] : memref<1x16xf32, #tpu.memory_space<vmem>>, vector<1x16xf32>
    %220 = vector.broadcast %219 : vector<1x16xf32> to vector<24x16xf32>
    %221 = arith.addf %218, %220 : vector<24x16xf32>
    %cst_69 = arith.constant 0.000000e+00 : f32
    %222 = vector.broadcast %cst_69 : f32 to vector<24x16xf32>
    %223 = arith.cmpf ogt, %221, %222 : vector<24x16xf32>
    %cst_70 = arith.constant 0.00999999977 : f32
    %224 = vector.broadcast %cst_70 : f32 to vector<24x16xf32>
    %225 = arith.mulf %224, %221 : vector<24x16xf32>
    %226 = arith.select %223, %221, %225 : vector<24x16xi1>, vector<24x16xf32>
    %cst_71 = arith.constant 0.000000e+00 : f32
    %227 = vector.broadcast %cst_71 : f32 to vector<8x144xf32>
    %c0_72 = arith.constant 0 : index
    %c0_73 = arith.constant 0 : index
    %228 = vector.load %arg17[%c0_72, %c0_73] : memref<8x144xf32, #tpu.memory_space<vmem>>, vector<8x144xf32>
    tpu.vector_store %arg17[%c0_72, %c0_73], %227 {strides = array<i32>} : memref<8x144xf32, #tpu.memory_space<vmem>>, vector<8x144xf32>,
    %229 = vector.extract_strided_slice %226 {offsets = [0, 0], sizes = [2, 16], strides = [1, 1]} : vector<24x16xf32> to vector<2x16xf32>
    %c0_74 = arith.constant 0 : index
    %c0_75 = arith.constant 0 : index
    %230 = vector.load %arg17[%c0_74, %c0_75] : memref<8x144xf32, #tpu.memory_space<vmem>>, vector<2x16xf32>
    tpu.vector_store %arg17[%c0_74, %c0_75], %229 {strides = array<i32>} : memref<8x144xf32, #tpu.memory_space<vmem>>, vector<2x16xf32>,
    %231 = vector.extract_strided_slice %226 {offsets = [2, 0], sizes = [2, 16], strides = [1, 1]} : vector<24x16xf32> to vector<2x16xf32>
    %c0_76 = arith.constant 0 : index
    %c16 = arith.constant 16 : index
    %232 = vector.load %arg17[%c0_76, %c16] : memref<8x144xf32, #tpu.memory_space<vmem>>, vector<2x16xf32>
    tpu.vector_store %arg17[%c0_76, %c16], %231 {strides = array<i32>} : memref<8x144xf32, #tpu.memory_space<vmem>>, vector<2x16xf32>,
    %233 = vector.extract_strided_slice %226 {offsets = [4, 0], sizes = [2, 16], strides = [1, 1]} : vector<24x16xf32> to vector<2x16xf32>
    %c0_77 = arith.constant 0 : index
    %c32 = arith.constant 32 : index
    %234 = vector.load %arg17[%c0_77, %c32] : memref<8x144xf32, #tpu.memory_space<vmem>>, vector<2x16xf32>
    tpu.vector_store %arg17[%c0_77, %c32], %233 {strides = array<i32>} : memref<8x144xf32, #tpu.memory_space<vmem>>, vector<2x16xf32>,
    %235 = vector.extract_strided_slice %226 {offsets = [6, 0], sizes = [2, 16], strides = [1, 1]} : vector<24x16xf32> to vector<2x16xf32>
    %c0_78 = arith.constant 0 : index
    %c48 = arith.constant 48 : index
    %236 = vector.load %arg17[%c0_78, %c48] : memref<8x144xf32, #tpu.memory_space<vmem>>, vector<2x16xf32>
    tpu.vector_store %arg17[%c0_78, %c48], %235 {strides = array<i32>} : memref<8x144xf32, #tpu.memory_space<vmem>>, vector<2x16xf32>,
    %237 = vector.extract_strided_slice %226 {offsets = [8, 0], sizes = [2, 16], strides = [1, 1]} : vector<24x16xf32> to vector<2x16xf32>
    %c0_79 = arith.constant 0 : index
    %c64 = arith.constant 64 : index
    %238 = vector.load %arg17[%c0_79, %c64] : memref<8x144xf32, #tpu.memory_space<vmem>>, vector<2x16xf32>
    tpu.vector_store %arg17[%c0_79, %c64], %237 {strides = array<i32>} : memref<8x144xf32, #tpu.memory_space<vmem>>, vector<2x16xf32>,
    %239 = vector.extract_strided_slice %226 {offsets = [10, 0], sizes = [2, 16], strides = [1, 1]} : vector<24x16xf32> to vector<2x16xf32>
    %c0_80 = arith.constant 0 : index
    %c80 = arith.constant 80 : index
    %240 = vector.load %arg17[%c0_80, %c80] : memref<8x144xf32, #tpu.memory_space<vmem>>, vector<2x16xf32>
    tpu.vector_store %arg17[%c0_80, %c80], %239 {strides = array<i32>} : memref<8x144xf32, #tpu.memory_space<vmem>>, vector<2x16xf32>,
    %241 = vector.extract_strided_slice %226 {offsets = [12, 0], sizes = [2, 16], strides = [1, 1]} : vector<24x16xf32> to vector<2x16xf32>
    %c0_81 = arith.constant 0 : index
    %c96 = arith.constant 96 : index
    %242 = vector.load %arg17[%c0_81, %c96] : memref<8x144xf32, #tpu.memory_space<vmem>>, vector<2x16xf32>
    tpu.vector_store %arg17[%c0_81, %c96], %241 {strides = array<i32>} : memref<8x144xf32, #tpu.memory_space<vmem>>, vector<2x16xf32>,
    %243 = vector.extract_strided_slice %226 {offsets = [14, 0], sizes = [2, 16], strides = [1, 1]} : vector<24x16xf32> to vector<2x16xf32>
    %c0_82 = arith.constant 0 : index
    %c112 = arith.constant 112 : index
    %244 = vector.load %arg17[%c0_82, %c112] : memref<8x144xf32, #tpu.memory_space<vmem>>, vector<2x16xf32>
    tpu.vector_store %arg17[%c0_82, %c112], %243 {strides = array<i32>} : memref<8x144xf32, #tpu.memory_space<vmem>>, vector<2x16xf32>,
    %245 = vector.extract_strided_slice %226 {offsets = [16, 0], sizes = [2, 16], strides = [1, 1]} : vector<24x16xf32> to vector<2x16xf32>
    %c0_83 = arith.constant 0 : index
    %c128 = arith.constant 128 : index
    %246 = vector.load %arg17[%c0_83, %c128] : memref<8x144xf32, #tpu.memory_space<vmem>>, vector<2x16xf32>
    tpu.vector_store %arg17[%c0_83, %c128], %245 {strides = array<i32>} : memref<8x144xf32, #tpu.memory_space<vmem>>, vector<2x16xf32>,
    %c0_84 = arith.constant 0 : index
    %c0_85 = arith.constant 0 : index
    %247 = vector.load %arg17[%c0_84, %c0_85] : memref<8x144xf32, #tpu.memory_space<vmem>>, vector<8x144xf32>
    %c0_86 = arith.constant 0 : index
    %c0_87 = arith.constant 0 : index
    %248 = vector.load %arg12[%c0_86, %c0_87] : memref<144x128xf32, #tpu.memory_space<vmem>>, vector<144x128xf32>
    %cst_88 = arith.constant dense<0.000000e+00> : vector<8x128xf32>
    %249 = tpu.matmul %247, %248, %cst_88 {dimension_numbers = #tpu.dot_dimension_numbers<[1], [0], [0], [1], [0, 0, 1, 1], [], []>} : vector<8x144xf32>, vector<144x128xf32>, vector<8x128xf32> -> vector<8x128xf32>
    %c0_89 = arith.constant 0 : index
    %c0_90 = arith.constant 0 : index
    %250 = vector.load %arg13[%c0_89, %c0_90] : memref<1x128xf32, #tpu.memory_space<vmem>>, vector<1x128xf32>
    %251 = vector.broadcast %250 : vector<1x128xf32> to vector<8x128xf32>
    %252 = arith.addf %249, %251 : vector<8x128xf32>
    %c0_91 = arith.constant 0 : index
    %c0_92 = arith.constant 0 : index
    %253 = vector.load %arg15[%c0_91, %c0_92] : memref<8x128xf32, #tpu.memory_space<vmem>>, vector<8x128xf32>
    tpu.vector_store %arg15[%c0_91, %c0_92], %252 {strides = array<i32>} : memref<8x128xf32, #tpu.memory_space<vmem>>, vector<8x128xf32>,
    return
  }
}

</mosaic_0001>

<llo_original>
// kernel: tpu_custom_call.1
$region0: #{tpu_custom_call.1}
  #allocation0 [shape = 'u32[]', space=smem, size = 0x4, offset = 0x4, fixed_abs, tag = 'smem constant byte address 0x4 - core index']
  #allocation1 [shape = 'u32[144,128]{1,0:T(1,128)}', space=vmem, size = 0x12000, scoped, tag = 'internal scratch']
  #allocation2 [shape = 'f32[192,512]{1,0:T(8,128)}', space=vmem, size = 0x60000, scoped, tag = 'scratch operand']
  #allocation3 [shape = 'f32[8,144]{1,0:T(8,128)}', space=vmem, size = 0x2000, scoped, tag = 'scratch operand']
  %s0 = inlined_call_operand.vmem [shape: f32[192,19], index: 0, kind: input, shape index: {}]
  %s1 = inlined_call_operand.vmem [shape: f32[19,512], index: 1, kind: input, shape index: {}]
  %s2 = inlined_call_operand.vmem [shape: f32[1,512], index: 2, kind: input, shape index: {}]
  %s3 = inlined_call_operand.vmem [shape: f32[128,512], index: 3, kind: input, shape index: {}]
  %s4 = inlined_call_operand.vmem [shape: f32[128,64], index: 4, kind: input, shape index: {}]
  %s5 = inlined_call_operand.vmem [shape: f32[1,64], index: 5, kind: input, shape index: {}]
  %s6 = inlined_call_operand.vmem [shape: f32[128,64], index: 6, kind: input, shape index: {}]
  %s7 = inlined_call_operand.vmem [shape: f32[1,64], index: 7, kind: input, shape index: {}]
  %s8 = inlined_call_operand.vmem [shape: f32[128,64], index: 8, kind: input, shape index: {}]
  %s9 = inlined_call_operand.vmem [shape: f32[1,64], index: 9, kind: input, shape index: {}]
  %s10 = inlined_call_operand.vmem [shape: f32[64,16], index: 10, kind: input, shape index: {}]
  %s11 = inlined_call_operand.vmem [shape: f32[1,16], index: 11, kind: input, shape index: {}]
  %s12 = inlined_call_operand.vmem [shape: f32[144,128], index: 12, kind: input, shape index: {}]
  %s13 = inlined_call_operand.vmem [shape: f32[1,128], index: 13, kind: input, shape index: {}]
  %s14 = inlined_call_operand.vmem [shape: f32[24,24], index: 14, kind: input, shape index: {}]
  %s15 = inlined_call_operand.hbm [shape: f32[8,128], index: 15, kind: output, shape index: {}]
  %s16 = sld [smem:[#allocation0]]
  $region70: #{tpu_custom_call.1} parent=0
    _
  %s18 = ssub.s32 1, %s16
  %s19 = scalar_select 0, %s18, %s16
  $region1: #{tpu_custom_call.1} parent=0
    #allocation4 [shape = 'u8[4096]{0}', space=vmem, size = 0x1000, scoped, tag = 'output window, operand 0, single buffered']
    #allocation5 [shape = 's32[1]{0}', space=sflag, size = 0x4, scoped, tag = 'scoped memory for tpu_custom_call.1']
    %20 = vsyncpa [#allocation5], 0
    // Predicated region
    $region2: #{tpu_custom_call.1} parent=1 // pred_check
      _
    $region3: #{tpu_custom_call.1} parent=1 // pred_check_branch
      %22 = sbr.rel (0) target = $region5
    $region4: #{tpu_custom_call.1} parent=1 // pred_region
      _
    $region5: #{tpu_custom_call.1} parent=1 // pred_fallthru
      _
    // Predicated region
    $region6: #{tpu_custom_call.1} parent=1 // pred_check
      _
    $region7: #{tpu_custom_call.1} parent=1 // pred_check_branch
      %24 = sbr.rel (0) target = $region9
    $region8: #{tpu_custom_call.1} parent=1 // pred_region
      _
    $region9: #{tpu_custom_call.1} parent=1 // pred_fallthru
      _
    // Predicated region
    $region10: #{tpu_custom_call.1} parent=1 // pred_check
      _
    $region11: #{tpu_custom_call.1} parent=1 // pred_check_branch
      %26 = sbr.rel (0) target = $region13
    $region12: #{tpu_custom_call.1} parent=1 // pred_region
      _
    $region13: #{tpu_custom_call.1} parent=1 // pred_fallthru
      _
    // Predicated region
    $region14: #{tpu_custom_call.1} parent=1 // pred_check
      _
    $region15: #{tpu_custom_call.1} parent=1 // pred_check_branch
      %28 = sbr.rel (0) target = $region17
    $region16: #{tpu_custom_call.1} parent=1 // pred_region
      _
    $region17: #{tpu_custom_call.1} parent=1 // pred_fallthru
      _
    // Predicated region
    $region18: #{tpu_custom_call.1} parent=1 // pred_check
      _
    $region19: #{tpu_custom_call.1} parent=1 // pred_check_branch
      %30 = sbr.rel (0) target = $region21
    $region20: #{tpu_custom_call.1} parent=1 // pred_region
      _
    $region21: #{tpu_custom_call.1} parent=1 // pred_fallthru
      _
    // Predicated region
    $region22: #{tpu_custom_call.1} parent=1 // pred_check
      _
    $region23: #{tpu_custom_call.1} parent=1 // pred_check_branch
      %32 = sbr.rel (0) target = $region25
    $region24: #{tpu_custom_call.1} parent=1 // pred_region
      _
    $region25: #{tpu_custom_call.1} parent=1 // pred_fallthru
      _
    // Predicated region
    $region26: #{tpu_custom_call.1} parent=1 // pred_check
      _
    $region27: #{tpu_custom_call.1} parent=1 // pred_check_branch
      %34 = sbr.rel (0) target = $region29
    $region28: #{tpu_custom_call.1} parent=1 // pred_region
      _
    $region29: #{tpu_custom_call.1} parent=1 // pred_fallthru
      _
    // Predicated region
    $region30: #{tpu_custom_call.1} parent=1 // pred_check
      _
    $region31: #{tpu_custom_call.1} parent=1 // pred_check_branch
      %36 = sbr.rel (0) target = $region33
    $region32: #{tpu_custom_call.1} parent=1 // pred_region
      _
    $region33: #{tpu_custom_call.1} parent=1 // pred_fallthru
      _
    // Predicated region
    $region34: #{tpu_custom_call.1} parent=1 // pred_check
      _
    $region35: #{tpu_custom_call.1} parent=1 // pred_check_branch
      %38 = sbr.rel (0) target = $region37
    $region36: #{tpu_custom_call.1} parent=1 // pred_region
      _
    $region37: #{tpu_custom_call.1} parent=1 // pred_fallthru
      _
    // Predicated region
    $region38: #{tpu_custom_call.1} parent=1 // pred_check
      _
    $region39: #{tpu_custom_call.1} parent=1 // pred_check_branch
      %40 = sbr.rel (0) target = $region41
    $region40: #{tpu_custom_call.1} parent=1 // pred_region
      _
    $region41: #{tpu_custom_call.1} parent=1 // pred_fallthru
      _
    // Predicated region
    $region42: #{tpu_custom_call.1} parent=1 // pred_check
      _
    $region43: #{tpu_custom_call.1} parent=1 // pred_check_branch
      %42 = sbr.rel (0) target = $region45
    $region44: #{tpu_custom_call.1} parent=1 // pred_region
      _
    $region45: #{tpu_custom_call.1} parent=1 // pred_fallthru
      _
    // Predicated region
    $region46: #{tpu_custom_call.1} parent=1 // pred_check
      _
    $region47: #{tpu_custom_call.1} parent=1 // pred_check_branch
      %44 = sbr.rel (0) target = $region49
    $region48: #{tpu_custom_call.1} parent=1 // pred_region
      _
    $region49: #{tpu_custom_call.1} parent=1 // pred_fallthru
      _
    // Predicated region
    $region50: #{tpu_custom_call.1} parent=1 // pred_check
      _
    $region51: #{tpu_custom_call.1} parent=1 // pred_check_branch
      %46 = sbr.rel (0) target = $region53
    $region52: #{tpu_custom_call.1} parent=1 // pred_region
      _
    $region53: #{tpu_custom_call.1} parent=1 // pred_fallthru
      _
    // Predicated region
    $region54: #{tpu_custom_call.1} parent=1 // pred_check
      _
    $region55: #{tpu_custom_call.1} parent=1 // pred_check_branch
      %48 = sbr.rel (0) target = $region57
    $region56: #{tpu_custom_call.1} parent=1 // pred_region
      _
    $region57: #{tpu_custom_call.1} parent=1 // pred_fallthru
      _
    // Predicated region
    $region58: #{tpu_custom_call.1} parent=1 // pred_check
      _
    $region59: #{tpu_custom_call.1} parent=1 // pred_check_branch
      %50 = sbr.rel (0) target = $region61
    $region60: #{tpu_custom_call.1} parent=1 // pred_region
      _
    $region61: #{tpu_custom_call.1} parent=1 // pred_fallthru
      _
    %v51 = vld [vmem:[%s0] sm:$0xff]
    %v52 = vld [vmem:[%s0 + $0x8] sm:$0xff]
    %v53 = vld [vmem:[%s0 + $0x10] sm:$0xff]
    %v54 = vld [vmem:[%s0 + $0x18] sm:$0xff]
    %v55 = vld [vmem:[%s0 + $0x20] sm:$0xff]
    %v56 = vld [vmem:[%s0 + $0x28] sm:$0xff]
    %v57 = vld [vmem:[%s0 + $0x30] sm:$0xff]
    %v58 = vld [vmem:[%s0 + $0x38] sm:$0xff]
    %v59 = vld [vmem:[%s0 + $0x40] sm:$0xff]
    %v60 = vld [vmem:[%s0 + $0x48] sm:$0xff]
    %v61 = vld [vmem:[%s0 + $0x50] sm:$0xff]
    %v62 = vld [vmem:[%s0 + $0x58] sm:$0xff]
    %v63 = vld [vmem:[%s0 + $0x60] sm:$0xff]
    %v64 = vld [vmem:[%s0 + $0x68] sm:$0xff]
    %v65 = vld [vmem:[%s0 + $0x70] sm:$0xff]
    %v66 = vld [vmem:[%s0 + $0x78] sm:$0xff]
    %v67 = vld [vmem:[%s0 + $0x80] sm:$0xff]
    %v68 = vld [vmem:[%s0 + $0x88] sm:$0xff]
    %v69 = vld [vmem:[%s0 + $0x90] sm:$0xff]
    %v70 = vld [vmem:[%s0 + $0x98] sm:$0xff]
    %v71 = vld [vmem:[%s0 + $0xa0] sm:$0xff]
    %v72 = vld [vmem:[%s0 + $0xa8] sm:$0xff]
    %v73 = vld [vmem:[%s0 + $0xb0] sm:$0xff]
    %v74 = vld [vmem:[%s0 + $0xb8] sm:$0xff]
    %v75 = vld [vmem:[%s1] sm:$0xff]
    %v76 = vld [vmem:[%s1 + $0x8] sm:$0xff]
    %v77 = vld [vmem:[%s1 + $0x10] sm:$0xff]
    %v78 = vld [vmem:[%s1 + $0x18] sm:$0xff]
    %v79 = vld [vmem:[%s1 + $0x20] sm:$0xff]
    %v80 = vld [vmem:[%s1 + $0x28] sm:$0xff]
    %v81 = vld [vmem:[%s1 + $0x30] sm:$0xff]
    %v82 = vld [vmem:[%s1 + $0x38] sm:$0xff]
    %v83 = vld [vmem:[%s1 + $0x40] sm:$0x7]
    %v84 = vld [vmem:[%s1 + $0x48] sm:$0x7]
    %v85 = vld [vmem:[%s1 + $0x50] sm:$0x7]
    %v86 = vld [vmem:[%s1 + $0x58] sm:$0x7]
    %v87 = vld [vmem:[%s2] sm:$0xf]
    %v89 = vlaneseq
    %v90 = vshrl.u32 %v89, 7
    %v91 = vsub.s32 0, %v90
    %v92 = vrot.slane %v87, %v91
    %v93 = vlaneseq
    %v94 = vshrl.u32 %v93, 7
    %v95 = vsub.s32 1, %v94
    %v96 = vrot.slane %v87, %v95
    %v97 = vlaneseq
    %v98 = vshrl.u32 %v97, 7
    %v99 = vsub.s32 2, %v98
    %v100 = vrot.slane %v87, %v99
    %v101 = vlaneseq
    %v102 = vshrl.u32 %v101, 7
    %v103 = vsub.s32 3, %v102
    %v104 = vrot.slane %v87, %v103
    %vm109 = vcmask 154624
    %v111 = vsel %vm109, %v51, 0
    %v114 = vsel %vm109, %v52, 0
    %v117 = vsel %vm109, %v53, 0
    %v120 = vsel %vm109, %v54, 0
    %v123 = vsel %vm109, %v55, 0
    %v126 = vsel %vm109, %v56, 0
    %v129 = vsel %vm109, %v57, 0
    %v132 = vsel %vm109, %v58, 0
    %v135 = vsel %vm109, %v59, 0
    %v138 = vsel %vm109, %v60, 0
    %v141 = vsel %vm109, %v61, 0
    %v144 = vsel %vm109, %v62, 0
    %v147 = vsel %vm109, %v63, 0
    %v150 = vsel %vm109, %v64, 0
    %v153 = vsel %vm109, %v65, 0
    %v156 = vsel %vm109, %v66, 0
    %v159 = vsel %vm109, %v67, 0
    %v162 = vsel %vm109, %v68, 0
    %v165 = vsel %vm109, %v69, 0
    %v168 = vsel %vm109, %v70, 0
    %v171 = vsel %vm109, %v71, 0
    %v174 = vsel %vm109, %v72, 0
    %v177 = vsel %vm109, %v73, 0
    %v180 = vsel %vm109, %v74, 0
    %vm182 = vcmask 1042432
    %v184 = vsel %vm182, %v83, 0
    %v187 = vsel %vm182, %v84, 0
    %v190 = vsel %vm182, %v85, 0
    %v193 = vsel %vm182, %v86, 0
    %195 = vmatprep.subr.mxu0 %v76
    %196 = vmatpush1.msra.mxu0 %v75
    %197 = vmatprep.subr.mxu0 %v80
    %198 = vmatpush1.msra.mxu0 %v79
    %199 = vmatprep.subr.mxu0 %v187
    %200 = vmatpush1.msra.mxu0 %v184
    %201 = vmatprep.subr.mxu0 0.0
    %202 = vmatpush1.msra.mxu0 0.0
    %203 = vmatprep.subr.mxu0 0.0
    %204 = vmatpush1.msra.mxu0 0.0
    %205 = vmatprep.subr.mxu0 0.0
    %206 = vmatpush1.msra.mxu0 0.0
    %207 = vmatprep.subr.mxu0 0.0
    %208 = vmatpush1.msra.mxu0 0.0
    %209 = vmatprep.subr.mxu0 0.0
    %210 = vmatpush1.msra.mxu0 0.0
    %211 = vmatprep.subr.mxu0 0.0
    %212 = vmatpush1.msra.mxu0 0.0
    %213 = vmatprep.subr.mxu0 0.0
    %214 = vmatpush1.msra.mxu0 0.0
    %215 = vmatprep.subr.mxu0 0.0
    %216 = vmatpush1.msra.mxu0 0.0
    %217 = vmatprep.subr.mxu0 0.0
    %218 = vmatpush1.msra.mxu0 0.0
    %219 = vmatprep.subr.mxu0 0.0
    %220 = vmatpush1.msra.mxu0 0.0
    %221 = vmatprep.subr.mxu0 0.0
    %222 = vmatpush1.msra.mxu0 0.0
    %223 = vmatprep.subr.mxu0 0.0
    %224 = vmatpush1.msra.mxu0 0.0
    %225 = vmatprep.subr.mxu0 0.0
    %226 = vmatpush1.msra.mxu0 0.0
    %227 = vmatprep.subr.mxu0 0.0
    %228 = vmatpush1.msra.mxu0 0.0
    %229 = vmatprep.subr.mxu0 0.0
    %230 = vmatpush1.msra.mxu0 0.0
    %231 = vmatprep.subr.mxu0 0.0
    %232 = vmatpush1.msra.mxu0 0.0
    %233 = vmatprep.subr.mxu0 0.0
    %234 = vmatpush1.msra.mxu0 0.0
    %235 = vmatprep.subr.mxu0 0.0
    %236 = vmatpush1.msra.mxu0 0.0
    %237 = vmatprep.subr.mxu0 0.0
    %238 = vmatpush1.msra.mxu0 0.0
    %239 = vmatprep.subr.mxu0 0.0
    %240 = vmatpush1.msra.mxu0 0.0
    %241 = vmatprep.subr.mxu0 0.0
    %242 = vmatpush1.msra.mxu0 0.0
    %243 = vmatprep.subr.mxu0 0.0
    %244 = vmatpush1.msra.mxu0 0.0
    %245 = vmatprep.subr.mxu0 0.0
    %246 = vmatpush1.msra.mxu0 0.0
    %247 = vmatprep.subr.mxu0 0.0
    %248 = vmatpush1.msra.mxu0 0.0
    %249 = vmatprep.subr.mxu0 0.0
    %250 = vmatpush1.msra.mxu0 0.0
    %251 = vmatprep.subr.mxu0 0.0
    %252 = vmatpush1.msra.mxu0 0.0
    %253 = vmatprep.subr.mxu0 0.0
    %254 = vmatpush1.msra.mxu0 0.0
    %255 = vmatprep.subr.mxu0 0.0
    %256 = vmatpush1.msra.mxu0 0.0
    %257 = vmatprep.subr.mxu0 0.0
    %258 = vmatpush1.msra.mxu0 0.0
    %259 = vmatprep.mubr.f32.mxu0 0.0
    %260 = vmatmul.mubr.f32.gmra.mrb[0].mxu0 %v111
    %v261 = vpop.f32.mrb[0].mxu0
    %v262 = vadd.f32 %v92, %v261
    %v263 = vpop.f32.mrb[0].mxu0
    %v264 = vadd.f32 %v96, %v263
    %265 = vmatprep.mubr.f32.mxu0 0.0
    %266 = vmatmul.mubr.f32.gmra.mrb[0].mxu0 %v114
    %v267 = vpop.f32.mrb[0].mxu0
    %v268 = vadd.f32 %v92, %v267
    %v269 = vpop.f32.mrb[0].mxu0
    %v270 = vadd.f32 %v96, %v269
    %271 = vmatprep.mubr.f32.mxu0 0.0
    %272 = vmatmul.mubr.f32.gmra.mrb[0].mxu0 %v117
    %v273 = vpop.f32.mrb[0].mxu0
    %v274 = vadd.f32 %v92, %v273
    %v275 = vpop.f32.mrb[0].mxu0
    %v276 = vadd.f32 %v96, %v275
    %277 = vmatprep.mubr.f32.mxu0 0.0
    %278 = vmatmul.mubr.f32.gmra.mrb[0].mxu0 %v120
    %v279 = vpop.f32.mrb[0].mxu0
    %v280 = vadd.f32 %v92, %v279
    %v281 = vpop.f32.mrb[0].mxu0
    %v282 = vadd.f32 %v96, %v281
    %283 = vmatprep.mubr.f32.mxu0 0.0
    %284 = vmatmul.mubr.f32.gmra.mrb[0].mxu0 %v123
    %v285 = vpop.f32.mrb[0].mxu0
    %v286 = vadd.f32 %v92, %v285
    %v287 = vpop.f32.mrb[0].mxu0
    %v288 = vadd.f32 %v96, %v287
    %289 = vmatprep.mubr.f32.mxu0 0.0
    %290 = vmatmul.mubr.f32.gmra.mrb[0].mxu0 %v126
    %v291 = vpop.f32.mrb[0].mxu0
    %v292 = vadd.f32 %v92, %v291
    %v293 = vpop.f32.mrb[0].mxu0
    %v294 = vadd.f32 %v96, %v293
    %295 = vmatprep.mubr.f32.mxu0 0.0
    %296 = vmatmul.mubr.f32.gmra.mrb[0].mxu0 %v129
    %v297 = vpop.f32.mrb[0].mxu0
    %v298 = vadd.f32 %v92, %v297
    %v299 = vpop.f32.mrb[0].mxu0
    %v300 = vadd.f32 %v96, %v299
    %301 = vmatprep.mubr.f32.mxu0 0.0
    %302 = vmatmul.mubr.f32.gmra.mrb[0].mxu0 %v132
    %v303 = vpop.f32.mrb[0].mxu0
    %v304 = vadd.f32 %v92, %v303
    %v305 = vpop.f32.mrb[0].mxu0
    %v306 = vadd.f32 %v96, %v305
    %307 = vmatprep.mubr.f32.mxu0 0.0
    %308 = vmatmul.mubr.f32.gmra.mrb[0].mxu0 %v135
    %v309 = vpop.f32.mrb[0].mxu0
    %v310 = vadd.f32 %v92, %v309
    %v311 = vpop.f32.mrb[0].mxu0
    %v312 = vadd.f32 %v96, %v311
    %313 = vmatprep.mubr.f32.mxu0 0.0
    %314 = vmatmul.mubr.f32.gmra.mrb[0].mxu0 %v138
    %v315 = vpop.f32.mrb[0].mxu0
    %v316 = vadd.f32 %v92, %v315
    %v317 = vpop.f32.mrb[0].mxu0
    %v318 = vadd.f32 %v96, %v317
    %319 = vmatprep.mubr.f32.mxu0 0.0
    %320 = vmatmul.mubr.f32.gmra.mrb[0].mxu0 %v141
    %v321 = vpop.f32.mrb[0].mxu0
    %v322 = vadd.f32 %v92, %v321
    %v323 = vpop.f32.mrb[0].mxu0
    %v324 = vadd.f32 %v96, %v323
    %325 = vmatprep.mubr.f32.mxu0 0.0
    %326 = vmatmul.mubr.f32.gmra.mrb[0].mxu0 %v144
    %v327 = vpop.f32.mrb[0].mxu0
    %v328 = vadd.f32 %v92, %v327
    %v329 = vpop.f32.mrb[0].mxu0
    %v330 = vadd.f32 %v96, %v329
    %331 = vmatprep.mubr.f32.mxu0 0.0
    %332 = vmatmul.mubr.f32.gmra.mrb[0].mxu0 %v147
    %v333 = vpop.f32.mrb[0].mxu0
    %v334 = vadd.f32 %v92, %v333
    %v335 = vpop.f32.mrb[0].mxu0
    %v336 = vadd.f32 %v96, %v335
    %337 = vmatprep.mubr.f32.mxu0 0.0
    %338 = vmatmul.mubr.f32.gmra.mrb[0].mxu0 %v150
    %v339 = vpop.f32.mrb[0].mxu0
    %v340 = vadd.f32 %v92, %v339
    %v341 = vpop.f32.mrb[0].mxu0
    %v342 = vadd.f32 %v96, %v341
    %343 = vmatprep.mubr.f32.mxu0 0.0
    %344 = vmatmul.mubr.f32.gmra.mrb[0].mxu0 %v153
    %v345 = vpop.f32.mrb[0].mxu0
    %v346 = vadd.f32 %v92, %v345
    %v347 = vpop.f32.mrb[0].mxu0
    %v348 = vadd.f32 %v96, %v347
    %349 = vmatprep.mubr.f32.mxu0 0.0
    %350 = vmatmul.mubr.f32.gmra.mrb[0].mxu0 %v156
    %v351 = vpop.f32.mrb[0].mxu0
    %v352 = vadd.f32 %v92, %v351
    %v353 = vpop.f32.mrb[0].mxu0
    %v354 = vadd.f32 %v96, %v353
    %355 = vmatprep.mubr.f32.mxu0 0.0
    %356 = vmatmul.mubr.f32.gmra.mrb[0].mxu0 %v159
    %v357 = vpop.f32.mrb[0].mxu0
    %v358 = vadd.f32 %v92, %v357
    %v359 = vpop.f32.mrb[0].mxu0
    %v360 = vadd.f32 %v96, %v359
    %361 = vmatprep.mubr.f32.mxu0 0.0
    %362 = vmatmul.mubr.f32.gmra.mrb[0].mxu0 %v162
    %v363 = vpop.f32.mrb[0].mxu0
    %v364 = vadd.f32 %v92, %v363
    %v365 = vpop.f32.mrb[0].mxu0
    %v366 = vadd.f32 %v96, %v365
    %367 = vmatprep.mubr.f32.mxu0 0.0
    %368 = vmatmul.mubr.f32.gmra.mrb[0].mxu0 %v165
    %v369 = vpop.f32.mrb[0].mxu0
    %v370 = vadd.f32 %v92, %v369
    %v371 = vpop.f32.mrb[0].mxu0
    %v372 = vadd.f32 %v96, %v371
    %373 = vmatprep.mubr.f32.mxu0 0.0
    %374 = vmatmul.mubr.f32.gmra.mrb[0].mxu0 %v168
    %v375 = vpop.f32.mrb[0].mxu0
    %v376 = vadd.f32 %v92, %v375
    %v377 = vpop.f32.mrb[0].mxu0
    %v378 = vadd.f32 %v96, %v377
    %379 = vmatprep.mubr.f32.mxu0 0.0
    %380 = vmatmul.mubr.f32.gmra.mrb[0].mxu0 %v171
    %v381 = vpop.f32.mrb[0].mxu0
    %v382 = vadd.f32 %v92, %v381
    %v383 = vpop.f32.mrb[0].mxu0
    %v384 = vadd.f32 %v96, %v383
    %385 = vmatprep.mubr.f32.mxu0 0.0
    %386 = vmatmul.mubr.f32.gmra.mrb[0].mxu0 %v174
    %v387 = vpop.f32.mrb[0].mxu0
    %v388 = vadd.f32 %v92, %v387
    %v389 = vpop.f32.mrb[0].mxu0
    %v390 = vadd.f32 %v96, %v389
    %391 = vmatprep.mubr.f32.mxu0 0.0
    %392 = vmatmul.mubr.f32.gmra.mrb[0].mxu0 %v177
    %v393 = vpop.f32.mrb[0].mxu0
    %v394 = vadd.f32 %v92, %v393
    %v395 = vpop.f32.mrb[0].mxu0
    %v396 = vadd.f32 %v96, %v395
    %397 = vmatprep.mubr.f32.mxu0 0.0
    %398 = vmatmul.mubr.f32.gmra.mrb[0].mxu0 %v180
    %v399 = vpop.f32.mrb[0].mxu0
    %v400 = vadd.f32 %v92, %v399
    %v401 = vpop.f32.mrb[0].mxu0
    %v402 = vadd.f32 %v96, %v401
    %403 = vdwg.mxu0
    %404 = vmatprep.subr.mxu0 %v78
    %405 = vmatpush1.msra.mxu0 %v77
    %406 = vmatprep.subr.mxu0 %v82
    %407 = vmatpush1.msra.mxu0 %v81
    %408 = vmatprep.subr.mxu0 %v193
    %409 = vmatpush1.msra.mxu0 %v190
    %410 = vmatprep.subr.mxu0 0.0
    %411 = vmatpush1.msra.mxu0 0.0
    %412 = vmatprep.subr.mxu0 0.0
    %413 = vmatpush1.msra.mxu0 0.0
    %414 = vmatprep.subr.mxu0 0.0
    %415 = vmatpush1.msra.mxu0 0.0
    %416 = vmatprep.subr.mxu0 0.0
    %417 = vmatpush1.msra.mxu0 0.0
    %418 = vmatprep.subr.mxu0 0.0
    %419 = vmatpush1.msra.mxu0 0.0
    %420 = vmatprep.subr.mxu0 0.0
    %421 = vmatpush1.msra.mxu0 0.0
    %422 = vmatprep.subr.mxu0 0.0
    %423 = vmatpush1.msra.mxu0 0.0
    %424 = vmatprep.subr.mxu0 0.0
    %425 = vmatpush1.msra.mxu0 0.0
    %426 = vmatprep.subr.mxu0 0.0
    %427 = vmatpush1.msra.mxu0 0.0
    %428 = vmatprep.subr.mxu0 0.0
    %429 = vmatpush1.msra.mxu0 0.0
    %430 = vmatprep.subr.mxu0 0.0
    %431 = vmatpush1.msra.mxu0 0.0
    %432 = vmatprep.subr.mxu0 0.0
    %433 = vmatpush1.msra.mxu0 0.0
    %434 = vmatprep.subr.mxu0 0.0
    %435 = vmatpush1.msra.mxu0 0.0
    %436 = vmatprep.subr.mxu0 0.0
    %437 = vmatpush1.msra.mxu0 0.0
    %438 = vmatprep.subr.mxu0 0.0
    %439 = vmatpush1.msra.mxu0 0.0
    %440 = vmatprep.subr.mxu0 0.0
    %441 = vmatpush1.msra.mxu0 0.0
    %442 = vmatprep.subr.mxu0 0.0
    %443 = vmatpush1.msra.mxu0 0.0
    %444 = vmatprep.subr.mxu0 0.0
    %445 = vmatpush1.msra.mxu0 0.0
    %446 = vmatprep.subr.mxu0 0.0
    %447 = vmatpush1.msra.mxu0 0.0
    %448 = vmatprep.subr.mxu0 0.0
    %449 = vmatpush1.msra.mxu0 0.0
    %450 = vmatprep.subr.mxu0 0.0
    %451 = vmatpush1.msra.mxu0 0.0
    %452 = vmatprep.subr.mxu0 0.0
    %453 = vmatpush1.msra.mxu0 0.0
    %454 = vmatprep.subr.mxu0 0.0
    %455 = vmatpush1.msra.mxu0 0.0
    %456 = vmatprep.subr.mxu0 0.0
    %457 = vmatpush1.msra.mxu0 0.0
    %458 = vmatprep.subr.mxu0 0.0
    %459 = vmatpush1.msra.mxu0 0.0
    %460 = vmatprep.subr.mxu0 0.0
    %461 = vmatpush1.msra.mxu0 0.0
    %462 = vmatprep.subr.mxu0 0.0
    %463 = vmatpush1.msra.mxu0 0.0
    %464 = vmatprep.subr.mxu0 0.0
    %465 = vmatpush1.msra.mxu0 0.0
    %466 = vmatprep.subr.mxu0 0.0
    %467 = vmatpush1.msra.mxu0 0.0
    %468 = vmatprep.mubr.f32.mxu0 0.0
    %469 = vmatmul.mubr.f32.gmra.mrb[0].mxu0 %v111
    %v470 = vpop.f32.mrb[0].mxu0
    %v471 = vadd.f32 %v100, %v470
    %v472 = vpop.f32.mrb[0].mxu0
    %v473 = vadd.f32 %v104, %v472
    %474 = vmatprep.mubr.f32.mxu0 0.0
    %475 = vmatmul.mubr.f32.gmra.mrb[0].mxu0 %v114
    %v476 = vpop.f32.mrb[0].mxu0
    %v477 = vadd.f32 %v100, %v476
    %v478 = vpop.f32.mrb[0].mxu0
    %v479 = vadd.f32 %v104, %v478
    %480 = vmatprep.mubr.f32.mxu0 0.0
    %481 = vmatmul.mubr.f32.gmra.mrb[0].mxu0 %v117
    %v482 = vpop.f32.mrb[0].mxu0
    %v483 = vadd.f32 %v100, %v482
    %v484 = vpop.f32.mrb[0].mxu0
    %v485 = vadd.f32 %v104, %v484
    %486 = vmatprep.mubr.f32.mxu0 0.0
    %487 = vmatmul.mubr.f32.gmra.mrb[0].mxu0 %v120
    %v488 = vpop.f32.mrb[0].mxu0
    %v489 = vadd.f32 %v100, %v488
    %v490 = vpop.f32.mrb[0].mxu0
    %v491 = vadd.f32 %v104, %v490
    %492 = vmatprep.mubr.f32.mxu0 0.0
    %493 = vmatmul.mubr.f32.gmra.mrb[0].mxu0 %v123
    %v494 = vpop.f32.mrb[0].mxu0
    %v495 = vadd.f32 %v100, %v494
    %v496 = vpop.f32.mrb[0].mxu0
    %v497 = vadd.f32 %v104, %v496
    %498 = vmatprep.mubr.f32.mxu0 0.0
    %499 = vmatmul.mubr.f32.gmra.mrb[0].mxu0 %v126
    %v500 = vpop.f32.mrb[0].mxu0
    %v501 = vadd.f32 %v100, %v500
    %v502 = vpop.f32.mrb[0].mxu0
    %v503 = vadd.f32 %v104, %v502
    %504 = vmatprep.mubr.f32.mxu0 0.0
    %505 = vmatmul.mubr.f32.gmra.mrb[0].mxu0 %v129
    %v506 = vpop.f32.mrb[0].mxu0
    %v507 = vadd.f32 %v100, %v506
    %v508 = vpop.f32.mrb[0].mxu0
    %v509 = vadd.f32 %v104, %v508
    %510 = vmatprep.mubr.f32.mxu0 0.0
    %511 = vmatmul.mubr.f32.gmra.mrb[0].mxu0 %v132
    %v512 = vpop.f32.mrb[0].mxu0
    %v513 = vadd.f32 %v100, %v512
    %v514 = vpop.f32.mrb[0].mxu0
    %v515 = vadd.f32 %v104, %v514
    %516 = vmatprep.mubr.f32.mxu0 0.0
    %517 = vmatmul.mubr.f32.gmra.mrb[0].mxu0 %v135
    %v518 = vpop.f32.mrb[0].mxu0
    %v519 = vadd.f32 %v100, %v518
    %v520 = vpop.f32.mrb[0].mxu0
    %v521 = vadd.f32 %v104, %v520
    %522 = vmatprep.mubr.f32.mxu0 0.0
    %523 = vmatmul.mubr.f32.gmra.mrb[0].mxu0 %v138
    %v524 = vpop.f32.mrb[0].mxu0
    %v525 = vadd.f32 %v100, %v524
    %v526 = vpop.f32.mrb[0].mxu0
    %v527 = vadd.f32 %v104, %v526
    %528 = vmatprep.mubr.f32.mxu0 0.0
    %529 = vmatmul.mubr.f32.gmra.mrb[0].mxu0 %v141
    %v530 = vpop.f32.mrb[0].mxu0
    %v531 = vadd.f32 %v100, %v530
    %v532 = vpop.f32.mrb[0].mxu0
    %v533 = vadd.f32 %v104, %v532
    %534 = vmatprep.mubr.f32.mxu0 0.0
    %535 = vmatmul.mubr.f32.gmra.mrb[0].mxu0 %v144
    %v536 = vpop.f32.mrb[0].mxu0
    %v537 = vadd.f32 %v100, %v536
    %v538 = vpop.f32.mrb[0].mxu0
    %v539 = vadd.f32 %v104, %v538
    %540 = vmatprep.mubr.f32.mxu0 0.0
    %541 = vmatmul.mubr.f32.gmra.mrb[0].mxu0 %v147
    %v542 = vpop.f32.mrb[0].mxu0
    %v543 = vadd.f32 %v100, %v542
    %v544 = vpop.f32.mrb[0].mxu0
    %v545 = vadd.f32 %v104, %v544
    %546 = vmatprep.mubr.f32.mxu0 0.0
    %547 = vmatmul.mubr.f32.gmra.mrb[0].mxu0 %v150
    %v548 = vpop.f32.mrb[0].mxu0
    %v549 = vadd.f32 %v100, %v548
    %v550 = vpop.f32.mrb[0].mxu0
    %v551 = vadd.f32 %v104, %v550
    %552 = vmatprep.mubr.f32.mxu0 0.0
    %553 = vmatmul.mubr.f32.gmra.mrb[0].mxu0 %v153
    %v554 = vpop.f32.mrb[0].mxu0
    %v555 = vadd.f32 %v100, %v554
    %v556 = vpop.f32.mrb[0].mxu0
    %v557 = vadd.f32 %v104, %v556
    %558 = vmatprep.mubr.f32.mxu0 0.0
    %559 = vmatmul.mubr.f32.gmra.mrb[0].mxu0 %v156
    %v560 = vpop.f32.mrb[0].mxu0
    %v561 = vadd.f32 %v100, %v560
    %v562 = vpop.f32.mrb[0].mxu0
    %v563 = vadd.f32 %v104, %v562
    %564 = vmatprep.mubr.f32.mxu0 0.0
    %565 = vmatmul.mubr.f32.gmra.mrb[0].mxu0 %v159
    %v566 = vpop.f32.mrb[0].mxu0
    %v567 = vadd.f32 %v100, %v566
    %v568 = vpop.f32.mrb[0].mxu0
    %v569 = vadd.f32 %v104, %v568
    %570 = vmatprep.mubr.f32.mxu0 0.0
    %571 = vmatmul.mubr.f32.gmra.mrb[0].mxu0 %v162
    %v572 = vpop.f32.mrb[0].mxu0
    %v573 = vadd.f32 %v100, %v572
    %v574 = vpop.f32.mrb[0].mxu0
    %v575 = vadd.f32 %v104, %v574
    %576 = vmatprep.mubr.f32.mxu0 0.0
    %577 = vmatmul.mubr.f32.gmra.mrb[0].mxu0 %v165
    %v578 = vpop.f32.mrb[0].mxu0
    %v579 = vadd.f32 %v100, %v578
    %v580 = vpop.f32.mrb[0].mxu0
    %v581 = vadd.f32 %v104, %v580
    %582 = vmatprep.mubr.f32.mxu0 0.0
    %583 = vmatmul.mubr.f32.gmra.mrb[0].mxu0 %v168
    %v584 = vpop.f32.mrb[0].mxu0
    %v585 = vadd.f32 %v100, %v584
    %v586 = vpop.f32.mrb[0].mxu0
    %v587 = vadd.f32 %v104, %v586
    %588 = vmatprep.mubr.f32.mxu0 0.0
    %589 = vmatmul.mubr.f32.gmra.mrb[0].mxu0 %v171
    %v590 = vpop.f32.mrb[0].mxu0
    %v591 = vadd.f32 %v100, %v590
    %v592 = vpop.f32.mrb[0].mxu0
    %v593 = vadd.f32 %v104, %v592
    %594 = vmatprep.mubr.f32.mxu0 0.0
    %595 = vmatmul.mubr.f32.gmra.mrb[0].mxu0 %v174
    %v596 = vpop.f32.mrb[0].mxu0
    %v597 = vadd.f32 %v100, %v596
    %v598 = vpop.f32.mrb[0].mxu0
    %v599 = vadd.f32 %v104, %v598
    %600 = vmatprep.mubr.f32.mxu0 0.0
    %601 = vmatmul.mubr.f32.gmra.mrb[0].mxu0 %v177
    %v602 = vpop.f32.mrb[0].mxu0
    %v603 = vadd.f32 %v100, %v602
    %v604 = vpop.f32.mrb[0].mxu0
    %v605 = vadd.f32 %v104, %v604
    %606 = vmatprep.mubr.f32.mxu0 0.0
    %607 = vmatmul.mubr.f32.gmra.mrb[0].mxu0 %v180
    %v608 = vpop.f32.mrb[0].mxu0
    %v609 = vadd.f32 %v100, %v608
    %v610 = vpop.f32.mrb[0].mxu0
    %v611 = vadd.f32 %v104, %v610
    %612 = vdwg.mxu0
    %613 = vst [vmem:[#allocation2] sm:$0xff] %v262
    %614 = vst [vmem:[#allocation2 + $0x8] sm:$0xff] %v264
    %615 = vst [vmem:[#allocation2 + $0x10] sm:$0xff] %v471
    %616 = vst [vmem:[#allocation2 + $0x18] sm:$0xff] %v473
    %617 = vst [vmem:[#allocation2 + $0x20] sm:$0xff] %v268
    %618 = vst [vmem:[#allocation2 + $0x28] sm:$0xff] %v270
    %619 = vst [vmem:[#allocation2 + $0x30] sm:$0xff] %v477
    %620 = vst [vmem:[#allocation2 + $0x38] sm:$0xff] %v479
    %621 = vst [vmem:[#allocation2 + $0x40] sm:$0xff] %v274
    %622 = vst [vmem:[#allocation2 + $0x48] sm:$0xff] %v276
    %623 = vst [vmem:[#allocation2 + $0x50] sm:$0xff] %v483
    %624 = vst [vmem:[#allocation2 + $0x58] sm:$0xff] %v485
    %625 = vst [vmem:[#allocation2 + $0x60] sm:$0xff] %v280
    %626 = vst [vmem:[#allocation2 + $0x68] sm:$0xff] %v282
    %627 = vst [vmem:[#allocation2 + $0x70] sm:$0xff] %v489
    %628 = vst [vmem:[#allocation2 + $0x78] sm:$0xff] %v491
    %629 = vst [vmem:[#allocation2 + $0x80] sm:$0xff] %v286
    %630 = vst [vmem:[#allocation2 + $0x88] sm:$0xff] %v288
    %631 = vst [vmem:[#allocation2 + $0x90] sm:$0xff] %v495
    %632 = vst [vmem:[#allocation2 + $0x98] sm:$0xff] %v497
    %633 = vst [vmem:[#allocation2 + $0xa0] sm:$0xff] %v292
    %634 = vst [vmem:[#allocation2 + $0xa8] sm:$0xff] %v294
    %635 = vst [vmem:[#allocation2 + $0xb0] sm:$0xff] %v501
    %636 = vst [vmem:[#allocation2 + $0xb8] sm:$0xff] %v503
    %637 = vst [vmem:[#allocation2 + $0xc0] sm:$0xff] %v298
    %638 = vst [vmem:[#allocation2 + $0xc8] sm:$0xff] %v300
    %639 = vst [vmem:[#allocation2 + $0xd0] sm:$0xff] %v507
    %640 = vst [vmem:[#allocation2 + $0xd8] sm:$0xff] %v509
    %641 = vst [vmem:[#allocation2 + $0xe0] sm:$0xff] %v304
    %642 = vst [vmem:[#allocation2 + $0xe8] sm:$0xff] %v306
    %643 = vst [vmem:[#allocation2 + $0xf0] sm:$0xff] %v513
    %644 = vst [vmem:[#allocation2 + $0xf8] sm:$0xff] %v515
    %645 = vst [vmem:[#allocation2 + $0x100] sm:$0xff] %v310
    %646 = vst [vmem:[#allocation2 + $0x108] sm:$0xff] %v312
    %647 = vst [vmem:[#allocation2 + $0x110] sm:$0xff] %v519
    %648 = vst [vmem:[#allocation2 + $0x118] sm:$0xff] %v521
    %649 = vst [vmem:[#allocation2 + $0x120] sm:$0xff] %v316
    %650 = vst [vmem:[#allocation2 + $0x128] sm:$0xff] %v318
    %651 = vst [vmem:[#allocation2 + $0x130] sm:$0xff] %v525
    %652 = vst [vmem:[#allocation2 + $0x138] sm:$0xff] %v527
    %653 = vst [vmem:[#allocation2 + $0x140] sm:$0xff] %v322
    %654 = vst [vmem:[#allocation2 + $0x148] sm:$0xff] %v324
    %655 = vst [vmem:[#allocation2 + $0x150] sm:$0xff] %v531
    %656 = vst [vmem:[#allocation2 + $0x158] sm:$0xff] %v533
    %657 = vst [vmem:[#allocation2 + $0x160] sm:$0xff] %v328
    %658 = vst [vmem:[#allocation2 + $0x168] sm:$0xff] %v330
    %659 = vst [vmem:[#allocation2 + $0x170] sm:$0xff] %v537
    %660 = vst [vmem:[#allocation2 + $0x178] sm:$0xff] %v539
    %661 = vst [vmem:[#allocation2 + $0x180] sm:$0xff] %v334
    %662 = vst [vmem:[#allocation2 + $0x188] sm:$0xff] %v336
    %663 = vst [vmem:[#allocation2 + $0x190] sm:$0xff] %v543
    %664 = vst [vmem:[#allocation2 + $0x198] sm:$0xff] %v545
    %665 = vst [vmem:[#allocation2 + $0x1a0] sm:$0xff] %v340
    %666 = vst [vmem:[#allocation2 + $0x1a8] sm:$0xff] %v342
    %667 = vst [vmem:[#allocation2 + $0x1b0] sm:$0xff] %v549
    %668 = vst [vmem:[#allocation2 + $0x1b8] sm:$0xff] %v551
    %669 = vst [vmem:[#allocation2 + $0x1c0] sm:$0xff] %v346
    %670 = vst [vmem:[#allocation2 + $0x1c8] sm:$0xff] %v348
    %671 = vst [vmem:[#allocation2 + $0x1d0] sm:$0xff] %v555
    %672 = vst [vmem:[#allocation2 + $0x1d8] sm:$0xff] %v557
    %673 = vst [vmem:[#allocation2 + $0x1e0] sm:$0xff] %v352
    %674 = vst [vmem:[#allocation2 + $0x1e8] sm:$0xff] %v354
    %675 = vst [vmem:[#allocation2 + $0x1f0] sm:$0xff] %v561
    %676 = vst [vmem:[#allocation2 + $0x1f8] sm:$0xff] %v563
    %677 = vst [vmem:[#allocation2 + $0x200] sm:$0xff] %v358
    %678 = vst [vmem:[#allocation2 + $0x208] sm:$0xff] %v360
    %679 = vst [vmem:[#allocation2 + $0x210] sm:$0xff] %v567
    %680 = vst [vmem:[#allocation2 + $0x218] sm:$0xff] %v569
    %681 = vst [vmem:[#allocation2 + $0x220] sm:$0xff] %v364
    %682 = vst [vmem:[#allocation2 + $0x228] sm:$0xff] %v366
    %683 = vst [vmem:[#allocation2 + $0x230] sm:$0xff] %v573
    %684 = vst [vmem:[#allocation2 + $0x238] sm:$0xff] %v575
    %685 = vst [vmem:[#allocation2 + $0x240] sm:$0xff] %v370
    %686 = vst [vmem:[#allocation2 + $0x248] sm:$0xff] %v372
    %687 = vst [vmem:[#allocation2 + $0x250] sm:$0xff] %v579
    %688 = vst [vmem:[#allocation2 + $0x258] sm:$0xff] %v581
    %689 = vst [vmem:[#allocation2 + $0x260] sm:$0xff] %v376
    %690 = vst [vmem:[#allocation2 + $0x268] sm:$0xff] %v378
    %691 = vst [vmem:[#allocation2 + $0x270] sm:$0xff] %v585
    %692 = vst [vmem:[#allocation2 + $0x278] sm:$0xff] %v587
    %693 = vst [vmem:[#allocation2 + $0x280] sm:$0xff] %v382
    %694 = vst [vmem:[#allocation2 + $0x288] sm:$0xff] %v384
    %695 = vst [vmem:[#allocation2 + $0x290] sm:$0xff] %v591
    %696 = vst [vmem:[#allocation2 + $0x298] sm:$0xff] %v593
    %697 = vst [vmem:[#allocation2 + $0x2a0] sm:$0xff] %v388
    %698 = vst [vmem:[#allocation2 + $0x2a8] sm:$0xff] %v390
    %699 = vst [vmem:[#allocation2 + $0x2b0] sm:$0xff] %v597
    %700 = vst [vmem:[#allocation2 + $0x2b8] sm:$0xff] %v599
    %701 = vst [vmem:[#allocation2 + $0x2c0] sm:$0xff] %v394
    %702 = vst [vmem:[#allocation2 + $0x2c8] sm:$0xff] %v396
    %703 = vst [vmem:[#allocation2 + $0x2d0] sm:$0xff] %v603
    %704 = vst [vmem:[#allocation2 + $0x2d8] sm:$0xff] %v605
    %705 = vst [vmem:[#allocation2 + $0x2e0] sm:$0xff] %v400
    %706 = vst [vmem:[#allocation2 + $0x2e8] sm:$0xff] %v402
    %707 = vst [vmem:[#allocation2 + $0x2f0] sm:$0xff] %v609
    %708 = vst [vmem:[#allocation2 + $0x2f8] sm:$0xff] %v611
    %v709 = vld [vmem:[%s3] sm:$0xff]
    %v710 = vld [vmem:[%s3 + $0x8] sm:$0xff]
    %v711 = vld [vmem:[%s3 + $0x10] sm:$0xff]
    %v712 = vld [vmem:[%s3 + $0x18] sm:$0xff]
    %v713 = vld [vmem:[%s3 + $0x20] sm:$0xff]
    %v714 = vld [vmem:[%s3 + $0x28] sm:$0xff]
    %v715 = vld [vmem:[%s3 + $0x30] sm:$0xff]
    %v716 = vld [vmem:[%s3 + $0x38] sm:$0xff]
    %v717 = vld [vmem:[%s3 + $0x40] sm:$0xff]
    %v718 = vld [vmem:[%s3 + $0x48] sm:$0xff]
    %v719 = vld [vmem:[%s3 + $0x50] sm:$0xff]
    %v720 = vld [vmem:[%s3 + $0x58] sm:$0xff]
    %v721 = vld [vmem:[%s3 + $0x60] sm:$0xff]
    %v722 = vld [vmem:[%s3 + $0x68] sm:$0xff]
    %v723 = vld [vmem:[%s3 + $0x70] sm:$0xff]
    %v724 = vld [vmem:[%s3 + $0x78] sm:$0xff]
    %v725 = vld [vmem:[%s3 + $0x80] sm:$0xff]
    %v726 = vld [vmem:[%s3 + $0x88] sm:$0xff]
    %v727 = vld [vmem:[%s3 + $0x90] sm:$0xff]
    %v728 = vld [vmem:[%s3 + $0x98] sm:$0xff]
    %v729 = vld [vmem:[%s3 + $0xa0] sm:$0xff]
    %v730 = vld [vmem:[%s3 + $0xa8] sm:$0xff]
    %v731 = vld [vmem:[%s3 + $0xb0] sm:$0xff]
    %v732 = vld [vmem:[%s3 + $0xb8] sm:$0xff]
    %v733 = vld [vmem:[%s3 + $0xc0] sm:$0xff]
    %v734 = vld [vmem:[%s3 + $0xc8] sm:$0xff]
    %v735 = vld [vmem:[%s3 + $0xd0] sm:$0xff]
    %v736 = vld [vmem:[%s3 + $0xd8] sm:$0xff]
    %v737 = vld [vmem:[%s3 + $0xe0] sm:$0xff]
    %v738 = vld [vmem:[%s3 + $0xe8] sm:$0xff]
    %v739 = vld [vmem:[%s3 + $0xf0] sm:$0xff]
    %v740 = vld [vmem:[%s3 + $0xf8] sm:$0xff]
    %v741 = vld [vmem:[%s3 + $0x100] sm:$0xff]
    %v742 = vld [vmem:[%s3 + $0x108] sm:$0xff]
    %v743 = vld [vmem:[%s3 + $0x110] sm:$0xff]
    %v744 = vld [vmem:[%s3 + $0x118] sm:$0xff]
    %v745 = vld [vmem:[%s3 + $0x120] sm:$0xff]
    %v746 = vld [vmem:[%s3 + $0x128] sm:$0xff]
    %v747 = vld [vmem:[%s3 + $0x130] sm:$0xff]
    %v748 = vld [vmem:[%s3 + $0x138] sm:$0xff]
    %v749 = vld [vmem:[%s3 + $0x140] sm:$0xff]
    %v750 = vld [vmem:[%s3 + $0x148] sm:$0xff]
    %v751 = vld [vmem:[%s3 + $0x150] sm:$0xff]
    %v752 = vld [vmem:[%s3 + $0x158] sm:$0xff]
    %v753 = vld [vmem:[%s3 + $0x160] sm:$0xff]
    %v754 = vld [vmem:[%s3 + $0x168] sm:$0xff]
    %v755 = vld [vmem:[%s3 + $0x170] sm:$0xff]
    %v756 = vld [vmem:[%s3 + $0x178] sm:$0xff]
    %v757 = vld [vmem:[%s3 + $0x180] sm:$0xff]
    %v758 = vld [vmem:[%s3 + $0x188] sm:$0xff]
    %v759 = vld [vmem:[%s3 + $0x190] sm:$0xff]
    %v760 = vld [vmem:[%s3 + $0x198] sm:$0xff]
    %v761 = vld [vmem:[%s3 + $0x1a0] sm:$0xff]
    %v762 = vld [vmem:[%s3 + $0x1a8] sm:$0xff]
    %v763 = vld [vmem:[%s3 + $0x1b0] sm:$0xff]
    %v764 = vld [vmem:[%s3 + $0x1b8] sm:$0xff]
    %v765 = vld [vmem:[%s3 + $0x1c0] sm:$0xff]
    %v766 = vld [vmem:[%s3 + $0x1c8] sm:$0xff]
    %v767 = vld [vmem:[%s3 + $0x1d0] sm:$0xff]
    %v768 = vld [vmem:[%s3 + $0x1d8] sm:$0xff]
    %v769 = vld [vmem:[%s3 + $0x1e0] sm:$0xff]
    %v770 = vld [vmem:[%s3 + $0x1e8] sm:$0xff]
    %v771 = vld [vmem:[%s3 + $0x1f0] sm:$0xff]
    %v772 = vld [vmem:[%s3 + $0x1f8] sm:$0xff]
    %s773 = smul.u32 0, 4
    %s774 = smul.addr %s773, 8
    %s775 = scalar_lea.vmem [#allocation2], %s774
    %v776 = vld [vmem:[%s775] sm:$0xff]
    %v777 = vld [vmem:[%s775 + $0x8] sm:$0xff]
    %v778 = vld [vmem:[%s775 + $0x10] sm:$0xff]
    %v779 = vld [vmem:[%s775 + $0x18] sm:$0xff]
    %v780 = vld [vmem:[%s775 + $0x20] sm:$0xff]
    %v781 = vld [vmem:[%s775 + $0x28] sm:$0xff]
    %v782 = vld [vmem:[%s775 + $0x30] sm:$0xff]
    %v783 = vld [vmem:[%s775 + $0x38] sm:$0xff]
    %v784 = vld [vmem:[%s775 + $0x40] sm:$0xff]
    %v785 = vld [vmem:[%s775 + $0x48] sm:$0xff]
    %v786 = vld [vmem:[%s775 + $0x50] sm:$0xff]
    %v787 = vld [vmem:[%s775 + $0x58] sm:$0xff]
    %788 = vmatprep.subr.mxu0 %v710
    %789 = vmatpush1.msra.mxu0 %v709
    %790 = vmatprep.subr.mxu0 %v714
    %791 = vmatpush1.msra.mxu0 %v713
    %792 = vmatprep.subr.mxu0 %v718
    %793 = vmatpush1.msra.mxu0 %v717
    %794 = vmatprep.subr.mxu0 %v722
    %795 = vmatpush1.msra.mxu0 %v721
    %796 = vmatprep.subr.mxu0 %v726
    %797 = vmatpush1.msra.mxu0 %v725
    %798 = vmatprep.subr.mxu0 %v730
    %799 = vmatpush1.msra.mxu0 %v729
    %800 = vmatprep.subr.mxu0 %v734
    %801 = vmatpush1.msra.mxu0 %v733
    %802 = vmatprep.subr.mxu0 %v738
    %803 = vmatpush1.msra.mxu0 %v737
    %804 = vmatprep.subr.mxu0 %v742
    %805 = vmatpush1.msra.mxu0 %v741
    %806 = vmatprep.subr.mxu0 %v746
    %807 = vmatpush1.msra.mxu0 %v745
    %808 = vmatprep.subr.mxu0 %v750
    %809 = vmatpush1.msra.mxu0 %v749
    %810 = vmatprep.subr.mxu0 %v754
    %811 = vmatpush1.msra.mxu0 %v753
    %812 = vmatprep.subr.mxu0 %v758
    %813 = vmatpush1.msra.mxu0 %v757
    %814 = vmatprep.subr.mxu0 %v762
    %815 = vmatpush1.msra.mxu0 %v761
    %816 = vmatprep.subr.mxu0 %v766
    %817 = vmatpush1.msra.mxu0 %v765
    %818 = vmatprep.subr.mxu0 %v770
    %819 = vmatpush1.msra.mxu0 %v769
    %820 = vmatprep.subr.mxu0 0.0
    %821 = vmatpush1.msra.mxu0 0.0
    %822 = vmatprep.subr.mxu0 0.0
    %823 = vmatpush1.msra.mxu0 0.0
    %824 = vmatprep.subr.mxu0 0.0
    %825 = vmatpush1.msra.mxu0 0.0
    %826 = vmatprep.subr.mxu0 0.0
    %827 = vmatpush1.msra.mxu0 0.0
    %828 = vmatprep.subr.mxu0 0.0
    %829 = vmatpush1.msra.mxu0 0.0
    %830 = vmatprep.subr.mxu0 0.0
    %831 = vmatpush1.msra.mxu0 0.0
    %832 = vmatprep.subr.mxu0 0.0
    %833 = vmatpush1.msra.mxu0 0.0
    %834 = vmatprep.subr.mxu0 0.0
    %835 = vmatpush1.msra.mxu0 0.0
    %836 = vmatprep.subr.mxu0 0.0
    %837 = vmatpush1.msra.mxu0 0.0
    %838 = vmatprep.subr.mxu0 0.0
    %839 = vmatpush1.msra.mxu0 0.0
    %840 = vmatprep.subr.mxu0 0.0
    %841 = vmatpush1.msra.mxu0 0.0
    %842 = vmatprep.subr.mxu0 0.0
    %843 = vmatpush1.msra.mxu0 0.0
    %844 = vmatprep.subr.mxu0 0.0
    %845 = vmatpush1.msra.mxu0 0.0
    %846 = vmatprep.subr.mxu0 0.0
    %847 = vmatpush1.msra.mxu0 0.0
    %848 = vmatprep.subr.mxu0 0.0
    %849 = vmatpush1.msra.mxu0 0.0
    %850 = vmatprep.subr.mxu0 0.0
    %851 = vmatpush1.msra.mxu0 0.0
    %852 = vmatprep.mubr.f32.mxu0 0.0
    %853 = vmatmul.mubr.f32.gmra.mrb[0].mxu0 0.0
    %v854 = vpop.f32.mrb[0].mxu0
    %v855 = vadd.f32 0.0, %v854
    %v856 = vpop.f32.mrb[0].mxu0
    %v857 = vadd.f32 0.0, %v856
    %858 = vmatprep.mubr.f32.mxu0 0.0
    %859 = vmatmul.mubr.f32.gmra.mrb[0].mxu0 0.0
    %v860 = vpop.f32.mrb[0].mxu0
    %v861 = vadd.f32 0.0, %v860
    %v862 = vpop.f32.mrb[0].mxu0
    %v863 = vadd.f32 0.0, %v862
    %864 = vmatprep.mubr.f32.mxu0 0.0
    %865 = vmatmul.mubr.f32.gmra.mrb[0].mxu0 0.0
    %v866 = vpop.f32.mrb[0].mxu0
    %v867 = vadd.f32 0.0, %v866
    %v868 = vpop.f32.mrb[0].mxu0
    %v869 = vadd.f32 0.0, %v868
    %870 = vdwg.mxu0
    %871 = vmatprep.subr.mxu0 %v712
    %872 = vmatpush1.msra.mxu0 %v711
    %873 = vmatprep.subr.mxu0 %v716
    %874 = vmatpush1.msra.mxu0 %v715
    %875 = vmatprep.subr.mxu0 %v720
    %876 = vmatpush1.msra.mxu0 %v719
    %877 = vmatprep.subr.mxu0 %v724
    %878 = vmatpush1.msra.mxu0 %v723
    %879 = vmatprep.subr.mxu0 %v728
    %880 = vmatpush1.msra.mxu0 %v727
    %881 = vmatprep.subr.mxu0 %v732
    %882 = vmatpush1.msra.mxu0 %v731
    %883 = vmatprep.subr.mxu0 %v736
    %884 = vmatpush1.msra.mxu0 %v735
    %885 = vmatprep.subr.mxu0 %v740
    %886 = vmatpush1.msra.mxu0 %v739
    %887 = vmatprep.subr.mxu0 %v744
    %888 = vmatpush1.msra.mxu0 %v743
    %889 = vmatprep.subr.mxu0 %v748
    %890 = vmatpush1.msra.mxu0 %v747
    %891 = vmatprep.subr.mxu0 %v752
    %892 = vmatpush1.msra.mxu0 %v751
    %893 = vmatprep.subr.mxu0 %v756
    %894 = vmatpush1.msra.mxu0 %v755
    %895 = vmatprep.subr.mxu0 %v760
    %896 = vmatpush1.msra.mxu0 %v759
    %897 = vmatprep.subr.mxu0 %v764
    %898 = vmatpush1.msra.mxu0 %v763
    %899 = vmatprep.subr.mxu0 %v768
    %900 = vmatpush1.msra.mxu0 %v767
    %901 = vmatprep.subr.mxu0 %v772
    %902 = vmatpush1.msra.mxu0 %v771
    %903 = vmatprep.subr.mxu0 0.0
    %904 = vmatpush1.msra.mxu0 0.0
    %905 = vmatprep.subr.mxu0 0.0
    %906 = vmatpush1.msra.mxu0 0.0
    %907 = vmatprep.subr.mxu0 0.0
    %908 = vmatpush1.msra.mxu0 0.0
    %909 = vmatprep.subr.mxu0 0.0
    %910 = vmatpush1.msra.mxu0 0.0
    %911 = vmatprep.subr.mxu0 0.0
    %912 = vmatpush1.msra.mxu0 0.0
    %913 = vmatprep.subr.mxu0 0.0
    %914 = vmatpush1.msra.mxu0 0.0
    %915 = vmatprep.subr.mxu0 0.0
    %916 = vmatpush1.msra.mxu0 0.0
    %917 = vmatprep.subr.mxu0 0.0
    %918 = vmatpush1.msra.mxu0 0.0
    %919 = vmatprep.subr.mxu0 0.0
    %920 = vmatpush1.msra.mxu0 0.0
    %921 = vmatprep.subr.mxu0 0.0
    %922 = vmatpush1.msra.mxu0 0.0
    %923 = vmatprep.subr.mxu0 0.0
    %924 = vmatpush1.msra.mxu0 0.0
    %925 = vmatprep.subr.mxu0 0.0
    %926 = vmatpush1.msra.mxu0 0.0
    %927 = vmatprep.subr.mxu0 0.0
    %928 = vmatpush1.msra.mxu0 0.0
    %929 = vmatprep.subr.mxu0 0.0
    %930 = vmatpush1.msra.mxu0 0.0
    %931 = vmatprep.subr.mxu0 0.0
    %932 = vmatpush1.msra.mxu0 0.0
    %933 = vmatprep.subr.mxu0 0.0
    %934 = vmatpush1.msra.mxu0 0.0
    %935 = vmatprep.mubr.f32.mxu0 0.0
    %936 = vmatmul.mubr.f32.gmra.mrb[0].mxu0 0.0
    %v937 = vpop.f32.mrb[0].mxu0
    %v938 = vadd.f32 0.0, %v937
    %v939 = vpop.f32.mrb[0].mxu0
    %v940 = vadd.f32 0.0, %v939
    %941 = vmatprep.mubr.f32.mxu0 0.0
    %942 = vmatmul.mubr.f32.gmra.mrb[0].mxu0 0.0
    %v943 = vpop.f32.mrb[0].mxu0
    %v944 = vadd.f32 0.0, %v943
    %v945 = vpop.f32.mrb[0].mxu0
    %v946 = vadd.f32 0.0, %v945
    %947 = vmatprep.mubr.f32.mxu0 0.0
    %948 = vmatmul.mubr.f32.gmra.mrb[0].mxu0 0.0
    %v949 = vpop.f32.mrb[0].mxu0
    %v950 = vadd.f32 0.0, %v949
    %v951 = vpop.f32.mrb[0].mxu0
    %v952 = vadd.f32 0.0, %v951
    %953 = vdwg.mxu0
    %v954 = vadd.f32 %v776, %v855
    %v955 = vadd.f32 %v777, %v857
    %v956 = vadd.f32 %v778, %v938
    %v957 = vadd.f32 %v779, %v940
    %v958 = vadd.f32 %v780, %v861
    %v959 = vadd.f32 %v781, %v863
    %v960 = vadd.f32 %v782, %v944
    %v961 = vadd.f32 %v783, %v946
    %v962 = vadd.f32 %v784, %v867
    %v963 = vadd.f32 %v785, %v869
    %v964 = vadd.f32 %v786, %v950
    %v965 = vadd.f32 %v787, %v952
    %v966 = vxor.u32 %v954, 2147483648
    %v967 = vxor.u32 %v955, 2147483648
    %v968 = vxor.u32 %v956, 2147483648
    %v969 = vxor.u32 %v958, 2147483648
    %v970 = vxor.u32 %v959, 2147483648
    %v971 = vxor.u32 %v960, 2147483648
    %v972 = vxor.u32 %v962, 2147483648
    %v973 = vxor.u32 %v963, 2147483648
    %v974 = vxor.u32 %v964, 2147483648
    %v975 = vmul.f32 %v966, 1.442695
    %v976 = vpow.pop %v975
    %v977 = vmul.f32 %v967, 1.442695
    %v978 = vpow.pop %v977
    %v979 = vmul.f32 %v968, 1.442695
    %v980 = vpow.pop %v979
    %v981 = vmul.f32 %v969, 1.442695
    %v982 = vpow.pop %v981
    %v983 = vmul.f32 %v970, 1.442695
    %v984 = vpow.pop %v983
    %v985 = vmul.f32 %v971, 1.442695
    %v986 = vpow.pop %v985
    %v987 = vmul.f32 %v972, 1.442695
    %v988 = vpow.pop %v987
    %v989 = vmul.f32 %v973, 1.442695
    %v990 = vpow.pop %v989
    %v991 = vmul.f32 %v974, 1.442695
    %v992 = vpow.pop %v991
    %v993 = vadd.f32 %v976, 1.0
    %v994 = vadd.f32 %v978, 1.0
    %v995 = vadd.f32 %v980, 1.0
    %v996 = vadd.f32 %v982, 1.0
    %v997 = vadd.f32 %v984, 1.0
    %v998 = vadd.f32 %v986, 1.0
    %v999 = vadd.f32 %v988, 1.0
    %v1000 = vadd.f32 %v990, 1.0
    %v1001 = vadd.f32 %v992, 1.0
    %v1002 = vrcp.pop %v993
    %v1003 = vmul.f32 1.0, %v1002
    %v1004 = vrcp.pop %v994
    %v1005 = vmul.f32 1.0, %v1004
    %v1006 = vrcp.pop %v995
    %v1007 = vmul.f32 1.0, %v1006
    %v1008 = vrcp.pop %v996
    %v1009 = vmul.f32 1.0, %v1008
    %v1010 = vrcp.pop %v997
    %v1011 = vmul.f32 1.0, %v1010
    %v1012 = vrcp.pop %v998
    %v1013 = vmul.f32 1.0, %v1012
    %v1014 = vrcp.pop %v999
    %v1015 = vmul.f32 1.0, %v1014
    %v1016 = vrcp.pop %v1000
    %v1017 = vmul.f32 1.0, %v1016
    %v1018 = vrcp.pop %v1001
    %v1019 = vmul.f32 1.0, %v1018
    %v1020 = vtanh.pop %v957
    %v1021 = vtanh.pop %v961
    %v1022 = vtanh.pop %v965
    %v1023 = vmul.f32 %v1005, 0.0
    %v1024 = vmul.f32 %v1011, 0.0
    %v1025 = vmul.f32 %v1017, 0.0
    %v1026 = vmul.f32 %v1003, %v1020
    %v1027 = vmul.f32 %v1009, %v1021
    %v1028 = vmul.f32 %v1015, %v1022
    %v1029 = vadd.f32 %v1023, %v1026
    %v1030 = vadd.f32 %v1024, %v1027
    %v1031 = vadd.f32 %v1025, %v1028
    %v1032 = vtanh.pop %v1029
    %v1033 = vtanh.pop %v1030
    %v1034 = vtanh.pop %v1031
    %v1035 = vmul.f32 %v1007, %v1032
    %v1036 = vmul.f32 %v1013, %v1033
    %v1037 = vmul.f32 %v1019, %v1034
    %s1038 = smul.u32 3, 4
    %s1039 = smul.addr %s1038, 8
    %s1040 = scalar_lea.vmem [#allocation2], %s1039
    %v1041 = vld [vmem:[%s1040] sm:$0xff]
    %v1042 = vld [vmem:[%s1040 + $0x8] sm:$0xff]
    %v1043 = vld [vmem:[%s1040 + $0x10] sm:$0xff]
    %v1044 = vld [vmem:[%s1040 + $0x18] sm:$0xff]
    %v1045 = vld [vmem:[%s1040 + $0x20] sm:$0xff]
    %v1046 = vld [vmem:[%s1040 + $0x28] sm:$0xff]
    %v1047 = vld [vmem:[%s1040 + $0x30] sm:$0xff]
    %v1048 = vld [vmem:[%s1040 + $0x38] sm:$0xff]
    %v1049 = vld [vmem:[%s1040 + $0x40] sm:$0xff]
    %v1050 = vld [vmem:[%s1040 + $0x48] sm:$0xff]
    %v1051 = vld [vmem:[%s1040 + $0x50] sm:$0xff]
    %v1052 = vld [vmem:[%s1040 + $0x58] sm:$0xff]
    %1053 = vmatprep.subr.mxu0 %v710
    %1054 = vmatpush1.msra.mxu0 %v709
    %1055 = vmatprep.subr.mxu0 %v714
    %1056 = vmatpush1.msra.mxu0 %v713
    %1057 = vmatprep.subr.mxu0 %v718
    %1058 = vmatpush1.msra.mxu0 %v717
    %1059 = vmatprep.subr.mxu0 %v722
    %1060 = vmatpush1.msra.mxu0 %v721
    %1061 = vmatprep.subr.mxu0 %v726
    %1062 = vmatpush1.msra.mxu0 %v725
    %1063 = vmatprep.subr.mxu0 %v730
    %1064 = vmatpush1.msra.mxu0 %v729
    %1065 = vmatprep.subr.mxu0 %v734
    %1066 = vmatpush1.msra.mxu0 %v733
    %1067 = vmatprep.subr.mxu0 %v738
    %1068 = vmatpush1.msra.mxu0 %v737
    %1069 = vmatprep.subr.mxu0 %v742
    %1070 = vmatpush1.msra.mxu0 %v741
    %1071 = vmatprep.subr.mxu0 %v746
    %1072 = vmatpush1.msra.mxu0 %v745
    %1073 = vmatprep.subr.mxu0 %v750
    %1074 = vmatpush1.msra.mxu0 %v749
    %1075 = vmatprep.subr.mxu0 %v754
    %1076 = vmatpush1.msra.mxu0 %v753
    %1077 = vmatprep.subr.mxu0 %v758
    %1078 = vmatpush1.msra.mxu0 %v757
    %1079 = vmatprep.subr.mxu0 %v762
    %1080 = vmatpush1.msra.mxu0 %v761
    %1081 = vmatprep.subr.mxu0 %v766
    %1082 = vmatpush1.msra.mxu0 %v765
    %1083 = vmatprep.subr.mxu0 %v770
    %1084 = vmatpush1.msra.mxu0 %v769
    %1085 = vmatprep.subr.mxu0 0.0
    %1086 = vmatpush1.msra.mxu0 0.0
    %1087 = vmatprep.subr.mxu0 0.0
    %1088 = vmatpush1.msra.mxu0 0.0
    %1089 = vmatprep.subr.mxu0 0.0
    %1090 = vmatpush1.msra.mxu0 0.0
    %1091 = vmatprep.subr.mxu0 0.0
    %1092 = vmatpush1.msra.mxu0 0.0
    %1093 = vmatprep.subr.mxu0 0.0
    %1094 = vmatpush1.msra.mxu0 0.0
    %1095 = vmatprep.subr.mxu0 0.0
    %1096 = vmatpush1.msra.mxu0 0.0
    %1097 = vmatprep.subr.mxu0 0.0
    %1098 = vmatpush1.msra.mxu0 0.0
    %1099 = vmatprep.subr.mxu0 0.0
    %1100 = vmatpush1.msra.mxu0 0.0
    %1101 = vmatprep.subr.mxu0 0.0
    %1102 = vmatpush1.msra.mxu0 0.0
    %1103 = vmatprep.subr.mxu0 0.0
    %1104 = vmatpush1.msra.mxu0 0.0
    %1105 = vmatprep.subr.mxu0 0.0
    %1106 = vmatpush1.msra.mxu0 0.0
    %1107 = vmatprep.subr.mxu0 0.0
    %1108 = vmatpush1.msra.mxu0 0.0
    %1109 = vmatprep.subr.mxu0 0.0
    %1110 = vmatpush1.msra.mxu0 0.0
    %1111 = vmatprep.subr.mxu0 0.0
    %1112 = vmatpush1.msra.mxu0 0.0
    %1113 = vmatprep.subr.mxu0 0.0
    %1114 = vmatpush1.msra.mxu0 0.0
    %1115 = vmatprep.subr.mxu0 0.0
    %1116 = vmatpush1.msra.mxu0 0.0
    %1117 = vmatprep.mubr.f32.mxu0 0.0
    %1118 = vmatmul.mubr.f32.gmra.mrb[0].mxu0 %v1035
    %v1119 = vpop.f32.mrb[0].mxu0
    %v1120 = vadd.f32 0.0, %v1119
    %v1121 = vpop.f32.mrb[0].mxu0
    %v1122 = vadd.f32 0.0, %v1121
    %1123 = vmatprep.mubr.f32.mxu0 0.0
    %1124 = vmatmul.mubr.f32.gmra.mrb[0].mxu0 %v1036
    %v1125 = vpop.f32.mrb[0].mxu0
    %v1126 = vadd.f32 0.0, %v1125
    %v1127 = vpop.f32.mrb[0].mxu0
    %v1128 = vadd.f32 0.0, %v1127
    %1129 = vmatprep.mubr.f32.mxu0 0.0
    %1130 = vmatmul.mubr.f32.gmra.mrb[0].mxu0 %v1037
    %v1131 = vpop.f32.mrb[0].mxu0
    %v1132 = vadd.f32 0.0, %v1131
    %v1133 = vpop.f32.mrb[0].mxu0
    %v1134 = vadd.f32 0.0, %v1133
    %1135 = vdwg.mxu0
    %1136 = vmatprep.subr.mxu0 %v712
    %1137 = vmatpush1.msra.mxu0 %v711
    %1138 = vmatprep.subr.mxu0 %v716
    %1139 = vmatpush1.msra.mxu0 %v715
    %1140 = vmatprep.subr.mxu0 %v720
    %1141 = vmatpush1.msra.mxu0 %v719
    %1142 = vmatprep.subr.mxu0 %v724
    %1143 = vmatpush1.msra.mxu0 %v723
    %1144 = vmatprep.subr.mxu0 %v728
    %1145 = vmatpush1.msra.mxu0 %v727
    %1146 = vmatprep.subr.mxu0 %v732
    %1147 = vmatpush1.msra.mxu0 %v731
    %1148 = vmatprep.subr.mxu0 %v736
    %1149 = vmatpush1.msra.mxu0 %v735
    %1150 = vmatprep.subr.mxu0 %v740
    %1151 = vmatpush1.msra.mxu0 %v739
    %1152 = vmatprep.subr.mxu0 %v744
    %1153 = vmatpush1.msra.mxu0 %v743
    %1154 = vmatprep.subr.mxu0 %v748
    %1155 = vmatpush1.msra.mxu0 %v747
    %1156 = vmatprep.subr.mxu0 %v752
    %1157 = vmatpush1.msra.mxu0 %v751
    %1158 = vmatprep.subr.mxu0 %v756
    %1159 = vmatpush1.msra.mxu0 %v755
    %1160 = vmatprep.subr.mxu0 %v760
    %1161 = vmatpush1.msra.mxu0 %v759
    %1162 = vmatprep.subr.mxu0 %v764
    %1163 = vmatpush1.msra.mxu0 %v763
    %1164 = vmatprep.subr.mxu0 %v768
    %1165 = vmatpush1.msra.mxu0 %v767
    %1166 = vmatprep.subr.mxu0 %v772
    %1167 = vmatpush1.msra.mxu0 %v771
    %1168 = vmatprep.subr.mxu0 0.0
    %1169 = vmatpush1.msra.mxu0 0.0
    %1170 = vmatprep.subr.mxu0 0.0
    %1171 = vmatpush1.msra.mxu0 0.0
    %1172 = vmatprep.subr.mxu0 0.0
    %1173 = vmatpush1.msra.mxu0 0.0
    %1174 = vmatprep.subr.mxu0 0.0
    %1175 = vmatpush1.msra.mxu0 0.0
    %1176 = vmatprep.subr.mxu0 0.0
    %1177 = vmatpush1.msra.mxu0 0.0
    %1178 = vmatprep.subr.mxu0 0.0
    %1179 = vmatpush1.msra.mxu0 0.0
    %1180 = vmatprep.subr.mxu0 0.0
    %1181 = vmatpush1.msra.mxu0 0.0
    %1182 = vmatprep.subr.mxu0 0.0
    %1183 = vmatpush1.msra.mxu0 0.0
    %1184 = vmatprep.subr.mxu0 0.0
    %1185 = vmatpush1.msra.mxu0 0.0
    %1186 = vmatprep.subr.mxu0 0.0
    %1187 = vmatpush1.msra.mxu0 0.0
    %1188 = vmatprep.subr.mxu0 0.0
    %1189 = vmatpush1.msra.mxu0 0.0
    %1190 = vmatprep.subr.mxu0 0.0
    %1191 = vmatpush1.msra.mxu0 0.0
    %1192 = vmatprep.subr.mxu0 0.0
    %1193 = vmatpush1.msra.mxu0 0.0
    %1194 = vmatprep.subr.mxu0 0.0
    %1195 = vmatpush1.msra.mxu0 0.0
    %1196 = vmatprep.subr.mxu0 0.0
    %1197 = vmatpush1.msra.mxu0 0.0
    %1198 = vmatprep.subr.mxu0 0.0
    %1199 = vmatpush1.msra.mxu0 0.0
    %1200 = vmatprep.mubr.f32.mxu0 0.0
    %1201 = vmatmul.mubr.f32.gmra.mrb[0].mxu0 %v1035
    %v1202 = vpop.f32.mrb[0].mxu0
    %v1203 = vadd.f32 0.0, %v1202
    %v1204 = vpop.f32.mrb[0].mxu0
    %v1205 = vadd.f32 0.0, %v1204
    %1206 = vmatprep.mubr.f32.mxu0 0.0
    %1207 = vmatmul.mubr.f32.gmra.mrb[0].mxu0 %v1036
    %v1208 = vpop.f32.mrb[0].mxu0
    %v1209 = vadd.f32 0.0, %v1208
    %v1210 = vpop.f32.mrb[0].mxu0
    %v1211 = vadd.f32 0.0, %v1210
    %1212 = vmatprep.mubr.f32.mxu0 0.0
    %1213 = vmatmul.mubr.f32.gmra.mrb[0].mxu0 %v1037
    %v1214 = vpop.f32.mrb[0].mxu0
    %v1215 = vadd.f32 0.0, %v1214
    %v1216 = vpop.f32.mrb[0].mxu0
    %v1217 = vadd.f32 0.0, %v1216
    %1218 = vdwg.mxu0
    %v1219 = vadd.f32 %v1041, %v1120
    %v1220 = vadd.f32 %v1042, %v1122
    %v1221 = vadd.f32 %v1043, %v1203
    %v1222 = vadd.f32 %v1044, %v1205
    %v1223 = vadd.f32 %v1045, %v1126
    %v1224 = vadd.f32 %v1046, %v1128
    %v1225 = vadd.f32 %v1047, %v1209
    %v1226 = vadd.f32 %v1048, %v1211
    %v1227 = vadd.f32 %v1049, %v1132
    %v1228 = vadd.f32 %v1050, %v1134
    %v1229 = vadd.f32 %v1051, %v1215
    %v1230 = vadd.f32 %v1052, %v1217
    %v1231 = vxor.u32 %v1219, 2147483648
    %v1232 = vxor.u32 %v1220, 2147483648
    %v1233 = vxor.u32 %v1221, 2147483648
    %v1234 = vxor.u32 %v1223, 2147483648
    %v1235 = vxor.u32 %v1224, 2147483648
    %v1236 = vxor.u32 %v1225, 2147483648
    %v1237 = vxor.u32 %v1227, 2147483648
    %v1238 = vxor.u32 %v1228, 2147483648
    %v1239 = vxor.u32 %v1229, 2147483648
    %v1240 = vmul.f32 %v1231, 1.442695
    %v1241 = vpow.pop %v1240
    %v1242 = vmul.f32 %v1232, 1.442695
    %v1243 = vpow.pop %v1242
    %v1244 = vmul.f32 %v1233, 1.442695
    %v1245 = vpow.pop %v1244
    %v1246 = vmul.f32 %v1234, 1.442695
    %v1247 = vpow.pop %v1246
    %v1248 = vmul.f32 %v1235, 1.442695
    %v1249 = vpow.pop %v1248
    %v1250 = vmul.f32 %v1236, 1.442695
    %v1251 = vpow.pop %v1250
    %v1252 = vmul.f32 %v1237, 1.442695
    %v1253 = vpow.pop %v1252
    %v1254 = vmul.f32 %v1238, 1.442695
    %v1255 = vpow.pop %v1254
    %v1256 = vmul.f32 %v1239, 1.442695
    %v1257 = vpow.pop %v1256
    %v1258 = vadd.f32 %v1241, 1.0
    %v1259 = vadd.f32 %v1243, 1.0
    %v1260 = vadd.f32 %v1245, 1.0
    %v1261 = vadd.f32 %v1247, 1.0
    %v1262 = vadd.f32 %v1249, 1.0
    %v1263 = vadd.f32 %v1251, 1.0
    %v1264 = vadd.f32 %v1253, 1.0
    %v1265 = vadd.f32 %v1255, 1.0
    %v1266 = vadd.f32 %v1257, 1.0
    %v1267 = vrcp.pop %v1258
    %v1268 = vmul.f32 1.0, %v1267
    %v1269 = vrcp.pop %v1259
    %v1270 = vmul.f32 1.0, %v1269
    %v1271 = vrcp.pop %v1260
    %v1272 = vmul.f32 1.0, %v1271
    %v1273 = vrcp.pop %v1261
    %v1274 = vmul.f32 1.0, %v1273
    %v1275 = vrcp.pop %v1262
    %v1276 = vmul.f32 1.0, %v1275
    %v1277 = vrcp.pop %v1263
    %v1278 = vmul.f32 1.0, %v1277
    %v1279 = vrcp.pop %v1264
    %v1280 = vmul.f32 1.0, %v1279
    %v1281 = vrcp.pop %v1265
    %v1282 = vmul.f32 1.0, %v1281
    %v1283 = vrcp.pop %v1266
    %v1284 = vmul.f32 1.0, %v1283
    %v1285 = vtanh.pop %v1222
    %v1286 = vtanh.pop %v1226
    %v1287 = vtanh.pop %v1230
    %v1288 = vmul.f32 %v1270, %v1029
    %v1289 = vmul.f32 %v1276, %v1030
    %v1290 = vmul.f32 %v1282, %v1031
    %v1291 = vmul.f32 %v1268, %v1285
    %v1292 = vmul.f32 %v1274, %v1286
    %v1293 = vmul.f32 %v1280, %v1287
    %v1294 = vadd.f32 %v1288, %v1291
    %v1295 = vadd.f32 %v1289, %v1292
    %v1296 = vadd.f32 %v1290, %v1293
    %v1297 = vtanh.pop %v1294
    %v1298 = vtanh.pop %v1295
    %v1299 = vtanh.pop %v1296
    %v1300 = vmul.f32 %v1272, %v1297
    %v1301 = vmul.f32 %v1278, %v1298
    %v1302 = vmul.f32 %v1284, %v1299
    %s1303 = smul.u32 6, 4
    %s1304 = smul.addr %s1303, 8
    %s1305 = scalar_lea.vmem [#allocation2], %s1304
    %v1306 = vld [vmem:[%s1305] sm:$0xff]
    %v1307 = vld [vmem:[%s1305 + $0x8] sm:$0xff]
    %v1308 = vld [vmem:[%s1305 + $0x10] sm:$0xff]
    %v1309 = vld [vmem:[%s1305 + $0x18] sm:$0xff]
    %v1310 = vld [vmem:[%s1305 + $0x20] sm:$0xff]
    %v1311 = vld [vmem:[%s1305 + $0x28] sm:$0xff]
    %v1312 = vld [vmem:[%s1305 + $0x30] sm:$0xff]
    %v1313 = vld [vmem:[%s1305 + $0x38] sm:$0xff]
    %v1314 = vld [vmem:[%s1305 + $0x40] sm:$0xff]
    %v1315 = vld [vmem:[%s1305 + $0x48] sm:$0xff]
    %v1316 = vld [vmem:[%s1305 + $0x50] sm:$0xff]
    %v1317 = vld [vmem:[%s1305 + $0x58] sm:$0xff]
    %1318 = vmatprep.subr.mxu0 %v710
    %1319 = vmatpush1.msra.mxu0 %v709
    %1320 = vmatprep.subr.mxu0 %v714
    %1321 = vmatpush1.msra.mxu0 %v713
    %1322 = vmatprep.subr.mxu0 %v718
    %1323 = vmatpush1.msra.mxu0 %v717
    %1324 = vmatprep.subr.mxu0 %v722
    %1325 = vmatpush1.msra.mxu0 %v721
    %1326 = vmatprep.subr.mxu0 %v726
    %1327 = vmatpush1.msra.mxu0 %v725
    %1328 = vmatprep.subr.mxu0 %v730
    %1329 = vmatpush1.msra.mxu0 %v729
    %1330 = vmatprep.subr.mxu0 %v734
    %1331 = vmatpush1.msra.mxu0 %v733
    %1332 = vmatprep.subr.mxu0 %v738
    %1333 = vmatpush1.msra.mxu0 %v737
    %1334 = vmatprep.subr.mxu0 %v742
    %1335 = vmatpush1.msra.mxu0 %v741
    %1336 = vmatprep.subr.mxu0 %v746
    %1337 = vmatpush1.msra.mxu0 %v745
    %1338 = vmatprep.subr.mxu0 %v750
    %1339 = vmatpush1.msra.mxu0 %v749
    %1340 = vmatprep.subr.mxu0 %v754
    %1341 = vmatpush1.msra.mxu0 %v753
    %1342 = vmatprep.subr.mxu0 %v758
    %1343 = vmatpush1.msra.mxu0 %v757
    %1344 = vmatprep.subr.mxu0 %v762
    %1345 = vmatpush1.msra.mxu0 %v761
    %1346 = vmatprep.subr.mxu0 %v766
    %1347 = vmatpush1.msra.mxu0 %v765
    %1348 = vmatprep.subr.mxu0 %v770
    %1349 = vmatpush1.msra.mxu0 %v769
    %1350 = vmatprep.subr.mxu0 0.0
    %1351 = vmatpush1.msra.mxu0 0.0
    %1352 = vmatprep.subr.mxu0 0.0
    %1353 = vmatpush1.msra.mxu0 0.0
    %1354 = vmatprep.subr.mxu0 0.0
    %1355 = vmatpush1.msra.mxu0 0.0
    %1356 = vmatprep.subr.mxu0 0.0
    %1357 = vmatpush1.msra.mxu0 0.0
    %1358 = vmatprep.subr.mxu0 0.0
    %1359 = vmatpush1.msra.mxu0 0.0
    %1360 = vmatprep.subr.mxu0 0.0
    %1361 = vmatpush1.msra.mxu0 0.0
    %1362 = vmatprep.subr.mxu0 0.0
    %1363 = vmatpush1.msra.mxu0 0.0
    %1364 = vmatprep.subr.mxu0 0.0
    %1365 = vmatpush1.msra.mxu0 0.0
    %1366 = vmatprep.subr.mxu0 0.0
    %1367 = vmatpush1.msra.mxu0 0.0
    %1368 = vmatprep.subr.mxu0 0.0
    %1369 = vmatpush1.msra.mxu0 0.0
    %1370 = vmatprep.subr.mxu0 0.0
    %1371 = vmatpush1.msra.mxu0 0.0
    %1372 = vmatprep.subr.mxu0 0.0
    %1373 = vmatpush1.msra.mxu0 0.0
    %1374 = vmatprep.subr.mxu0 0.0
    %1375 = vmatpush1.msra.mxu0 0.0
    %1376 = vmatprep.subr.mxu0 0.0
    %1377 = vmatpush1.msra.mxu0 0.0
    %1378 = vmatprep.subr.mxu0 0.0
    %1379 = vmatpush1.msra.mxu0 0.0
    %1380 = vmatprep.subr.mxu0 0.0
    %1381 = vmatpush1.msra.mxu0 0.0
    %1382 = vmatprep.mubr.f32.mxu0 0.0
    %1383 = vmatmul.mubr.f32.gmra.mrb[0].mxu0 %v1300
    %v1384 = vpop.f32.mrb[0].mxu0
    %v1385 = vadd.f32 0.0, %v1384
    %v1386 = vpop.f32.mrb[0].mxu0
    %v1387 = vadd.f32 0.0, %v1386
    %1388 = vmatprep.mubr.f32.mxu0 0.0
    %1389 = vmatmul.mubr.f32.gmra.mrb[0].mxu0 %v1301
    %v1390 = vpop.f32.mrb[0].mxu0
    %v1391 = vadd.f32 0.0, %v1390
    %v1392 = vpop.f32.mrb[0].mxu0
    %v1393 = vadd.f32 0.0, %v1392
    %1394 = vmatprep.mubr.f32.mxu0 0.0
    %1395 = vmatmul.mubr.f32.gmra.mrb[0].mxu0 %v1302
    %v1396 = vpop.f32.mrb[0].mxu0
    %v1397 = vadd.f32 0.0, %v1396
    %v1398 = vpop.f32.mrb[0].mxu0
    %v1399 = vadd.f32 0.0, %v1398
    %1400 = vdwg.mxu0
    %1401 = vmatprep.subr.mxu0 %v712
    %1402 = vmatpush1.msra.mxu0 %v711
    %1403 = vmatprep.subr.mxu0 %v716
    %1404 = vmatpush1.msra.mxu0 %v715
    %1405 = vmatprep.subr.mxu0 %v720
    %1406 = vmatpush1.msra.mxu0 %v719
    %1407 = vmatprep.subr.mxu0 %v724
    %1408 = vmatpush1.msra.mxu0 %v723
    %1409 = vmatprep.subr.mxu0 %v728
    %1410 = vmatpush1.msra.mxu0 %v727
    %1411 = vmatprep.subr.mxu0 %v732
    %1412 = vmatpush1.msra.mxu0 %v731
    %1413 = vmatprep.subr.mxu0 %v736
    %1414 = vmatpush1.msra.mxu0 %v735
    %1415 = vmatprep.subr.mxu0 %v740
    %1416 = vmatpush1.msra.mxu0 %v739
    %1417 = vmatprep.subr.mxu0 %v744
    %1418 = vmatpush1.msra.mxu0 %v743
    %1419 = vmatprep.subr.mxu0 %v748
    %1420 = vmatpush1.msra.mxu0 %v747
    %1421 = vmatprep.subr.mxu0 %v752
    %1422 = vmatpush1.msra.mxu0 %v751
    %1423 = vmatprep.subr.mxu0 %v756
    %1424 = vmatpush1.msra.mxu0 %v755
    %1425 = vmatprep.subr.mxu0 %v760
    %1426 = vmatpush1.msra.mxu0 %v759
    %1427 = vmatprep.subr.mxu0 %v764
    %1428 = vmatpush1.msra.mxu0 %v763
    %1429 = vmatprep.subr.mxu0 %v768
    %1430 = vmatpush1.msra.mxu0 %v767
    %1431 = vmatprep.subr.mxu0 %v772
    %1432 = vmatpush1.msra.mxu0 %v771
    %1433 = vmatprep.subr.mxu0 0.0
    %1434 = vmatpush1.msra.mxu0 0.0
    %1435 = vmatprep.subr.mxu0 0.0
    %1436 = vmatpush1.msra.mxu0 0.0
    %1437 = vmatprep.subr.mxu0 0.0
    %1438 = vmatpush1.msra.mxu0 0.0
    %1439 = vmatprep.subr.mxu0 0.0
    %1440 = vmatpush1.msra.mxu0 0.0
    %1441 = vmatprep.subr.mxu0 0.0
    %1442 = vmatpush1.msra.mxu0 0.0
    %1443 = vmatprep.subr.mxu0 0.0
    %1444 = vmatpush1.msra.mxu0 0.0
    %1445 = vmatprep.subr.mxu0 0.0
    %1446 = vmatpush1.msra.mxu0 0.0
    %1447 = vmatprep.subr.mxu0 0.0
    %1448 = vmatpush1.msra.mxu0 0.0
    %1449 = vmatprep.subr.mxu0 0.0
    %1450 = vmatpush1.msra.mxu0 0.0
    %1451 = vmatprep.subr.mxu0 0.0
    %1452 = vmatpush1.msra.mxu0 0.0
    %1453 = vmatprep.subr.mxu0 0.0
    %1454 = vmatpush1.msra.mxu0 0.0
    %1455 = vmatprep.subr.mxu0 0.0
    %1456 = vmatpush1.msra.mxu0 0.0
    %1457 = vmatprep.subr.mxu0 0.0
    %1458 = vmatpush1.msra.mxu0 0.0
    %1459 = vmatprep.subr.mxu0 0.0
    %1460 = vmatpush1.msra.mxu0 0.0
    %1461 = vmatprep.subr.mxu0 0.0
    %1462 = vmatpush1.msra.mxu0 0.0
    %1463 = vmatprep.subr.mxu0 0.0
    %1464 = vmatpush1.msra.mxu0 0.0
    %1465 = vmatprep.mubr.f32.mxu0 0.0
    %1466 = vmatmul.mubr.f32.gmra.mrb[0].mxu0 %v1300
    %v1467 = vpop.f32.mrb[0].mxu0
    %v1468 = vadd.f32 0.0, %v1467
    %v1469 = vpop.f32.mrb[0].mxu0
    %v1470 = vadd.f32 0.0, %v1469
    %1471 = vmatprep.mubr.f32.mxu0 0.0
    %1472 = vmatmul.mubr.f32.gmra.mrb[0].mxu0 %v1301
    %v1473 = vpop.f32.mrb[0].mxu0
    %v1474 = vadd.f32 0.0, %v1473
    %v1475 = vpop.f32.mrb[0].mxu0
    %v1476 = vadd.f32 0.0, %v1475
    %1477 = vmatprep.mubr.f32.mxu0 0.0
    %1478 = vmatmul.mubr.f32.gmra.mrb[0].mxu0 %v1302
    %v1479 = vpop.f32.mrb[0].mxu0
    %v1480 = vadd.f32 0.0, %v1479
    %v1481 = vpop.f32.mrb[0].mxu0
    %v1482 = vadd.f32 0.0, %v1481
    %1483 = vdwg.mxu0
    %v1484 = vadd.f32 %v1306, %v1385
    %v1485 = vadd.f32 %v1307, %v1387
    %v1486 = vadd.f32 %v1308, %v1468
    %v1487 = vadd.f32 %v1309, %v1470
    %v1488 = vadd.f32 %v1310, %v1391
    %v1489 = vadd.f32 %v1311, %v1393
    %v1490 = vadd.f32 %v1312, %v1474
    %v1491 = vadd.f32 %v1313, %v1476
    %v1492 = vadd.f32 %v1314, %v1397
    %v1493 = vadd.f32 %v1315, %v1399
    %v1494 = vadd.f32 %v1316, %v1480
    %v1495 = vadd.f32 %v1317, %v1482
    %v1496 = vxor.u32 %v1484, 2147483648
    %v1497 = vxor.u32 %v1485, 2147483648
    %v1498 = vxor.u32 %v1486, 2147483648
    %v1499 = vxor.u32 %v1488, 2147483648
    %v1500 = vxor.u32 %v1489, 2147483648
    %v1501 = vxor.u32 %v1490, 2147483648
    %v1502 = vxor.u32 %v1492, 2147483648
    %v1503 = vxor.u32 %v1493, 2147483648
    %v1504 = vxor.u32 %v1494, 2147483648
    %v1505 = vmul.f32 %v1496, 1.442695
    %v1506 = vpow.pop %v1505
    %v1507 = vmul.f32 %v1497, 1.442695
    %v1508 = vpow.pop %v1507
    %v1509 = vmul.f32 %v1498, 1.442695
    %v1510 = vpow.pop %v1509
    %v1511 = vmul.f32 %v1499, 1.442695
    %v1512 = vpow.pop %v1511
    %v1513 = vmul.f32 %v1500, 1.442695
    %v1514 = vpow.pop %v1513
    %v1515 = vmul.f32 %v1501, 1.442695
    %v1516 = vpow.pop %v1515
    %v1517 = vmul.f32 %v1502, 1.442695
    %v1518 = vpow.pop %v1517
    %v1519 = vmul.f32 %v1503, 1.442695
    %v1520 = vpow.pop %v1519
    %v1521 = vmul.f32 %v1504, 1.442695
    %v1522 = vpow.pop %v1521
    %v1523 = vadd.f32 %v1506, 1.0
    %v1524 = vadd.f32 %v1508, 1.0
    %v1525 = vadd.f32 %v1510, 1.0
    %v1526 = vadd.f32 %v1512, 1.0
    %v1527 = vadd.f32 %v1514, 1.0
    %v1528 = vadd.f32 %v1516, 1.0
    %v1529 = vadd.f32 %v1518, 1.0
    %v1530 = vadd.f32 %v1520, 1.0
    %v1531 = vadd.f32 %v1522, 1.0
    %v1532 = vrcp.pop %v1523
    %v1533 = vmul.f32 1.0, %v1532
    %v1534 = vrcp.pop %v1524
    %v1535 = vmul.f32 1.0, %v1534
    %v1536 = vrcp.pop %v1525
    %v1537 = vmul.f32 1.0, %v1536
    %v1538 = vrcp.pop %v1526
    %v1539 = vmul.f32 1.0, %v1538
    %v1540 = vrcp.pop %v1527
    %v1541 = vmul.f32 1.0, %v1540
    %v1542 = vrcp.pop %v1528
    %v1543 = vmul.f32 1.0, %v1542
    %v1544 = vrcp.pop %v1529
    %v1545 = vmul.f32 1.0, %v1544
    %v1546 = vrcp.pop %v1530
    %v1547 = vmul.f32 1.0, %v1546
    %v1548 = vrcp.pop %v1531
    %v1549 = vmul.f32 1.0, %v1548
    %v1550 = vtanh.pop %v1487
    %v1551 = vtanh.pop %v1491
    %v1552 = vtanh.pop %v1495
    %v1553 = vmul.f32 %v1535, %v1294
    %v1554 = vmul.f32 %v1541, %v1295
    %v1555 = vmul.f32 %v1547, %v1296
    %v1556 = vmul.f32 %v1533, %v1550
    %v1557 = vmul.f32 %v1539, %v1551
    %v1558 = vmul.f32 %v1545, %v1552
    %v1559 = vadd.f32 %v1553, %v1556
    %v1560 = vadd.f32 %v1554, %v1557
    %v1561 = vadd.f32 %v1555, %v1558
    %v1562 = vtanh.pop %v1559
    %v1563 = vtanh.pop %v1560
    %v1564 = vtanh.pop %v1561
    %v1565 = vmul.f32 %v1537, %v1562
    %v1566 = vmul.f32 %v1543, %v1563
    %v1567 = vmul.f32 %v1549, %v1564
    %s1568 = smul.u32 9, 4
    %s1569 = smul.addr %s1568, 8
    %s1570 = scalar_lea.vmem [#allocation2], %s1569
    %v1571 = vld [vmem:[%s1570] sm:$0xff]
    %v1572 = vld [vmem:[%s1570 + $0x8] sm:$0xff]
    %v1573 = vld [vmem:[%s1570 + $0x10] sm:$0xff]
    %v1574 = vld [vmem:[%s1570 + $0x18] sm:$0xff]
    %v1575 = vld [vmem:[%s1570 + $0x20] sm:$0xff]
    %v1576 = vld [vmem:[%s1570 + $0x28] sm:$0xff]
    %v1577 = vld [vmem:[%s1570 + $0x30] sm:$0xff]
    %v1578 = vld [vmem:[%s1570 + $0x38] sm:$0xff]
    %v1579 = vld [vmem:[%s1570 + $0x40] sm:$0xff]
    %v1580 = vld [vmem:[%s1570 + $0x48] sm:$0xff]
    %v1581 = vld [vmem:[%s1570 + $0x50] sm:$0xff]
    %v1582 = vld [vmem:[%s1570 + $0x58] sm:$0xff]
    %1583 = vmatprep.subr.mxu0 %v710
    %1584 = vmatpush1.msra.mxu0 %v709
    %1585 = vmatprep.subr.mxu0 %v714
    %1586 = vmatpush1.msra.mxu0 %v713
    %1587 = vmatprep.subr.mxu0 %v718
    %1588 = vmatpush1.msra.mxu0 %v717
    %1589 = vmatprep.subr.mxu0 %v722
    %1590 = vmatpush1.msra.mxu0 %v721
    %1591 = vmatprep.subr.mxu0 %v726
    %1592 = vmatpush1.msra.mxu0 %v725
    %1593 = vmatprep.subr.mxu0 %v730
    %1594 = vmatpush1.msra.mxu0 %v729
    %1595 = vmatprep.subr.mxu0 %v734
    %1596 = vmatpush1.msra.mxu0 %v733
    %1597 = vmatprep.subr.mxu0 %v738
    %1598 = vmatpush1.msra.mxu0 %v737
    %1599 = vmatprep.subr.mxu0 %v742
    %1600 = vmatpush1.msra.mxu0 %v741
    %1601 = vmatprep.subr.mxu0 %v746
    %1602 = vmatpush1.msra.mxu0 %v745
    %1603 = vmatprep.subr.mxu0 %v750
    %1604 = vmatpush1.msra.mxu0 %v749
    %1605 = vmatprep.subr.mxu0 %v754
    %1606 = vmatpush1.msra.mxu0 %v753
    %1607 = vmatprep.subr.mxu0 %v758
    %1608 = vmatpush1.msra.mxu0 %v757
    %1609 = vmatprep.subr.mxu0 %v762
    %1610 = vmatpush1.msra.mxu0 %v761
    %1611 = vmatprep.subr.mxu0 %v766
    %1612 = vmatpush1.msra.mxu0 %v765
    %1613 = vmatprep.subr.mxu0 %v770
    %1614 = vmatpush1.msra.mxu0 %v769
    %1615 = vmatprep.subr.mxu0 0.0
    %1616 = vmatpush1.msra.mxu0 0.0
    %1617 = vmatprep.subr.mxu0 0.0
    %1618 = vmatpush1.msra.mxu0 0.0
    %1619 = vmatprep.subr.mxu0 0.0
    %1620 = vmatpush1.msra.mxu0 0.0
    %1621 = vmatprep.subr.mxu0 0.0
    %1622 = vmatpush1.msra.mxu0 0.0
    %1623 = vmatprep.subr.mxu0 0.0
    %1624 = vmatpush1.msra.mxu0 0.0
    %1625 = vmatprep.subr.mxu0 0.0
    %1626 = vmatpush1.msra.mxu0 0.0
    %1627 = vmatprep.subr.mxu0 0.0
    %1628 = vmatpush1.msra.mxu0 0.0
    %1629 = vmatprep.subr.mxu0 0.0
    %1630 = vmatpush1.msra.mxu0 0.0
    %1631 = vmatprep.subr.mxu0 0.0
    %1632 = vmatpush1.msra.mxu0 0.0
    %1633 = vmatprep.subr.mxu0 0.0
    %1634 = vmatpush1.msra.mxu0 0.0
    %1635 = vmatprep.subr.mxu0 0.0
    %1636 = vmatpush1.msra.mxu0 0.0
    %1637 = vmatprep.subr.mxu0 0.0
    %1638 = vmatpush1.msra.mxu0 0.0
    %1639 = vmatprep.subr.mxu0 0.0
    %1640 = vmatpush1.msra.mxu0 0.0
    %1641 = vmatprep.subr.mxu0 0.0
    %1642 = vmatpush1.msra.mxu0 0.0
    %1643 = vmatprep.subr.mxu0 0.0
    %1644 = vmatpush1.msra.mxu0 0.0
    %1645 = vmatprep.subr.mxu0 0.0
    %1646 = vmatpush1.msra.mxu0 0.0
    %1647 = vmatprep.mubr.f32.mxu0 0.0
    %1648 = vmatmul.mubr.f32.gmra.mrb[0].mxu0 %v1565
    %v1649 = vpop.f32.mrb[0].mxu0
    %v1650 = vadd.f32 0.0, %v1649
    %v1651 = vpop.f32.mrb[0].mxu0
    %v1652 = vadd.f32 0.0, %v1651
    %1653 = vmatprep.mubr.f32.mxu0 0.0
    %1654 = vmatmul.mubr.f32.gmra.mrb[0].mxu0 %v1566
    %v1655 = vpop.f32.mrb[0].mxu0
    %v1656 = vadd.f32 0.0, %v1655
    %v1657 = vpop.f32.mrb[0].mxu0
    %v1658 = vadd.f32 0.0, %v1657
    %1659 = vmatprep.mubr.f32.mxu0 0.0
    %1660 = vmatmul.mubr.f32.gmra.mrb[0].mxu0 %v1567
    %v1661 = vpop.f32.mrb[0].mxu0
    %v1662 = vadd.f32 0.0, %v1661
    %v1663 = vpop.f32.mrb[0].mxu0
    %v1664 = vadd.f32 0.0, %v1663
    %1665 = vdwg.mxu0
    %1666 = vmatprep.subr.mxu0 %v712
    %1667 = vmatpush1.msra.mxu0 %v711
    %1668 = vmatprep.subr.mxu0 %v716
    %1669 = vmatpush1.msra.mxu0 %v715
    %1670 = vmatprep.subr.mxu0 %v720
    %1671 = vmatpush1.msra.mxu0 %v719
    %1672 = vmatprep.subr.mxu0 %v724
    %1673 = vmatpush1.msra.mxu0 %v723
    %1674 = vmatprep.subr.mxu0 %v728
    %1675 = vmatpush1.msra.mxu0 %v727
    %1676 = vmatprep.subr.mxu0 %v732
    %1677 = vmatpush1.msra.mxu0 %v731
    %1678 = vmatprep.subr.mxu0 %v736
    %1679 = vmatpush1.msra.mxu0 %v735
    %1680 = vmatprep.subr.mxu0 %v740
    %1681 = vmatpush1.msra.mxu0 %v739
    %1682 = vmatprep.subr.mxu0 %v744
    %1683 = vmatpush1.msra.mxu0 %v743
    %1684 = vmatprep.subr.mxu0 %v748
    %1685 = vmatpush1.msra.mxu0 %v747
    %1686 = vmatprep.subr.mxu0 %v752
    %1687 = vmatpush1.msra.mxu0 %v751
    %1688 = vmatprep.subr.mxu0 %v756
    %1689 = vmatpush1.msra.mxu0 %v755
    %1690 = vmatprep.subr.mxu0 %v760
    %1691 = vmatpush1.msra.mxu0 %v759
    %1692 = vmatprep.subr.mxu0 %v764
    %1693 = vmatpush1.msra.mxu0 %v763
    %1694 = vmatprep.subr.mxu0 %v768
    %1695 = vmatpush1.msra.mxu0 %v767
    %1696 = vmatprep.subr.mxu0 %v772
    %1697 = vmatpush1.msra.mxu0 %v771
    %1698 = vmatprep.subr.mxu0 0.0
    %1699 = vmatpush1.msra.mxu0 0.0
    %1700 = vmatprep.subr.mxu0 0.0
    %1701 = vmatpush1.msra.mxu0 0.0
    %1702 = vmatprep.subr.mxu0 0.0
    %1703 = vmatpush1.msra.mxu0 0.0
    %1704 = vmatprep.subr.mxu0 0.0
    %1705 = vmatpush1.msra.mxu0 0.0
    %1706 = vmatprep.subr.mxu0 0.0
    %1707 = vmatpush1.msra.mxu0 0.0
    %1708 = vmatprep.subr.mxu0 0.0
    %1709 = vmatpush1.msra.mxu0 0.0
    %1710 = vmatprep.subr.mxu0 0.0
    %1711 = vmatpush1.msra.mxu0 0.0
    %1712 = vmatprep.subr.mxu0 0.0
    %1713 = vmatpush1.msra.mxu0 0.0
    %1714 = vmatprep.subr.mxu0 0.0
    %1715 = vmatpush1.msra.mxu0 0.0
    %1716 = vmatprep.subr.mxu0 0.0
    %1717 = vmatpush1.msra.mxu0 0.0
    %1718 = vmatprep.subr.mxu0 0.0
    %1719 = vmatpush1.msra.mxu0 0.0
    %1720 = vmatprep.subr.mxu0 0.0
    %1721 = vmatpush1.msra.mxu0 0.0
    %1722 = vmatprep.subr.mxu0 0.0
    %1723 = vmatpush1.msra.mxu0 0.0
    %1724 = vmatprep.subr.mxu0 0.0
    %1725 = vmatpush1.msra.mxu0 0.0
    %1726 = vmatprep.subr.mxu0 0.0
    %1727 = vmatpush1.msra.mxu0 0.0
    %1728 = vmatprep.subr.mxu0 0.0
    %1729 = vmatpush1.msra.mxu0 0.0
    %1730 = vmatprep.mubr.f32.mxu0 0.0
    %1731 = vmatmul.mubr.f32.gmra.mrb[0].mxu0 %v1565
    %v1732 = vpop.f32.mrb[0].mxu0
    %v1733 = vadd.f32 0.0, %v1732
    %v1734 = vpop.f32.mrb[0].mxu0
    %v1735 = vadd.f32 0.0, %v1734
    %1736 = vmatprep.mubr.f32.mxu0 0.0
    %1737 = vmatmul.mubr.f32.gmra.mrb[0].mxu0 %v1566
    %v1738 = vpop.f32.mrb[0].mxu0
    %v1739 = vadd.f32 0.0, %v1738
    %v1740 = vpop.f32.mrb[0].mxu0
    %v1741 = vadd.f32 0.0, %v1740
    %1742 = vmatprep.mubr.f32.mxu0 0.0
    %1743 = vmatmul.mubr.f32.gmra.mrb[0].mxu0 %v1567
    %v1744 = vpop.f32.mrb[0].mxu0
    %v1745 = vadd.f32 0.0, %v1744
    %v1746 = vpop.f32.mrb[0].mxu0
    %v1747 = vadd.f32 0.0, %v1746
    %1748 = vdwg.mxu0
    %v1749 = vadd.f32 %v1571, %v1650
    %v1750 = vadd.f32 %v1572, %v1652
    %v1751 = vadd.f32 %v1573, %v1733
    %v1752 = vadd.f32 %v1574, %v1735
    %v1753 = vadd.f32 %v1575, %v1656
    %v1754 = vadd.f32 %v1576, %v1658
    %v1755 = vadd.f32 %v1577, %v1739
    %v1756 = vadd.f32 %v1578, %v1741
    %v1757 = vadd.f32 %v1579, %v1662
    %v1758 = vadd.f32 %v1580, %v1664
    %v1759 = vadd.f32 %v1581, %v1745
    %v1760 = vadd.f32 %v1582, %v1747
    %v1761 = vxor.u32 %v1749, 2147483648
    %v1762 = vxor.u32 %v1750, 2147483648
    %v1763 = vxor.u32 %v1751, 2147483648
    %v1764 = vxor.u32 %v1753, 2147483648
    %v1765 = vxor.u32 %v1754, 2147483648
    %v1766 = vxor.u32 %v1755, 2147483648
    %v1767 = vxor.u32 %v1757, 2147483648
    %v1768 = vxor.u32 %v1758, 2147483648
    %v1769 = vxor.u32 %v1759, 2147483648
    %v1770 = vmul.f32 %v1761, 1.442695
    %v1771 = vpow.pop %v1770
    %v1772 = vmul.f32 %v1762, 1.442695
    %v1773 = vpow.pop %v1772
    %v1774 = vmul.f32 %v1763, 1.442695
    %v1775 = vpow.pop %v1774
    %v1776 = vmul.f32 %v1764, 1.442695
    %v1777 = vpow.pop %v1776
    %v1778 = vmul.f32 %v1765, 1.442695
    %v1779 = vpow.pop %v1778
    %v1780 = vmul.f32 %v1766, 1.442695
    %v1781 = vpow.pop %v1780
    %v1782 = vmul.f32 %v1767, 1.442695
    %v1783 = vpow.pop %v1782
    %v1784 = vmul.f32 %v1768, 1.442695
    %v1785 = vpow.pop %v1784
    %v1786 = vmul.f32 %v1769, 1.442695
    %v1787 = vpow.pop %v1786
    %v1788 = vadd.f32 %v1771, 1.0
    %v1789 = vadd.f32 %v1773, 1.0
    %v1790 = vadd.f32 %v1775, 1.0
    %v1791 = vadd.f32 %v1777, 1.0
    %v1792 = vadd.f32 %v1779, 1.0
    %v1793 = vadd.f32 %v1781, 1.0
    %v1794 = vadd.f32 %v1783, 1.0
    %v1795 = vadd.f32 %v1785, 1.0
    %v1796 = vadd.f32 %v1787, 1.0
    %v1797 = vrcp.pop %v1788
    %v1798 = vmul.f32 1.0, %v1797
    %v1799 = vrcp.pop %v1789
    %v1800 = vmul.f32 1.0, %v1799
    %v1801 = vrcp.pop %v1790
    %v1802 = vmul.f32 1.0, %v1801
    %v1803 = vrcp.pop %v1791
    %v1804 = vmul.f32 1.0, %v1803
    %v1805 = vrcp.pop %v1792
    %v1806 = vmul.f32 1.0, %v1805
    %v1807 = vrcp.pop %v1793
    %v1808 = vmul.f32 1.0, %v1807
    %v1809 = vrcp.pop %v1794
    %v1810 = vmul.f32 1.0, %v1809
    %v1811 = vrcp.pop %v1795
    %v1812 = vmul.f32 1.0, %v1811
    %v1813 = vrcp.pop %v1796
    %v1814 = vmul.f32 1.0, %v1813
    %v1815 = vtanh.pop %v1752
    %v1816 = vtanh.pop %v1756
    %v1817 = vtanh.pop %v1760
    %v1818 = vmul.f32 %v1800, %v1559
    %v1819 = vmul.f32 %v1806, %v1560
    %v1820 = vmul.f32 %v1812, %v1561
    %v1821 = vmul.f32 %v1798, %v1815
    %v1822 = vmul.f32 %v1804, %v1816
    %v1823 = vmul.f32 %v1810, %v1817
    %v1824 = vadd.f32 %v1818, %v1821
    %v1825 = vadd.f32 %v1819, %v1822
    %v1826 = vadd.f32 %v1820, %v1823
    %v1827 = vtanh.pop %v1824
    %v1828 = vtanh.pop %v1825
    %v1829 = vtanh.pop %v1826
    %v1830 = vmul.f32 %v1802, %v1827
    %v1831 = vmul.f32 %v1808, %v1828
    %v1832 = vmul.f32 %v1814, %v1829
    %s1833 = smul.u32 12, 4
    %s1834 = smul.addr %s1833, 8
    %s1835 = scalar_lea.vmem [#allocation2], %s1834
    %v1836 = vld [vmem:[%s1835] sm:$0xff]
    %v1837 = vld [vmem:[%s1835 + $0x8] sm:$0xff]
    %v1838 = vld [vmem:[%s1835 + $0x10] sm:$0xff]
    %v1839 = vld [vmem:[%s1835 + $0x18] sm:$0xff]
    %v1840 = vld [vmem:[%s1835 + $0x20] sm:$0xff]
    %v1841 = vld [vmem:[%s1835 + $0x28] sm:$0xff]
    %v1842 = vld [vmem:[%s1835 + $0x30] sm:$0xff]
    %v1843 = vld [vmem:[%s1835 + $0x38] sm:$0xff]
    %v1844 = vld [vmem:[%s1835 + $0x40] sm:$0xff]
    %v1845 = vld [vmem:[%s1835 + $0x48] sm:$0xff]
    %v1846 = vld [vmem:[%s1835 + $0x50] sm:$0xff]
    %v1847 = vld [vmem:[%s1835 + $0x58] sm:$0xff]
    %1848 = vmatprep.subr.mxu0 %v710
    %1849 = vmatpush1.msra.mxu0 %v709
    %1850 = vmatprep.subr.mxu0 %v714
    %1851 = vmatpush1.msra.mxu0 %v713
    %1852 = vmatprep.subr.mxu0 %v718
    %1853 = vmatpush1.msra.mxu0 %v717
    %1854 = vmatprep.subr.mxu0 %v722
    %1855 = vmatpush1.msra.mxu0 %v721
    %1856 = vmatprep.subr.mxu0 %v726
    %1857 = vmatpush1.msra.mxu0 %v725
    %1858 = vmatprep.subr.mxu0 %v730
    %1859 = vmatpush1.msra.mxu0 %v729
    %1860 = vmatprep.subr.mxu0 %v734
    %1861 = vmatpush1.msra.mxu0 %v733
    %1862 = vmatprep.subr.mxu0 %v738
    %1863 = vmatpush1.msra.mxu0 %v737
    %1864 = vmatprep.subr.mxu0 %v742
    %1865 = vmatpush1.msra.mxu0 %v741
    %1866 = vmatprep.subr.mxu0 %v746
    %1867 = vmatpush1.msra.mxu0 %v745
    %1868 = vmatprep.subr.mxu0 %v750
    %1869 = vmatpush1.msra.mxu0 %v749
    %1870 = vmatprep.subr.mxu0 %v754
    %1871 = vmatpush1.msra.mxu0 %v753
    %1872 = vmatprep.subr.mxu0 %v758
    %1873 = vmatpush1.msra.mxu0 %v757
    %1874 = vmatprep.subr.mxu0 %v762
    %1875 = vmatpush1.msra.mxu0 %v761
    %1876 = vmatprep.subr.mxu0 %v766
    %1877 = vmatpush1.msra.mxu0 %v765
    %1878 = vmatprep.subr.mxu0 %v770
    %1879 = vmatpush1.msra.mxu0 %v769
    %1880 = vmatprep.subr.mxu0 0.0
    %1881 = vmatpush1.msra.mxu0 0.0
    %1882 = vmatprep.subr.mxu0 0.0
    %1883 = vmatpush1.msra.mxu0 0.0
    %1884 = vmatprep.subr.mxu0 0.0
    %1885 = vmatpush1.msra.mxu0 0.0
    %1886 = vmatprep.subr.mxu0 0.0
    %1887 = vmatpush1.msra.mxu0 0.0
    %1888 = vmatprep.subr.mxu0 0.0
    %1889 = vmatpush1.msra.mxu0 0.0
    %1890 = vmatprep.subr.mxu0 0.0
    %1891 = vmatpush1.msra.mxu0 0.0
    %1892 = vmatprep.subr.mxu0 0.0
    %1893 = vmatpush1.msra.mxu0 0.0
    %1894 = vmatprep.subr.mxu0 0.0
    %1895 = vmatpush1.msra.mxu0 0.0
    %1896 = vmatprep.subr.mxu0 0.0
    %1897 = vmatpush1.msra.mxu0 0.0
    %1898 = vmatprep.subr.mxu0 0.0
    %1899 = vmatpush1.msra.mxu0 0.0
    %1900 = vmatprep.subr.mxu0 0.0
    %1901 = vmatpush1.msra.mxu0 0.0
    %1902 = vmatprep.subr.mxu0 0.0
    %1903 = vmatpush1.msra.mxu0 0.0
    %1904 = vmatprep.subr.mxu0 0.0
    %1905 = vmatpush1.msra.mxu0 0.0
    %1906 = vmatprep.subr.mxu0 0.0
    %1907 = vmatpush1.msra.mxu0 0.0
    %1908 = vmatprep.subr.mxu0 0.0
    %1909 = vmatpush1.msra.mxu0 0.0
    %1910 = vmatprep.subr.mxu0 0.0
    %1911 = vmatpush1.msra.mxu0 0.0
    %1912 = vmatprep.mubr.f32.mxu0 0.0
    %1913 = vmatmul.mubr.f32.gmra.mrb[0].mxu0 %v1830
    %v1914 = vpop.f32.mrb[0].mxu0
    %v1915 = vadd.f32 0.0, %v1914
    %v1916 = vpop.f32.mrb[0].mxu0
    %v1917 = vadd.f32 0.0, %v1916
    %1918 = vmatprep.mubr.f32.mxu0 0.0
    %1919 = vmatmul.mubr.f32.gmra.mrb[0].mxu0 %v1831
    %v1920 = vpop.f32.mrb[0].mxu0
    %v1921 = vadd.f32 0.0, %v1920
    %v1922 = vpop.f32.mrb[0].mxu0
    %v1923 = vadd.f32 0.0, %v1922
    %1924 = vmatprep.mubr.f32.mxu0 0.0
    %1925 = vmatmul.mubr.f32.gmra.mrb[0].mxu0 %v1832
    %v1926 = vpop.f32.mrb[0].mxu0
    %v1927 = vadd.f32 0.0, %v1926
    %v1928 = vpop.f32.mrb[0].mxu0
    %v1929 = vadd.f32 0.0, %v1928
    %1930 = vdwg.mxu0
    %1931 = vmatprep.subr.mxu0 %v712
    %1932 = vmatpush1.msra.mxu0 %v711
    %1933 = vmatprep.subr.mxu0 %v716
    %1934 = vmatpush1.msra.mxu0 %v715
    %1935 = vmatprep.subr.mxu0 %v720
    %1936 = vmatpush1.msra.mxu0 %v719
    %1937 = vmatprep.subr.mxu0 %v724
    %1938 = vmatpush1.msra.mxu0 %v723
    %1939 = vmatprep.subr.mxu0 %v728
    %1940 = vmatpush1.msra.mxu0 %v727
    %1941 = vmatprep.subr.mxu0 %v732
    %1942 = vmatpush1.msra.mxu0 %v731
    %1943 = vmatprep.subr.mxu0 %v736
    %1944 = vmatpush1.msra.mxu0 %v735
    %1945 = vmatprep.subr.mxu0 %v740
    %1946 = vmatpush1.msra.mxu0 %v739
    %1947 = vmatprep.subr.mxu0 %v744
    %1948 = vmatpush1.msra.mxu0 %v743
    %1949 = vmatprep.subr.mxu0 %v748
    %1950 = vmatpush1.msra.mxu0 %v747
    %1951 = vmatprep.subr.mxu0 %v752
    %1952 = vmatpush1.msra.mxu0 %v751
    %1953 = vmatprep.subr.mxu0 %v756
    %1954 = vmatpush1.msra.mxu0 %v755
    %1955 = vmatprep.subr.mxu0 %v760
    %1956 = vmatpush1.msra.mxu0 %v759
    %1957 = vmatprep.subr.mxu0 %v764
    %1958 = vmatpush1.msra.mxu0 %v763
    %1959 = vmatprep.subr.mxu0 %v768
    %1960 = vmatpush1.msra.mxu0 %v767
    %1961 = vmatprep.subr.mxu0 %v772
    %1962 = vmatpush1.msra.mxu0 %v771
    %1963 = vmatprep.subr.mxu0 0.0
    %1964 = vmatpush1.msra.mxu0 0.0
    %1965 = vmatprep.subr.mxu0 0.0
    %1966 = vmatpush1.msra.mxu0 0.0
    %1967 = vmatprep.subr.mxu0 0.0
    %1968 = vmatpush1.msra.mxu0 0.0
    %1969 = vmatprep.subr.mxu0 0.0
    %1970 = vmatpush1.msra.mxu0 0.0
    %1971 = vmatprep.subr.mxu0 0.0
    %1972 = vmatpush1.msra.mxu0 0.0
    %1973 = vmatprep.subr.mxu0 0.0
    %1974 = vmatpush1.msra.mxu0 0.0
    %1975 = vmatprep.subr.mxu0 0.0
    %1976 = vmatpush1.msra.mxu0 0.0
    %1977 = vmatprep.subr.mxu0 0.0
    %1978 = vmatpush1.msra.mxu0 0.0
    %1979 = vmatprep.subr.mxu0 0.0
    %1980 = vmatpush1.msra.mxu0 0.0
    %1981 = vmatprep.subr.mxu0 0.0
    %1982 = vmatpush1.msra.mxu0 0.0
    %1983 = vmatprep.subr.mxu0 0.0
    %1984 = vmatpush1.msra.mxu0 0.0
    %1985 = vmatprep.subr.mxu0 0.0
    %1986 = vmatpush1.msra.mxu0 0.0
    %1987 = vmatprep.subr.mxu0 0.0
    %1988 = vmatpush1.msra.mxu0 0.0
    %1989 = vmatprep.subr.mxu0 0.0
    %1990 = vmatpush1.msra.mxu0 0.0
    %1991 = vmatprep.subr.mxu0 0.0
    %1992 = vmatpush1.msra.mxu0 0.0
    %1993 = vmatprep.subr.mxu0 0.0
    %1994 = vmatpush1.msra.mxu0 0.0
    %1995 = vmatprep.mubr.f32.mxu0 0.0
    %1996 = vmatmul.mubr.f32.gmra.mrb[0].mxu0 %v1830
    %v1997 = vpop.f32.mrb[0].mxu0
    %v1998 = vadd.f32 0.0, %v1997
    %v1999 = vpop.f32.mrb[0].mxu0
    %v2000 = vadd.f32 0.0, %v1999
    %2001 = vmatprep.mubr.f32.mxu0 0.0
    %2002 = vmatmul.mubr.f32.gmra.mrb[0].mxu0 %v1831
    %v2003 = vpop.f32.mrb[0].mxu0
    %v2004 = vadd.f32 0.0, %v2003
    %v2005 = vpop.f32.mrb[0].mxu0
    %v2006 = vadd.f32 0.0, %v2005
    %2007 = vmatprep.mubr.f32.mxu0 0.0
    %2008 = vmatmul.mubr.f32.gmra.mrb[0].mxu0 %v1832
    %v2009 = vpop.f32.mrb[0].mxu0
    %v2010 = vadd.f32 0.0, %v2009
    %v2011 = vpop.f32.mrb[0].mxu0
    %v2012 = vadd.f32 0.0, %v2011
    %2013 = vdwg.mxu0
    %v2014 = vadd.f32 %v1836, %v1915
    %v2015 = vadd.f32 %v1837, %v1917
    %v2016 = vadd.f32 %v1838, %v1998
    %v2017 = vadd.f32 %v1839, %v2000
    %v2018 = vadd.f32 %v1840, %v1921
    %v2019 = vadd.f32 %v1841, %v1923
    %v2020 = vadd.f32 %v1842, %v2004
    %v2021 = vadd.f32 %v1843, %v2006
    %v2022 = vadd.f32 %v1844, %v1927
    %v2023 = vadd.f32 %v1845, %v1929
    %v2024 = vadd.f32 %v1846, %v2010
    %v2025 = vadd.f32 %v1847, %v2012
    %v2026 = vxor.u32 %v2014, 2147483648
    %v2027 = vxor.u32 %v2015, 2147483648
    %v2028 = vxor.u32 %v2016, 2147483648
    %v2029 = vxor.u32 %v2018, 2147483648
    %v2030 = vxor.u32 %v2019, 2147483648
    %v2031 = vxor.u32 %v2020, 2147483648
    %v2032 = vxor.u32 %v2022, 2147483648
    %v2033 = vxor.u32 %v2023, 2147483648
    %v2034 = vxor.u32 %v2024, 2147483648
    %v2035 = vmul.f32 %v2026, 1.442695
    %v2036 = vpow.pop %v2035
    %v2037 = vmul.f32 %v2027, 1.442695
    %v2038 = vpow.pop %v2037
    %v2039 = vmul.f32 %v2028, 1.442695
    %v2040 = vpow.pop %v2039
    %v2041 = vmul.f32 %v2029, 1.442695
    %v2042 = vpow.pop %v2041
    %v2043 = vmul.f32 %v2030, 1.442695
    %v2044 = vpow.pop %v2043
    %v2045 = vmul.f32 %v2031, 1.442695
    %v2046 = vpow.pop %v2045
    %v2047 = vmul.f32 %v2032, 1.442695
    %v2048 = vpow.pop %v2047
    %v2049 = vmul.f32 %v2033, 1.442695
    %v2050 = vpow.pop %v2049
    %v2051 = vmul.f32 %v2034, 1.442695
    %v2052 = vpow.pop %v2051
    %v2053 = vadd.f32 %v2036, 1.0
    %v2054 = vadd.f32 %v2038, 1.0
    %v2055 = vadd.f32 %v2040, 1.0
    %v2056 = vadd.f32 %v2042, 1.0
    %v2057 = vadd.f32 %v2044, 1.0
    %v2058 = vadd.f32 %v2046, 1.0
    %v2059 = vadd.f32 %v2048, 1.0
    %v2060 = vadd.f32 %v2050, 1.0
    %v2061 = vadd.f32 %v2052, 1.0
    %v2062 = vrcp.pop %v2053
    %v2063 = vmul.f32 1.0, %v2062
    %v2064 = vrcp.pop %v2054
    %v2065 = vmul.f32 1.0, %v2064
    %v2066 = vrcp.pop %v2055
    %v2067 = vmul.f32 1.0, %v2066
    %v2068 = vrcp.pop %v2056
    %v2069 = vmul.f32 1.0, %v2068
    %v2070 = vrcp.pop %v2057
    %v2071 = vmul.f32 1.0, %v2070
    %v2072 = vrcp.pop %v2058
    %v2073 = vmul.f32 1.0, %v2072
    %v2074 = vrcp.pop %v2059
    %v2075 = vmul.f32 1.0, %v2074
    %v2076 = vrcp.pop %v2060
    %v2077 = vmul.f32 1.0, %v2076
    %v2078 = vrcp.pop %v2061
    %v2079 = vmul.f32 1.0, %v2078
    %v2080 = vtanh.pop %v2017
    %v2081 = vtanh.pop %v2021
    %v2082 = vtanh.pop %v2025
    %v2083 = vmul.f32 %v2065, %v1824
    %v2084 = vmul.f32 %v2071, %v1825
    %v2085 = vmul.f32 %v2077, %v1826
    %v2086 = vmul.f32 %v2063, %v2080
    %v2087 = vmul.f32 %v2069, %v2081
    %v2088 = vmul.f32 %v2075, %v2082
    %v2089 = vadd.f32 %v2083, %v2086
    %v2090 = vadd.f32 %v2084, %v2087
    %v2091 = vadd.f32 %v2085, %v2088
    %v2092 = vtanh.pop %v2089
    %v2093 = vtanh.pop %v2090
    %v2094 = vtanh.pop %v2091
    %v2095 = vmul.f32 %v2067, %v2092
    %v2096 = vmul.f32 %v2073, %v2093
    %v2097 = vmul.f32 %v2079, %v2094
    %s2098 = smul.u32 15, 4
    %s2099 = smul.addr %s2098, 8
    %s2100 = scalar_lea.vmem [#allocation2], %s2099
    %v2101 = vld [vmem:[%s2100] sm:$0xff]
    %v2102 = vld [vmem:[%s2100 + $0x8] sm:$0xff]
    %v2103 = vld [vmem:[%s2100 + $0x10] sm:$0xff]
    %v2104 = vld [vmem:[%s2100 + $0x18] sm:$0xff]
    %v2105 = vld [vmem:[%s2100 + $0x20] sm:$0xff]
    %v2106 = vld [vmem:[%s2100 + $0x28] sm:$0xff]
    %v2107 = vld [vmem:[%s2100 + $0x30] sm:$0xff]
    %v2108 = vld [vmem:[%s2100 + $0x38] sm:$0xff]
    %v2109 = vld [vmem:[%s2100 + $0x40] sm:$0xff]
    %v2110 = vld [vmem:[%s2100 + $0x48] sm:$0xff]
    %v2111 = vld [vmem:[%s2100 + $0x50] sm:$0xff]
    %v2112 = vld [vmem:[%s2100 + $0x58] sm:$0xff]
    %2113 = vmatprep.subr.mxu0 %v710
    %2114 = vmatpush1.msra.mxu0 %v709
    %2115 = vmatprep.subr.mxu0 %v714
    %2116 = vmatpush1.msra.mxu0 %v713
    %2117 = vmatprep.subr.mxu0 %v718
    %2118 = vmatpush1.msra.mxu0 %v717
    %2119 = vmatprep.subr.mxu0 %v722
    %2120 = vmatpush1.msra.mxu0 %v721
    %2121 = vmatprep.subr.mxu0 %v726
    %2122 = vmatpush1.msra.mxu0 %v725
    %2123 = vmatprep.subr.mxu0 %v730
    %2124 = vmatpush1.msra.mxu0 %v729
    %2125 = vmatprep.subr.mxu0 %v734
    %2126 = vmatpush1.msra.mxu0 %v733
    %2127 = vmatprep.subr.mxu0 %v738
    %2128 = vmatpush1.msra.mxu0 %v737
    %2129 = vmatprep.subr.mxu0 %v742
    %2130 = vmatpush1.msra.mxu0 %v741
    %2131 = vmatprep.subr.mxu0 %v746
    %2132 = vmatpush1.msra.mxu0 %v745
    %2133 = vmatprep.subr.mxu0 %v750
    %2134 = vmatpush1.msra.mxu0 %v749
    %2135 = vmatprep.subr.mxu0 %v754
    %2136 = vmatpush1.msra.mxu0 %v753
    %2137 = vmatprep.subr.mxu0 %v758
    %2138 = vmatpush1.msra.mxu0 %v757
    %2139 = vmatprep.subr.mxu0 %v762
    %2140 = vmatpush1.msra.mxu0 %v761
    %2141 = vmatprep.subr.mxu0 %v766
    %2142 = vmatpush1.msra.mxu0 %v765
    %2143 = vmatprep.subr.mxu0 %v770
    %2144 = vmatpush1.msra.mxu0 %v769
    %2145 = vmatprep.subr.mxu0 0.0
    %2146 = vmatpush1.msra.mxu0 0.0
    %2147 = vmatprep.subr.mxu0 0.0
    %2148 = vmatpush1.msra.mxu0 0.0
    %2149 = vmatprep.subr.mxu0 0.0
    %2150 = vmatpush1.msra.mxu0 0.0
    %2151 = vmatprep.subr.mxu0 0.0
    %2152 = vmatpush1.msra.mxu0 0.0
    %2153 = vmatprep.subr.mxu0 0.0
    %2154 = vmatpush1.msra.mxu0 0.0
    %2155 = vmatprep.subr.mxu0 0.0
    %2156 = vmatpush1.msra.mxu0 0.0
    %2157 = vmatprep.subr.mxu0 0.0
    %2158 = vmatpush1.msra.mxu0 0.0
    %2159 = vmatprep.subr.mxu0 0.0
    %2160 = vmatpush1.msra.mxu0 0.0
    %2161 = vmatprep.subr.mxu0 0.0
    %2162 = vmatpush1.msra.mxu0 0.0
    %2163 = vmatprep.subr.mxu0 0.0
    %2164 = vmatpush1.msra.mxu0 0.0
    %2165 = vmatprep.subr.mxu0 0.0
    %2166 = vmatpush1.msra.mxu0 0.0
    %2167 = vmatprep.subr.mxu0 0.0
    %2168 = vmatpush1.msra.mxu0 0.0
    %2169 = vmatprep.subr.mxu0 0.0
    %2170 = vmatpush1.msra.mxu0 0.0
    %2171 = vmatprep.subr.mxu0 0.0
    %2172 = vmatpush1.msra.mxu0 0.0
    %2173 = vmatprep.subr.mxu0 0.0
    %2174 = vmatpush1.msra.mxu0 0.0
    %2175 = vmatprep.subr.mxu0 0.0
    %2176 = vmatpush1.msra.mxu0 0.0
    %2177 = vmatprep.mubr.f32.mxu0 0.0
    %2178 = vmatmul.mubr.f32.gmra.mrb[0].mxu0 %v2095
    %v2179 = vpop.f32.mrb[0].mxu0
    %v2180 = vadd.f32 0.0, %v2179
    %v2181 = vpop.f32.mrb[0].mxu0
    %v2182 = vadd.f32 0.0, %v2181
    %2183 = vmatprep.mubr.f32.mxu0 0.0
    %2184 = vmatmul.mubr.f32.gmra.mrb[0].mxu0 %v2096
    %v2185 = vpop.f32.mrb[0].mxu0
    %v2186 = vadd.f32 0.0, %v2185
    %v2187 = vpop.f32.mrb[0].mxu0
    %v2188 = vadd.f32 0.0, %v2187
    %2189 = vmatprep.mubr.f32.mxu0 0.0
    %2190 = vmatmul.mubr.f32.gmra.mrb[0].mxu0 %v2097
    %v2191 = vpop.f32.mrb[0].mxu0
    %v2192 = vadd.f32 0.0, %v2191
    %v2193 = vpop.f32.mrb[0].mxu0
    %v2194 = vadd.f32 0.0, %v2193
    %2195 = vdwg.mxu0
    %2196 = vmatprep.subr.mxu0 %v712
    %2197 = vmatpush1.msra.mxu0 %v711
    %2198 = vmatprep.subr.mxu0 %v716
    %2199 = vmatpush1.msra.mxu0 %v715
    %2200 = vmatprep.subr.mxu0 %v720
    %2201 = vmatpush1.msra.mxu0 %v719
    %2202 = vmatprep.subr.mxu0 %v724
    %2203 = vmatpush1.msra.mxu0 %v723
    %2204 = vmatprep.subr.mxu0 %v728
    %2205 = vmatpush1.msra.mxu0 %v727
    %2206 = vmatprep.subr.mxu0 %v732
    %2207 = vmatpush1.msra.mxu0 %v731
    %2208 = vmatprep.subr.mxu0 %v736
    %2209 = vmatpush1.msra.mxu0 %v735
    %2210 = vmatprep.subr.mxu0 %v740
    %2211 = vmatpush1.msra.mxu0 %v739
    %2212 = vmatprep.subr.mxu0 %v744
    %2213 = vmatpush1.msra.mxu0 %v743
    %2214 = vmatprep.subr.mxu0 %v748
    %2215 = vmatpush1.msra.mxu0 %v747
    %2216 = vmatprep.subr.mxu0 %v752
    %2217 = vmatpush1.msra.mxu0 %v751
    %2218 = vmatprep.subr.mxu0 %v756
    %2219 = vmatpush1.msra.mxu0 %v755
    %2220 = vmatprep.subr.mxu0 %v760
    %2221 = vmatpush1.msra.mxu0 %v759
    %2222 = vmatprep.subr.mxu0 %v764
    %2223 = vmatpush1.msra.mxu0 %v763
    %2224 = vmatprep.subr.mxu0 %v768
    %2225 = vmatpush1.msra.mxu0 %v767
    %2226 = vmatprep.subr.mxu0 %v772
    %2227 = vmatpush1.msra.mxu0 %v771
    %2228 = vmatprep.subr.mxu0 0.0
    %2229 = vmatpush1.msra.mxu0 0.0
    %2230 = vmatprep.subr.mxu0 0.0
    %2231 = vmatpush1.msra.mxu0 0.0
    %2232 = vmatprep.subr.mxu0 0.0
    %2233 = vmatpush1.msra.mxu0 0.0
    %2234 = vmatprep.subr.mxu0 0.0
    %2235 = vmatpush1.msra.mxu0 0.0
    %2236 = vmatprep.subr.mxu0 0.0
    %2237 = vmatpush1.msra.mxu0 0.0
    %2238 = vmatprep.subr.mxu0 0.0
    %2239 = vmatpush1.msra.mxu0 0.0
    %2240 = vmatprep.subr.mxu0 0.0
    %2241 = vmatpush1.msra.mxu0 0.0
    %2242 = vmatprep.subr.mxu0 0.0
    %2243 = vmatpush1.msra.mxu0 0.0
    %2244 = vmatprep.subr.mxu0 0.0
    %2245 = vmatpush1.msra.mxu0 0.0
    %2246 = vmatprep.subr.mxu0 0.0
    %2247 = vmatpush1.msra.mxu0 0.0
    %2248 = vmatprep.subr.mxu0 0.0
    %2249 = vmatpush1.msra.mxu0 0.0
    %2250 = vmatprep.subr.mxu0 0.0
    %2251 = vmatpush1.msra.mxu0 0.0
    %2252 = vmatprep.subr.mxu0 0.0
    %2253 = vmatpush1.msra.mxu0 0.0
    %2254 = vmatprep.subr.mxu0 0.0
    %2255 = vmatpush1.msra.mxu0 0.0
    %2256 = vmatprep.subr.mxu0 0.0
    %2257 = vmatpush1.msra.mxu0 0.0
    %2258 = vmatprep.subr.mxu0 0.0
    %2259 = vmatpush1.msra.mxu0 0.0
    %2260 = vmatprep.mubr.f32.mxu0 0.0
    %2261 = vmatmul.mubr.f32.gmra.mrb[0].mxu0 %v2095
    %v2262 = vpop.f32.mrb[0].mxu0
    %v2263 = vadd.f32 0.0, %v2262
    %v2264 = vpop.f32.mrb[0].mxu0
    %v2265 = vadd.f32 0.0, %v2264
    %2266 = vmatprep.mubr.f32.mxu0 0.0
    %2267 = vmatmul.mubr.f32.gmra.mrb[0].mxu0 %v2096
    %v2268 = vpop.f32.mrb[0].mxu0
    %v2269 = vadd.f32 0.0, %v2268
    %v2270 = vpop.f32.mrb[0].mxu0
    %v2271 = vadd.f32 0.0, %v2270
    %2272 = vmatprep.mubr.f32.mxu0 0.0
    %2273 = vmatmul.mubr.f32.gmra.mrb[0].mxu0 %v2097
    %v2274 = vpop.f32.mrb[0].mxu0
    %v2275 = vadd.f32 0.0, %v2274
    %v2276 = vpop.f32.mrb[0].mxu0
    %v2277 = vadd.f32 0.0, %v2276
    %2278 = vdwg.mxu0
    %v2279 = vadd.f32 %v2101, %v2180
    %v2280 = vadd.f32 %v2102, %v2182
    %v2281 = vadd.f32 %v2103, %v2263
    %v2282 = vadd.f32 %v2104, %v2265
    %v2283 = vadd.f32 %v2105, %v2186
    %v2284 = vadd.f32 %v2106, %v2188
    %v2285 = vadd.f32 %v2107, %v2269
    %v2286 = vadd.f32 %v2108, %v2271
    %v2287 = vadd.f32 %v2109, %v2192
    %v2288 = vadd.f32 %v2110, %v2194
    %v2289 = vadd.f32 %v2111, %v2275
    %v2290 = vadd.f32 %v2112, %v2277
    %v2291 = vxor.u32 %v2279, 2147483648
    %v2292 = vxor.u32 %v2280, 2147483648
    %v2293 = vxor.u32 %v2281, 2147483648
    %v2294 = vxor.u32 %v2283, 2147483648
    %v2295 = vxor.u32 %v2284, 2147483648
    %v2296 = vxor.u32 %v2285, 2147483648
    %v2297 = vxor.u32 %v2287, 2147483648
    %v2298 = vxor.u32 %v2288, 2147483648
    %v2299 = vxor.u32 %v2289, 2147483648
    %v2300 = vmul.f32 %v2291, 1.442695
    %v2301 = vpow.pop %v2300
    %v2302 = vmul.f32 %v2292, 1.442695
    %v2303 = vpow.pop %v2302
    %v2304 = vmul.f32 %v2293, 1.442695
    %v2305 = vpow.pop %v2304
    %v2306 = vmul.f32 %v2294, 1.442695
    %v2307 = vpow.pop %v2306
    %v2308 = vmul.f32 %v2295, 1.442695
    %v2309 = vpow.pop %v2308
    %v2310 = vmul.f32 %v2296, 1.442695
    %v2311 = vpow.pop %v2310
    %v2312 = vmul.f32 %v2297, 1.442695
    %v2313 = vpow.pop %v2312
    %v2314 = vmul.f32 %v2298, 1.442695
    %v2315 = vpow.pop %v2314
    %v2316 = vmul.f32 %v2299, 1.442695
    %v2317 = vpow.pop %v2316
    %v2318 = vadd.f32 %v2301, 1.0
    %v2319 = vadd.f32 %v2303, 1.0
    %v2320 = vadd.f32 %v2305, 1.0
    %v2321 = vadd.f32 %v2307, 1.0
    %v2322 = vadd.f32 %v2309, 1.0
    %v2323 = vadd.f32 %v2311, 1.0
    %v2324 = vadd.f32 %v2313, 1.0
    %v2325 = vadd.f32 %v2315, 1.0
    %v2326 = vadd.f32 %v2317, 1.0
    %v2327 = vrcp.pop %v2318
    %v2328 = vmul.f32 1.0, %v2327
    %v2329 = vrcp.pop %v2319
    %v2330 = vmul.f32 1.0, %v2329
    %v2331 = vrcp.pop %v2320
    %v2332 = vmul.f32 1.0, %v2331
    %v2333 = vrcp.pop %v2321
    %v2334 = vmul.f32 1.0, %v2333
    %v2335 = vrcp.pop %v2322
    %v2336 = vmul.f32 1.0, %v2335
    %v2337 = vrcp.pop %v2323
    %v2338 = vmul.f32 1.0, %v2337
    %v2339 = vrcp.pop %v2324
    %v2340 = vmul.f32 1.0, %v2339
    %v2341 = vrcp.pop %v2325
    %v2342 = vmul.f32 1.0, %v2341
    %v2343 = vrcp.pop %v2326
    %v2344 = vmul.f32 1.0, %v2343
    %v2345 = vtanh.pop %v2282
    %v2346 = vtanh.pop %v2286
    %v2347 = vtanh.pop %v2290
    %v2348 = vmul.f32 %v2330, %v2089
    %v2349 = vmul.f32 %v2336, %v2090
    %v2350 = vmul.f32 %v2342, %v2091
    %v2351 = vmul.f32 %v2328, %v2345
    %v2352 = vmul.f32 %v2334, %v2346
    %v2353 = vmul.f32 %v2340, %v2347
    %v2354 = vadd.f32 %v2348, %v2351
    %v2355 = vadd.f32 %v2349, %v2352
    %v2356 = vadd.f32 %v2350, %v2353
    %v2357 = vtanh.pop %v2354
    %v2358 = vtanh.pop %v2355
    %v2359 = vtanh.pop %v2356
    %v2360 = vmul.f32 %v2332, %v2357
    %v2361 = vmul.f32 %v2338, %v2358
    %v2362 = vmul.f32 %v2344, %v2359
    %s2363 = smul.u32 18, 4
    %s2364 = smul.addr %s2363, 8
    %s2365 = scalar_lea.vmem [#allocation2], %s2364
    %v2366 = vld [vmem:[%s2365] sm:$0xff]
    %v2367 = vld [vmem:[%s2365 + $0x8] sm:$0xff]
    %v2368 = vld [vmem:[%s2365 + $0x10] sm:$0xff]
    %v2369 = vld [vmem:[%s2365 + $0x18] sm:$0xff]
    %v2370 = vld [vmem:[%s2365 + $0x20] sm:$0xff]
    %v2371 = vld [vmem:[%s2365 + $0x28] sm:$0xff]
    %v2372 = vld [vmem:[%s2365 + $0x30] sm:$0xff]
    %v2373 = vld [vmem:[%s2365 + $0x38] sm:$0xff]
    %v2374 = vld [vmem:[%s2365 + $0x40] sm:$0xff]
    %v2375 = vld [vmem:[%s2365 + $0x48] sm:$0xff]
    %v2376 = vld [vmem:[%s2365 + $0x50] sm:$0xff]
    %v2377 = vld [vmem:[%s2365 + $0x58] sm:$0xff]
    %2378 = vmatprep.subr.mxu0 %v710
    %2379 = vmatpush1.msra.mxu0 %v709
    %2380 = vmatprep.subr.mxu0 %v714
    %2381 = vmatpush1.msra.mxu0 %v713
    %2382 = vmatprep.subr.mxu0 %v718
    %2383 = vmatpush1.msra.mxu0 %v717
    %2384 = vmatprep.subr.mxu0 %v722
    %2385 = vmatpush1.msra.mxu0 %v721
    %2386 = vmatprep.subr.mxu0 %v726
    %2387 = vmatpush1.msra.mxu0 %v725
    %2388 = vmatprep.subr.mxu0 %v730
    %2389 = vmatpush1.msra.mxu0 %v729
    %2390 = vmatprep.subr.mxu0 %v734
    %2391 = vmatpush1.msra.mxu0 %v733
    %2392 = vmatprep.subr.mxu0 %v738
    %2393 = vmatpush1.msra.mxu0 %v737
    %2394 = vmatprep.subr.mxu0 %v742
    %2395 = vmatpush1.msra.mxu0 %v741
    %2396 = vmatprep.subr.mxu0 %v746
    %2397 = vmatpush1.msra.mxu0 %v745
    %2398 = vmatprep.subr.mxu0 %v750
    %2399 = vmatpush1.msra.mxu0 %v749
    %2400 = vmatprep.subr.mxu0 %v754
    %2401 = vmatpush1.msra.mxu0 %v753
    %2402 = vmatprep.subr.mxu0 %v758
    %2403 = vmatpush1.msra.mxu0 %v757
    %2404 = vmatprep.subr.mxu0 %v762
    %2405 = vmatpush1.msra.mxu0 %v761
    %2406 = vmatprep.subr.mxu0 %v766
    %2407 = vmatpush1.msra.mxu0 %v765
    %2408 = vmatprep.subr.mxu0 %v770
    %2409 = vmatpush1.msra.mxu0 %v769
    %2410 = vmatprep.subr.mxu0 0.0
    %2411 = vmatpush1.msra.mxu0 0.0
    %2412 = vmatprep.subr.mxu0 0.0
    %2413 = vmatpush1.msra.mxu0 0.0
    %2414 = vmatprep.subr.mxu0 0.0
    %2415 = vmatpush1.msra.mxu0 0.0
    %2416 = vmatprep.subr.mxu0 0.0
    %2417 = vmatpush1.msra.mxu0 0.0
    %2418 = vmatprep.subr.mxu0 0.0
    %2419 = vmatpush1.msra.mxu0 0.0
    %2420 = vmatprep.subr.mxu0 0.0
    %2421 = vmatpush1.msra.mxu0 0.0
    %2422 = vmatprep.subr.mxu0 0.0
    %2423 = vmatpush1.msra.mxu0 0.0
    %2424 = vmatprep.subr.mxu0 0.0
    %2425 = vmatpush1.msra.mxu0 0.0
    %2426 = vmatprep.subr.mxu0 0.0
    %2427 = vmatpush1.msra.mxu0 0.0
    %2428 = vmatprep.subr.mxu0 0.0
    %2429 = vmatpush1.msra.mxu0 0.0
    %2430 = vmatprep.subr.mxu0 0.0
    %2431 = vmatpush1.msra.mxu0 0.0
    %2432 = vmatprep.subr.mxu0 0.0
    %2433 = vmatpush1.msra.mxu0 0.0
    %2434 = vmatprep.subr.mxu0 0.0
    %2435 = vmatpush1.msra.mxu0 0.0
    %2436 = vmatprep.subr.mxu0 0.0
    %2437 = vmatpush1.msra.mxu0 0.0
    %2438 = vmatprep.subr.mxu0 0.0
    %2439 = vmatpush1.msra.mxu0 0.0
    %2440 = vmatprep.subr.mxu0 0.0
    %2441 = vmatpush1.msra.mxu0 0.0
    %2442 = vmatprep.mubr.f32.mxu0 0.0
    %2443 = vmatmul.mubr.f32.gmra.mrb[0].mxu0 %v2360
    %v2444 = vpop.f32.mrb[0].mxu0
    %v2445 = vadd.f32 0.0, %v2444
    %v2446 = vpop.f32.mrb[0].mxu0
    %v2447 = vadd.f32 0.0, %v2446
    %2448 = vmatprep.mubr.f32.mxu0 0.0
    %2449 = vmatmul.mubr.f32.gmra.mrb[0].mxu0 %v2361
    %v2450 = vpop.f32.mrb[0].mxu0
    %v2451 = vadd.f32 0.0, %v2450
    %v2452 = vpop.f32.mrb[0].mxu0
    %v2453 = vadd.f32 0.0, %v2452
    %2454 = vmatprep.mubr.f32.mxu0 0.0
    %2455 = vmatmul.mubr.f32.gmra.mrb[0].mxu0 %v2362
    %v2456 = vpop.f32.mrb[0].mxu0
    %v2457 = vadd.f32 0.0, %v2456
    %v2458 = vpop.f32.mrb[0].mxu0
    %v2459 = vadd.f32 0.0, %v2458
    %2460 = vdwg.mxu0
    %2461 = vmatprep.subr.mxu0 %v712
    %2462 = vmatpush1.msra.mxu0 %v711
    %2463 = vmatprep.subr.mxu0 %v716
    %2464 = vmatpush1.msra.mxu0 %v715
    %2465 = vmatprep.subr.mxu0 %v720
    %2466 = vmatpush1.msra.mxu0 %v719
    %2467 = vmatprep.subr.mxu0 %v724
    %2468 = vmatpush1.msra.mxu0 %v723
    %2469 = vmatprep.subr.mxu0 %v728
    %2470 = vmatpush1.msra.mxu0 %v727
    %2471 = vmatprep.subr.mxu0 %v732
    %2472 = vmatpush1.msra.mxu0 %v731
    %2473 = vmatprep.subr.mxu0 %v736
    %2474 = vmatpush1.msra.mxu0 %v735
    %2475 = vmatprep.subr.mxu0 %v740
    %2476 = vmatpush1.msra.mxu0 %v739
    %2477 = vmatprep.subr.mxu0 %v744
    %2478 = vmatpush1.msra.mxu0 %v743
    %2479 = vmatprep.subr.mxu0 %v748
    %2480 = vmatpush1.msra.mxu0 %v747
    %2481 = vmatprep.subr.mxu0 %v752
    %2482 = vmatpush1.msra.mxu0 %v751
    %2483 = vmatprep.subr.mxu0 %v756
    %2484 = vmatpush1.msra.mxu0 %v755
    %2485 = vmatprep.subr.mxu0 %v760
    %2486 = vmatpush1.msra.mxu0 %v759
    %2487 = vmatprep.subr.mxu0 %v764
    %2488 = vmatpush1.msra.mxu0 %v763
    %2489 = vmatprep.subr.mxu0 %v768
    %2490 = vmatpush1.msra.mxu0 %v767
    %2491 = vmatprep.subr.mxu0 %v772
    %2492 = vmatpush1.msra.mxu0 %v771
    %2493 = vmatprep.subr.mxu0 0.0
    %2494 = vmatpush1.msra.mxu0 0.0
    %2495 = vmatprep.subr.mxu0 0.0
    %2496 = vmatpush1.msra.mxu0 0.0
    %2497 = vmatprep.subr.mxu0 0.0
    %2498 = vmatpush1.msra.mxu0 0.0
    %2499 = vmatprep.subr.mxu0 0.0
    %2500 = vmatpush1.msra.mxu0 0.0
    %2501 = vmatprep.subr.mxu0 0.0
    %2502 = vmatpush1.msra.mxu0 0.0
    %2503 = vmatprep.subr.mxu0 0.0
    %2504 = vmatpush1.msra.mxu0 0.0
    %2505 = vmatprep.subr.mxu0 0.0
    %2506 = vmatpush1.msra.mxu0 0.0
    %2507 = vmatprep.subr.mxu0 0.0
    %2508 = vmatpush1.msra.mxu0 0.0
    %2509 = vmatprep.subr.mxu0 0.0
    %2510 = vmatpush1.msra.mxu0 0.0
    %2511 = vmatprep.subr.mxu0 0.0
    %2512 = vmatpush1.msra.mxu0 0.0
    %2513 = vmatprep.subr.mxu0 0.0
    %2514 = vmatpush1.msra.mxu0 0.0
    %2515 = vmatprep.subr.mxu0 0.0
    %2516 = vmatpush1.msra.mxu0 0.0
    %2517 = vmatprep.subr.mxu0 0.0
    %2518 = vmatpush1.msra.mxu0 0.0
    %2519 = vmatprep.subr.mxu0 0.0
    %2520 = vmatpush1.msra.mxu0 0.0
    %2521 = vmatprep.subr.mxu0 0.0
    %2522 = vmatpush1.msra.mxu0 0.0
    %2523 = vmatprep.subr.mxu0 0.0
    %2524 = vmatpush1.msra.mxu0 0.0
    %2525 = vmatprep.mubr.f32.mxu0 0.0
    %2526 = vmatmul.mubr.f32.gmra.mrb[0].mxu0 %v2360
    %v2527 = vpop.f32.mrb[0].mxu0
    %v2528 = vadd.f32 0.0, %v2527
    %v2529 = vpop.f32.mrb[0].mxu0
    %v2530 = vadd.f32 0.0, %v2529
    %2531 = vmatprep.mubr.f32.mxu0 0.0
    %2532 = vmatmul.mubr.f32.gmra.mrb[0].mxu0 %v2361
    %v2533 = vpop.f32.mrb[0].mxu0
    %v2534 = vadd.f32 0.0, %v2533
    %v2535 = vpop.f32.mrb[0].mxu0
    %v2536 = vadd.f32 0.0, %v2535
    %2537 = vmatprep.mubr.f32.mxu0 0.0
    %2538 = vmatmul.mubr.f32.gmra.mrb[0].mxu0 %v2362
    %v2539 = vpop.f32.mrb[0].mxu0
    %v2540 = vadd.f32 0.0, %v2539
    %v2541 = vpop.f32.mrb[0].mxu0
    %v2542 = vadd.f32 0.0, %v2541
    %2543 = vdwg.mxu0
    %v2544 = vadd.f32 %v2366, %v2445
    %v2545 = vadd.f32 %v2367, %v2447
    %v2546 = vadd.f32 %v2368, %v2528
    %v2547 = vadd.f32 %v2369, %v2530
    %v2548 = vadd.f32 %v2370, %v2451
    %v2549 = vadd.f32 %v2371, %v2453
    %v2550 = vadd.f32 %v2372, %v2534
    %v2551 = vadd.f32 %v2373, %v2536
    %v2552 = vadd.f32 %v2374, %v2457
    %v2553 = vadd.f32 %v2375, %v2459
    %v2554 = vadd.f32 %v2376, %v2540
    %v2555 = vadd.f32 %v2377, %v2542
    %v2556 = vxor.u32 %v2544, 2147483648
    %v2557 = vxor.u32 %v2545, 2147483648
    %v2558 = vxor.u32 %v2546, 2147483648
    %v2559 = vxor.u32 %v2548, 2147483648
    %v2560 = vxor.u32 %v2549, 2147483648
    %v2561 = vxor.u32 %v2550, 2147483648
    %v2562 = vxor.u32 %v2552, 2147483648
    %v2563 = vxor.u32 %v2553, 2147483648
    %v2564 = vxor.u32 %v2554, 2147483648
    %v2565 = vmul.f32 %v2556, 1.442695
    %v2566 = vpow.pop %v2565
    %v2567 = vmul.f32 %v2557, 1.442695
    %v2568 = vpow.pop %v2567
    %v2569 = vmul.f32 %v2558, 1.442695
    %v2570 = vpow.pop %v2569
    %v2571 = vmul.f32 %v2559, 1.442695
    %v2572 = vpow.pop %v2571
    %v2573 = vmul.f32 %v2560, 1.442695
    %v2574 = vpow.pop %v2573
    %v2575 = vmul.f32 %v2561, 1.442695
    %v2576 = vpow.pop %v2575
    %v2577 = vmul.f32 %v2562, 1.442695
    %v2578 = vpow.pop %v2577
    %v2579 = vmul.f32 %v2563, 1.442695
    %v2580 = vpow.pop %v2579
    %v2581 = vmul.f32 %v2564, 1.442695
    %v2582 = vpow.pop %v2581
    %v2583 = vadd.f32 %v2566, 1.0
    %v2584 = vadd.f32 %v2568, 1.0
    %v2585 = vadd.f32 %v2570, 1.0
    %v2586 = vadd.f32 %v2572, 1.0
    %v2587 = vadd.f32 %v2574, 1.0
    %v2588 = vadd.f32 %v2576, 1.0
    %v2589 = vadd.f32 %v2578, 1.0
    %v2590 = vadd.f32 %v2580, 1.0
    %v2591 = vadd.f32 %v2582, 1.0
    %v2592 = vrcp.pop %v2583
    %v2593 = vmul.f32 1.0, %v2592
    %v2594 = vrcp.pop %v2584
    %v2595 = vmul.f32 1.0, %v2594
    %v2596 = vrcp.pop %v2585
    %v2597 = vmul.f32 1.0, %v2596
    %v2598 = vrcp.pop %v2586
    %v2599 = vmul.f32 1.0, %v2598
    %v2600 = vrcp.pop %v2587
    %v2601 = vmul.f32 1.0, %v2600
    %v2602 = vrcp.pop %v2588
    %v2603 = vmul.f32 1.0, %v2602
    %v2604 = vrcp.pop %v2589
    %v2605 = vmul.f32 1.0, %v2604
    %v2606 = vrcp.pop %v2590
    %v2607 = vmul.f32 1.0, %v2606
    %v2608 = vrcp.pop %v2591
    %v2609 = vmul.f32 1.0, %v2608
    %v2610 = vtanh.pop %v2547
    %v2611 = vtanh.pop %v2551
    %v2612 = vtanh.pop %v2555
    %v2613 = vmul.f32 %v2595, %v2354
    %v2614 = vmul.f32 %v2601, %v2355
    %v2615 = vmul.f32 %v2607, %v2356
    %v2616 = vmul.f32 %v2593, %v2610
    %v2617 = vmul.f32 %v2599, %v2611
    %v2618 = vmul.f32 %v2605, %v2612
    %v2619 = vadd.f32 %v2613, %v2616
    %v2620 = vadd.f32 %v2614, %v2617
    %v2621 = vadd.f32 %v2615, %v2618
    %v2622 = vtanh.pop %v2619
    %v2623 = vtanh.pop %v2620
    %v2624 = vtanh.pop %v2621
    %v2625 = vmul.f32 %v2597, %v2622
    %v2626 = vmul.f32 %v2603, %v2623
    %v2627 = vmul.f32 %v2609, %v2624
    %s2628 = smul.u32 21, 4
    %s2629 = smul.addr %s2628, 8
    %s2630 = scalar_lea.vmem [#allocation2], %s2629
    %v2631 = vld [vmem:[%s2630] sm:$0xff]
    %v2632 = vld [vmem:[%s2630 + $0x8] sm:$0xff]
    %v2633 = vld [vmem:[%s2630 + $0x10] sm:$0xff]
    %v2634 = vld [vmem:[%s2630 + $0x18] sm:$0xff]
    %v2635 = vld [vmem:[%s2630 + $0x20] sm:$0xff]
    %v2636 = vld [vmem:[%s2630 + $0x28] sm:$0xff]
    %v2637 = vld [vmem:[%s2630 + $0x30] sm:$0xff]
    %v2638 = vld [vmem:[%s2630 + $0x38] sm:$0xff]
    %v2639 = vld [vmem:[%s2630 + $0x40] sm:$0xff]
    %v2640 = vld [vmem:[%s2630 + $0x48] sm:$0xff]
    %v2641 = vld [vmem:[%s2630 + $0x50] sm:$0xff]
    %v2642 = vld [vmem:[%s2630 + $0x58] sm:$0xff]
    %2643 = vmatprep.subr.mxu0 %v710
    %2644 = vmatpush1.msra.mxu0 %v709
    %2645 = vmatprep.subr.mxu0 %v714
    %2646 = vmatpush1.msra.mxu0 %v713
    %2647 = vmatprep.subr.mxu0 %v718
    %2648 = vmatpush1.msra.mxu0 %v717
    %2649 = vmatprep.subr.mxu0 %v722
    %2650 = vmatpush1.msra.mxu0 %v721
    %2651 = vmatprep.subr.mxu0 %v726
    %2652 = vmatpush1.msra.mxu0 %v725
    %2653 = vmatprep.subr.mxu0 %v730
    %2654 = vmatpush1.msra.mxu0 %v729
    %2655 = vmatprep.subr.mxu0 %v734
    %2656 = vmatpush1.msra.mxu0 %v733
    %2657 = vmatprep.subr.mxu0 %v738
    %2658 = vmatpush1.msra.mxu0 %v737
    %2659 = vmatprep.subr.mxu0 %v742
    %2660 = vmatpush1.msra.mxu0 %v741
    %2661 = vmatprep.subr.mxu0 %v746
    %2662 = vmatpush1.msra.mxu0 %v745
    %2663 = vmatprep.subr.mxu0 %v750
    %2664 = vmatpush1.msra.mxu0 %v749
    %2665 = vmatprep.subr.mxu0 %v754
    %2666 = vmatpush1.msra.mxu0 %v753
    %2667 = vmatprep.subr.mxu0 %v758
    %2668 = vmatpush1.msra.mxu0 %v757
    %2669 = vmatprep.subr.mxu0 %v762
    %2670 = vmatpush1.msra.mxu0 %v761
    %2671 = vmatprep.subr.mxu0 %v766
    %2672 = vmatpush1.msra.mxu0 %v765
    %2673 = vmatprep.subr.mxu0 %v770
    %2674 = vmatpush1.msra.mxu0 %v769
    %2675 = vmatprep.subr.mxu0 0.0
    %2676 = vmatpush1.msra.mxu0 0.0
    %2677 = vmatprep.subr.mxu0 0.0
    %2678 = vmatpush1.msra.mxu0 0.0
    %2679 = vmatprep.subr.mxu0 0.0
    %2680 = vmatpush1.msra.mxu0 0.0
    %2681 = vmatprep.subr.mxu0 0.0
    %2682 = vmatpush1.msra.mxu0 0.0
    %2683 = vmatprep.subr.mxu0 0.0
    %2684 = vmatpush1.msra.mxu0 0.0
    %2685 = vmatprep.subr.mxu0 0.0
    %2686 = vmatpush1.msra.mxu0 0.0
    %2687 = vmatprep.subr.mxu0 0.0
    %2688 = vmatpush1.msra.mxu0 0.0
    %2689 = vmatprep.subr.mxu0 0.0
    %2690 = vmatpush1.msra.mxu0 0.0
    %2691 = vmatprep.subr.mxu0 0.0
    %2692 = vmatpush1.msra.mxu0 0.0
    %2693 = vmatprep.subr.mxu0 0.0
    %2694 = vmatpush1.msra.mxu0 0.0
    %2695 = vmatprep.subr.mxu0 0.0
    %2696 = vmatpush1.msra.mxu0 0.0
    %2697 = vmatprep.subr.mxu0 0.0
    %2698 = vmatpush1.msra.mxu0 0.0
    %2699 = vmatprep.subr.mxu0 0.0
    %2700 = vmatpush1.msra.mxu0 0.0
    %2701 = vmatprep.subr.mxu0 0.0
    %2702 = vmatpush1.msra.mxu0 0.0
    %2703 = vmatprep.subr.mxu0 0.0
    %2704 = vmatpush1.msra.mxu0 0.0
    %2705 = vmatprep.subr.mxu0 0.0
    %2706 = vmatpush1.msra.mxu0 0.0
    %2707 = vmatprep.mubr.f32.mxu0 0.0
    %2708 = vmatmul.mubr.f32.gmra.mrb[0].mxu0 %v2625
    %v2709 = vpop.f32.mrb[0].mxu0
    %v2710 = vadd.f32 0.0, %v2709
    %v2711 = vpop.f32.mrb[0].mxu0
    %v2712 = vadd.f32 0.0, %v2711
    %2713 = vmatprep.mubr.f32.mxu0 0.0
    %2714 = vmatmul.mubr.f32.gmra.mrb[0].mxu0 %v2626
    %v2715 = vpop.f32.mrb[0].mxu0
    %v2716 = vadd.f32 0.0, %v2715
    %v2717 = vpop.f32.mrb[0].mxu0
    %v2718 = vadd.f32 0.0, %v2717
    %2719 = vmatprep.mubr.f32.mxu0 0.0
    %2720 = vmatmul.mubr.f32.gmra.mrb[0].mxu0 %v2627
    %v2721 = vpop.f32.mrb[0].mxu0
    %v2722 = vadd.f32 0.0, %v2721
    %v2723 = vpop.f32.mrb[0].mxu0
    %v2724 = vadd.f32 0.0, %v2723
    %2725 = vdwg.mxu0
    %2726 = vmatprep.subr.mxu0 %v712
    %2727 = vmatpush1.msra.mxu0 %v711
    %2728 = vmatprep.subr.mxu0 %v716
    %2729 = vmatpush1.msra.mxu0 %v715
    %2730 = vmatprep.subr.mxu0 %v720
    %2731 = vmatpush1.msra.mxu0 %v719
    %2732 = vmatprep.subr.mxu0 %v724
    %2733 = vmatpush1.msra.mxu0 %v723
    %2734 = vmatprep.subr.mxu0 %v728
    %2735 = vmatpush1.msra.mxu0 %v727
    %2736 = vmatprep.subr.mxu0 %v732
    %2737 = vmatpush1.msra.mxu0 %v731
    %2738 = vmatprep.subr.mxu0 %v736
    %2739 = vmatpush1.msra.mxu0 %v735
    %2740 = vmatprep.subr.mxu0 %v740
    %2741 = vmatpush1.msra.mxu0 %v739
    %2742 = vmatprep.subr.mxu0 %v744
    %2743 = vmatpush1.msra.mxu0 %v743
    %2744 = vmatprep.subr.mxu0 %v748
    %2745 = vmatpush1.msra.mxu0 %v747
    %2746 = vmatprep.subr.mxu0 %v752
    %2747 = vmatpush1.msra.mxu0 %v751
    %2748 = vmatprep.subr.mxu0 %v756
    %2749 = vmatpush1.msra.mxu0 %v755
    %2750 = vmatprep.subr.mxu0 %v760
    %2751 = vmatpush1.msra.mxu0 %v759
    %2752 = vmatprep.subr.mxu0 %v764
    %2753 = vmatpush1.msra.mxu0 %v763
    %2754 = vmatprep.subr.mxu0 %v768
    %2755 = vmatpush1.msra.mxu0 %v767
    %2756 = vmatprep.subr.mxu0 %v772
    %2757 = vmatpush1.msra.mxu0 %v771
    %2758 = vmatprep.subr.mxu0 0.0
    %2759 = vmatpush1.msra.mxu0 0.0
    %2760 = vmatprep.subr.mxu0 0.0
    %2761 = vmatpush1.msra.mxu0 0.0
    %2762 = vmatprep.subr.mxu0 0.0
    %2763 = vmatpush1.msra.mxu0 0.0
    %2764 = vmatprep.subr.mxu0 0.0
    %2765 = vmatpush1.msra.mxu0 0.0
    %2766 = vmatprep.subr.mxu0 0.0
    %2767 = vmatpush1.msra.mxu0 0.0
    %2768 = vmatprep.subr.mxu0 0.0
    %2769 = vmatpush1.msra.mxu0 0.0
    %2770 = vmatprep.subr.mxu0 0.0
    %2771 = vmatpush1.msra.mxu0 0.0
    %2772 = vmatprep.subr.mxu0 0.0
    %2773 = vmatpush1.msra.mxu0 0.0
    %2774 = vmatprep.subr.mxu0 0.0
    %2775 = vmatpush1.msra.mxu0 0.0
    %2776 = vmatprep.subr.mxu0 0.0
    %2777 = vmatpush1.msra.mxu0 0.0
    %2778 = vmatprep.subr.mxu0 0.0
    %2779 = vmatpush1.msra.mxu0 0.0
    %2780 = vmatprep.subr.mxu0 0.0
    %2781 = vmatpush1.msra.mxu0 0.0
    %2782 = vmatprep.subr.mxu0 0.0
    %2783 = vmatpush1.msra.mxu0 0.0
    %2784 = vmatprep.subr.mxu0 0.0
    %2785 = vmatpush1.msra.mxu0 0.0
    %2786 = vmatprep.subr.mxu0 0.0
    %2787 = vmatpush1.msra.mxu0 0.0
    %2788 = vmatprep.subr.mxu0 0.0
    %2789 = vmatpush1.msra.mxu0 0.0
    %2790 = vmatprep.mubr.f32.mxu0 0.0
    %2791 = vmatmul.mubr.f32.gmra.mrb[0].mxu0 %v2625
    %v2792 = vpop.f32.mrb[0].mxu0
    %v2793 = vadd.f32 0.0, %v2792
    %v2794 = vpop.f32.mrb[0].mxu0
    %v2795 = vadd.f32 0.0, %v2794
    %2796 = vmatprep.mubr.f32.mxu0 0.0
    %2797 = vmatmul.mubr.f32.gmra.mrb[0].mxu0 %v2626
    %v2798 = vpop.f32.mrb[0].mxu0
    %v2799 = vadd.f32 0.0, %v2798
    %v2800 = vpop.f32.mrb[0].mxu0
    %v2801 = vadd.f32 0.0, %v2800
    %2802 = vmatprep.mubr.f32.mxu0 0.0
    %2803 = vmatmul.mubr.f32.gmra.mrb[0].mxu0 %v2627
    %v2804 = vpop.f32.mrb[0].mxu0
    %v2805 = vadd.f32 0.0, %v2804
    %v2806 = vpop.f32.mrb[0].mxu0
    %v2807 = vadd.f32 0.0, %v2806
    %2808 = vdwg.mxu0
    %v2809 = vadd.f32 %v2631, %v2710
    %v2810 = vadd.f32 %v2632, %v2712
    %v2811 = vadd.f32 %v2633, %v2793
    %v2812 = vadd.f32 %v2634, %v2795
    %v2813 = vadd.f32 %v2635, %v2716
    %v2814 = vadd.f32 %v2636, %v2718
    %v2815 = vadd.f32 %v2637, %v2799
    %v2816 = vadd.f32 %v2638, %v2801
    %v2817 = vadd.f32 %v2639, %v2722
    %v2818 = vadd.f32 %v2640, %v2724
    %v2819 = vadd.f32 %v2641, %v2805
    %v2820 = vadd.f32 %v2642, %v2807
    %v2821 = vxor.u32 %v2809, 2147483648
    %v2822 = vxor.u32 %v2810, 2147483648
    %v2823 = vxor.u32 %v2811, 2147483648
    %v2824 = vxor.u32 %v2813, 2147483648
    %v2825 = vxor.u32 %v2814, 2147483648
    %v2826 = vxor.u32 %v2815, 2147483648
    %v2827 = vxor.u32 %v2817, 2147483648
    %v2828 = vxor.u32 %v2818, 2147483648
    %v2829 = vxor.u32 %v2819, 2147483648
    %v2830 = vmul.f32 %v2821, 1.442695
    %v2831 = vpow.pop %v2830
    %v2832 = vmul.f32 %v2822, 1.442695
    %v2833 = vpow.pop %v2832
    %v2834 = vmul.f32 %v2823, 1.442695
    %v2835 = vpow.pop %v2834
    %v2836 = vmul.f32 %v2824, 1.442695
    %v2837 = vpow.pop %v2836
    %v2838 = vmul.f32 %v2825, 1.442695
    %v2839 = vpow.pop %v2838
    %v2840 = vmul.f32 %v2826, 1.442695
    %v2841 = vpow.pop %v2840
    %v2842 = vmul.f32 %v2827, 1.442695
    %v2843 = vpow.pop %v2842
    %v2844 = vmul.f32 %v2828, 1.442695
    %v2845 = vpow.pop %v2844
    %v2846 = vmul.f32 %v2829, 1.442695
    %v2847 = vpow.pop %v2846
    %v2848 = vadd.f32 %v2831, 1.0
    %v2849 = vadd.f32 %v2833, 1.0
    %v2850 = vadd.f32 %v2835, 1.0
    %v2851 = vadd.f32 %v2837, 1.0
    %v2852 = vadd.f32 %v2839, 1.0
    %v2853 = vadd.f32 %v2841, 1.0
    %v2854 = vadd.f32 %v2843, 1.0
    %v2855 = vadd.f32 %v2845, 1.0
    %v2856 = vadd.f32 %v2847, 1.0
    %v2857 = vrcp.pop %v2848
    %v2858 = vmul.f32 1.0, %v2857
    %v2859 = vrcp.pop %v2849
    %v2860 = vmul.f32 1.0, %v2859
    %v2861 = vrcp.pop %v2850
    %v2862 = vmul.f32 1.0, %v2861
    %v2863 = vrcp.pop %v2851
    %v2864 = vmul.f32 1.0, %v2863
    %v2865 = vrcp.pop %v2852
    %v2866 = vmul.f32 1.0, %v2865
    %v2867 = vrcp.pop %v2853
    %v2868 = vmul.f32 1.0, %v2867
    %v2869 = vrcp.pop %v2854
    %v2870 = vmul.f32 1.0, %v2869
    %v2871 = vrcp.pop %v2855
    %v2872 = vmul.f32 1.0, %v2871
    %v2873 = vrcp.pop %v2856
    %v2874 = vmul.f32 1.0, %v2873
    %v2875 = vtanh.pop %v2812
    %v2876 = vtanh.pop %v2816
    %v2877 = vtanh.pop %v2820
    %v2878 = vmul.f32 %v2860, %v2619
    %v2879 = vmul.f32 %v2866, %v2620
    %v2880 = vmul.f32 %v2872, %v2621
    %v2881 = vmul.f32 %v2858, %v2875
    %v2882 = vmul.f32 %v2864, %v2876
    %v2883 = vmul.f32 %v2870, %v2877
    %v2884 = vadd.f32 %v2878, %v2881
    %v2885 = vadd.f32 %v2879, %v2882
    %v2886 = vadd.f32 %v2880, %v2883
    %v2887 = vtanh.pop %v2884
    %v2888 = vtanh.pop %v2885
    %v2889 = vtanh.pop %v2886
    %v2890 = vmul.f32 %v2862, %v2887
    %v2891 = vmul.f32 %v2868, %v2888
    %v2892 = vmul.f32 %v2874, %v2889
    %v2893 = vld [vmem:[%s4] sm:$0xff]
    %v2894 = vld [vmem:[%s4 + $0x8] sm:$0xff]
    %v2895 = vld [vmem:[%s4 + $0x10] sm:$0xff]
    %v2896 = vld [vmem:[%s4 + $0x18] sm:$0xff]
    %v2897 = vld [vmem:[%s4 + $0x20] sm:$0xff]
    %v2898 = vld [vmem:[%s4 + $0x28] sm:$0xff]
    %v2899 = vld [vmem:[%s4 + $0x30] sm:$0xff]
    %v2900 = vld [vmem:[%s4 + $0x38] sm:$0xff]
    %v2901 = vld [vmem:[%s4 + $0x40] sm:$0xff]
    %v2902 = vld [vmem:[%s4 + $0x48] sm:$0xff]
    %v2903 = vld [vmem:[%s4 + $0x50] sm:$0xff]
    %v2904 = vld [vmem:[%s4 + $0x58] sm:$0xff]
    %v2905 = vld [vmem:[%s4 + $0x60] sm:$0xff]
    %v2906 = vld [vmem:[%s4 + $0x68] sm:$0xff]
    %v2907 = vld [vmem:[%s4 + $0x70] sm:$0xff]
    %v2908 = vld [vmem:[%s4 + $0x78] sm:$0xff]
    %v2909 = vld [vmem:[%s5] sm:$0x1]
    %v2911 = vlaneseq
    %v2912 = vshrl.u32 %v2911, 7
    %v2913 = vsub.s32 0, %v2912
    %v2914 = vrot.slane %v2909, %v2913
    %2916 = vmatprep.subr.mxu0 0.0
    %2917 = vmatpush1.msra.mxu0 %v2893
    %2918 = vmatprep.subr.mxu0 0.0
    %2919 = vmatpush1.msra.mxu0 %v2894
    %2920 = vmatprep.subr.mxu0 0.0
    %2921 = vmatpush1.msra.mxu0 %v2895
    %2922 = vmatprep.subr.mxu0 0.0
    %2923 = vmatpush1.msra.mxu0 %v2896
    %2924 = vmatprep.subr.mxu0 0.0
    %2925 = vmatpush1.msra.mxu0 %v2897
    %2926 = vmatprep.subr.mxu0 0.0
    %2927 = vmatpush1.msra.mxu0 %v2898
    %2928 = vmatprep.subr.mxu0 0.0
    %2929 = vmatpush1.msra.mxu0 %v2899
    %2930 = vmatprep.subr.mxu0 0.0
    %2931 = vmatpush1.msra.mxu0 %v2900
    %2932 = vmatprep.subr.mxu0 0.0
    %2933 = vmatpush1.msra.mxu0 %v2901
    %2934 = vmatprep.subr.mxu0 0.0
    %2935 = vmatpush1.msra.mxu0 %v2902
    %2936 = vmatprep.subr.mxu0 0.0
    %2937 = vmatpush1.msra.mxu0 %v2903
    %2938 = vmatprep.subr.mxu0 0.0
    %2939 = vmatpush1.msra.mxu0 %v2904
    %2940 = vmatprep.subr.mxu0 0.0
    %2941 = vmatpush1.msra.mxu0 %v2905
    %2942 = vmatprep.subr.mxu0 0.0
    %2943 = vmatpush1.msra.mxu0 %v2906
    %2944 = vmatprep.subr.mxu0 0.0
    %2945 = vmatpush1.msra.mxu0 %v2907
    %2946 = vmatprep.subr.mxu0 0.0
    %2947 = vmatpush1.msra.mxu0 %v2908
    %2948 = vmatprep.subr.mxu0 0.0
    %2949 = vmatpush1.msra.mxu0 0.0
    %2950 = vmatprep.subr.mxu0 0.0
    %2951 = vmatpush1.msra.mxu0 0.0
    %2952 = vmatprep.subr.mxu0 0.0
    %2953 = vmatpush1.msra.mxu0 0.0
    %2954 = vmatprep.subr.mxu0 0.0
    %2955 = vmatpush1.msra.mxu0 0.0
    %2956 = vmatprep.subr.mxu0 0.0
    %2957 = vmatpush1.msra.mxu0 0.0
    %2958 = vmatprep.subr.mxu0 0.0
    %2959 = vmatpush1.msra.mxu0 0.0
    %2960 = vmatprep.subr.mxu0 0.0
    %2961 = vmatpush1.msra.mxu0 0.0
    %2962 = vmatprep.subr.mxu0 0.0
    %2963 = vmatpush1.msra.mxu0 0.0
    %2964 = vmatprep.subr.mxu0 0.0
    %2965 = vmatpush1.msra.mxu0 0.0
    %2966 = vmatprep.subr.mxu0 0.0
    %2967 = vmatpush1.msra.mxu0 0.0
    %2968 = vmatprep.subr.mxu0 0.0
    %2969 = vmatpush1.msra.mxu0 0.0
    %2970 = vmatprep.subr.mxu0 0.0
    %2971 = vmatpush1.msra.mxu0 0.0
    %2972 = vmatprep.subr.mxu0 0.0
    %2973 = vmatpush1.msra.mxu0 0.0
    %2974 = vmatprep.subr.mxu0 0.0
    %2975 = vmatpush1.msra.mxu0 0.0
    %2976 = vmatprep.subr.mxu0 0.0
    %2977 = vmatpush1.msra.mxu0 0.0
    %2978 = vmatprep.subr.mxu0 0.0
    %2979 = vmatpush1.msra.mxu0 0.0
    %2980 = vmatprep.mubr.f32.mxu0 0.0
    %2981 = vmatmul.mubr.f32.gmra.mrb[0].mxu0 %v2890
    %v2982 = vpop.f32.mrb[0].mxu0
    %v2983 = vadd.f32 %v2914, %v2982
    %v2984 = vpop.f32.mrb[0].mxu0
    %2985 = vmatprep.mubr.f32.mxu0 0.0
    %2986 = vmatmul.mubr.f32.gmra.mrb[0].mxu0 %v2891
    %v2987 = vpop.f32.mrb[0].mxu0
    %v2988 = vadd.f32 %v2914, %v2987
    %v2989 = vpop.f32.mrb[0].mxu0
    %2990 = vmatprep.mubr.f32.mxu0 0.0
    %2991 = vmatmul.mubr.f32.gmra.mrb[0].mxu0 %v2892
    %v2992 = vpop.f32.mrb[0].mxu0
    %v2993 = vadd.f32 %v2914, %v2992
    %v2994 = vpop.f32.mrb[0].mxu0
    %2995 = vdwg.mxu0
    %v2996 = vld [vmem:[%s6] sm:$0xff]
    %v2997 = vld [vmem:[%s6 + $0x8] sm:$0xff]
    %v2998 = vld [vmem:[%s6 + $0x10] sm:$0xff]
    %v2999 = vld [vmem:[%s6 + $0x18] sm:$0xff]
    %v3000 = vld [vmem:[%s6 + $0x20] sm:$0xff]
    %v3001 = vld [vmem:[%s6 + $0x28] sm:$0xff]
    %v3002 = vld [vmem:[%s6 + $0x30] sm:$0xff]
    %v3003 = vld [vmem:[%s6 + $0x38] sm:$0xff]
    %v3004 = vld [vmem:[%s6 + $0x40] sm:$0xff]
    %v3005 = vld [vmem:[%s6 + $0x48] sm:$0xff]
    %v3006 = vld [vmem:[%s6 + $0x50] sm:$0xff]
    %v3007 = vld [vmem:[%s6 + $0x58] sm:$0xff]
    %v3008 = vld [vmem:[%s6 + $0x60] sm:$0xff]
    %v3009 = vld [vmem:[%s6 + $0x68] sm:$0xff]
    %v3010 = vld [vmem:[%s6 + $0x70] sm:$0xff]
    %v3011 = vld [vmem:[%s6 + $0x78] sm:$0xff]
    %v3012 = vld [vmem:[%s7] sm:$0x1]
    %v3014 = vlaneseq
    %v3015 = vshrl.u32 %v3014, 7
    %v3016 = vsub.s32 0, %v3015
    %v3017 = vrot.slane %v3012, %v3016
    %3019 = vmatprep.subr.mxu0 0.0
    %3020 = vmatpush1.msra.mxu0 %v2996
    %3021 = vmatprep.subr.mxu0 0.0
    %3022 = vmatpush1.msra.mxu0 %v2997
    %3023 = vmatprep.subr.mxu0 0.0
    %3024 = vmatpush1.msra.mxu0 %v2998
    %3025 = vmatprep.subr.mxu0 0.0
    %3026 = vmatpush1.msra.mxu0 %v2999
    %3027 = vmatprep.subr.mxu0 0.0
    %3028 = vmatpush1.msra.mxu0 %v3000
    %3029 = vmatprep.subr.mxu0 0.0
    %3030 = vmatpush1.msra.mxu0 %v3001
    %3031 = vmatprep.subr.mxu0 0.0
    %3032 = vmatpush1.msra.mxu0 %v3002
    %3033 = vmatprep.subr.mxu0 0.0
    %3034 = vmatpush1.msra.mxu0 %v3003
    %3035 = vmatprep.subr.mxu0 0.0
    %3036 = vmatpush1.msra.mxu0 %v3004
    %3037 = vmatprep.subr.mxu0 0.0
    %3038 = vmatpush1.msra.mxu0 %v3005
    %3039 = vmatprep.subr.mxu0 0.0
    %3040 = vmatpush1.msra.mxu0 %v3006
    %3041 = vmatprep.subr.mxu0 0.0
    %3042 = vmatpush1.msra.mxu0 %v3007
    %3043 = vmatprep.subr.mxu0 0.0
    %3044 = vmatpush1.msra.mxu0 %v3008
    %3045 = vmatprep.subr.mxu0 0.0
    %3046 = vmatpush1.msra.mxu0 %v3009
    %3047 = vmatprep.subr.mxu0 0.0
    %3048 = vmatpush1.msra.mxu0 %v3010
    %3049 = vmatprep.subr.mxu0 0.0
    %3050 = vmatpush1.msra.mxu0 %v3011
    %3051 = vmatprep.subr.mxu0 0.0
    %3052 = vmatpush1.msra.mxu0 0.0
    %3053 = vmatprep.subr.mxu0 0.0
    %3054 = vmatpush1.msra.mxu0 0.0
    %3055 = vmatprep.subr.mxu0 0.0
    %3056 = vmatpush1.msra.mxu0 0.0
    %3057 = vmatprep.subr.mxu0 0.0
    %3058 = vmatpush1.msra.mxu0 0.0
    %3059 = vmatprep.subr.mxu0 0.0
    %3060 = vmatpush1.msra.mxu0 0.0
    %3061 = vmatprep.subr.mxu0 0.0
    %3062 = vmatpush1.msra.mxu0 0.0
    %3063 = vmatprep.subr.mxu0 0.0
    %3064 = vmatpush1.msra.mxu0 0.0
    %3065 = vmatprep.subr.mxu0 0.0
    %3066 = vmatpush1.msra.mxu0 0.0
    %3067 = vmatprep.subr.mxu0 0.0
    %3068 = vmatpush1.msra.mxu0 0.0
    %3069 = vmatprep.subr.mxu0 0.0
    %3070 = vmatpush1.msra.mxu0 0.0
    %3071 = vmatprep.subr.mxu0 0.0
    %3072 = vmatpush1.msra.mxu0 0.0
    %3073 = vmatprep.subr.mxu0 0.0
    %3074 = vmatpush1.msra.mxu0 0.0
    %3075 = vmatprep.subr.mxu0 0.0
    %3076 = vmatpush1.msra.mxu0 0.0
    %3077 = vmatprep.subr.mxu0 0.0
    %3078 = vmatpush1.msra.mxu0 0.0
    %3079 = vmatprep.subr.mxu0 0.0
    %3080 = vmatpush1.msra.mxu0 0.0
    %3081 = vmatprep.subr.mxu0 0.0
    %3082 = vmatpush1.msra.mxu0 0.0
    %3083 = vmatprep.mubr.f32.mxu0 0.0
    %3084 = vmatmul.mubr.f32.gmra.mrb[0].mxu0 %v2890
    %v3085 = vpop.f32.mrb[0].mxu0
    %v3086 = vadd.f32 %v3017, %v3085
    %v3087 = vpop.f32.mrb[0].mxu0
    %3088 = vmatprep.mubr.f32.mxu0 0.0
    %3089 = vmatmul.mubr.f32.gmra.mrb[0].mxu0 %v2891
    %v3090 = vpop.f32.mrb[0].mxu0
    %v3091 = vadd.f32 %v3017, %v3090
    %v3092 = vpop.f32.mrb[0].mxu0
    %3093 = vmatprep.mubr.f32.mxu0 0.0
    %3094 = vmatmul.mubr.f32.gmra.mrb[0].mxu0 %v2892
    %v3095 = vpop.f32.mrb[0].mxu0
    %v3096 = vadd.f32 %v3017, %v3095
    %v3097 = vpop.f32.mrb[0].mxu0
    %3098 = vdwg.mxu0
    %v3099 = vld [vmem:[%s8] sm:$0xff]
    %v3100 = vld [vmem:[%s8 + $0x8] sm:$0xff]
    %v3101 = vld [vmem:[%s8 + $0x10] sm:$0xff]
    %v3102 = vld [vmem:[%s8 + $0x18] sm:$0xff]
    %v3103 = vld [vmem:[%s8 + $0x20] sm:$0xff]
    %v3104 = vld [vmem:[%s8 + $0x28] sm:$0xff]
    %v3105 = vld [vmem:[%s8 + $0x30] sm:$0xff]
    %v3106 = vld [vmem:[%s8 + $0x38] sm:$0xff]
    %v3107 = vld [vmem:[%s8 + $0x40] sm:$0xff]
    %v3108 = vld [vmem:[%s8 + $0x48] sm:$0xff]
    %v3109 = vld [vmem:[%s8 + $0x50] sm:$0xff]
    %v3110 = vld [vmem:[%s8 + $0x58] sm:$0xff]
    %v3111 = vld [vmem:[%s8 + $0x60] sm:$0xff]
    %v3112 = vld [vmem:[%s8 + $0x68] sm:$0xff]
    %v3113 = vld [vmem:[%s8 + $0x70] sm:$0xff]
    %v3114 = vld [vmem:[%s8 + $0x78] sm:$0xff]
    %v3115 = vld [vmem:[%s9] sm:$0x1]
    %v3117 = vlaneseq
    %v3118 = vshrl.u32 %v3117, 7
    %v3119 = vsub.s32 0, %v3118
    %v3120 = vrot.slane %v3115, %v3119
    %3122 = vmatprep.subr.mxu0 0.0
    %3123 = vmatpush1.msra.mxu0 %v3099
    %3124 = vmatprep.subr.mxu0 0.0
    %3125 = vmatpush1.msra.mxu0 %v3100
    %3126 = vmatprep.subr.mxu0 0.0
    %3127 = vmatpush1.msra.mxu0 %v3101
    %3128 = vmatprep.subr.mxu0 0.0
    %3129 = vmatpush1.msra.mxu0 %v3102
    %3130 = vmatprep.subr.mxu0 0.0
    %3131 = vmatpush1.msra.mxu0 %v3103
    %3132 = vmatprep.subr.mxu0 0.0
    %3133 = vmatpush1.msra.mxu0 %v3104
    %3134 = vmatprep.subr.mxu0 0.0
    %3135 = vmatpush1.msra.mxu0 %v3105
    %3136 = vmatprep.subr.mxu0 0.0
    %3137 = vmatpush1.msra.mxu0 %v3106
    %3138 = vmatprep.subr.mxu0 0.0
    %3139 = vmatpush1.msra.mxu0 %v3107
    %3140 = vmatprep.subr.mxu0 0.0
    %3141 = vmatpush1.msra.mxu0 %v3108
    %3142 = vmatprep.subr.mxu0 0.0
    %3143 = vmatpush1.msra.mxu0 %v3109
    %3144 = vmatprep.subr.mxu0 0.0
    %3145 = vmatpush1.msra.mxu0 %v3110
    %3146 = vmatprep.subr.mxu0 0.0
    %3147 = vmatpush1.msra.mxu0 %v3111
    %3148 = vmatprep.subr.mxu0 0.0
    %3149 = vmatpush1.msra.mxu0 %v3112
    %3150 = vmatprep.subr.mxu0 0.0
    %3151 = vmatpush1.msra.mxu0 %v3113
    %3152 = vmatprep.subr.mxu0 0.0
    %3153 = vmatpush1.msra.mxu0 %v3114
    %3154 = vmatprep.subr.mxu0 0.0
    %3155 = vmatpush1.msra.mxu0 0.0
    %3156 = vmatprep.subr.mxu0 0.0
    %3157 = vmatpush1.msra.mxu0 0.0
    %3158 = vmatprep.subr.mxu0 0.0
    %3159 = vmatpush1.msra.mxu0 0.0
    %3160 = vmatprep.subr.mxu0 0.0
    %3161 = vmatpush1.msra.mxu0 0.0
    %3162 = vmatprep.subr.mxu0 0.0
    %3163 = vmatpush1.msra.mxu0 0.0
    %3164 = vmatprep.subr.mxu0 0.0
    %3165 = vmatpush1.msra.mxu0 0.0
    %3166 = vmatprep.subr.mxu0 0.0
    %3167 = vmatpush1.msra.mxu0 0.0
    %3168 = vmatprep.subr.mxu0 0.0
    %3169 = vmatpush1.msra.mxu0 0.0
    %3170 = vmatprep.subr.mxu0 0.0
    %3171 = vmatpush1.msra.mxu0 0.0
    %3172 = vmatprep.subr.mxu0 0.0
    %3173 = vmatpush1.msra.mxu0 0.0
    %3174 = vmatprep.subr.mxu0 0.0
    %3175 = vmatpush1.msra.mxu0 0.0
    %3176 = vmatprep.subr.mxu0 0.0
    %3177 = vmatpush1.msra.mxu0 0.0
    %3178 = vmatprep.subr.mxu0 0.0
    %3179 = vmatpush1.msra.mxu0 0.0
    %3180 = vmatprep.subr.mxu0 0.0
    %3181 = vmatpush1.msra.mxu0 0.0
    %3182 = vmatprep.subr.mxu0 0.0
    %3183 = vmatpush1.msra.mxu0 0.0
    %3184 = vmatprep.subr.mxu0 0.0
    %3185 = vmatpush1.msra.mxu0 0.0
    %3186 = vmatprep.mubr.f32.mxu0 0.0
    %3187 = vmatmul.mubr.f32.gmra.mrb[0].mxu0 %v2890
    %v3188 = vpop.f32.mrb[0].mxu0
    %v3189 = vadd.f32 %v3120, %v3188
    %v3190 = vpop.f32.mrb[0].mxu0
    %3191 = vmatprep.mubr.f32.mxu0 0.0
    %3192 = vmatmul.mubr.f32.gmra.mrb[0].mxu0 %v2891
    %v3193 = vpop.f32.mrb[0].mxu0
    %v3194 = vadd.f32 %v3120, %v3193
    %v3195 = vpop.f32.mrb[0].mxu0
    %3196 = vmatprep.mubr.f32.mxu0 0.0
    %3197 = vmatmul.mubr.f32.gmra.mrb[0].mxu0 %v2892
    %v3198 = vpop.f32.mrb[0].mxu0
    %v3199 = vadd.f32 %v3120, %v3198
    %v3200 = vpop.f32.mrb[0].mxu0
    %3201 = vdwg.mxu0
    %vm3202 = vcmask 523264
    %v3204 = vsel %vm3202, %v2983, 0
    %v3207 = vsel %vm3202, %v2988, 0
    %v3210 = vsel %vm3202, %v2993, 0
    %v3213 = vsel %vm3202, %v3086, 0
    %v3216 = vsel %vm3202, %v3091, 0
    %v3219 = vsel %vm3202, %v3096, 0
    %3221 = vmatprep.subr.mxu0 0.0
    %3222 = vmatpush1.xpose.msra.mxu0 %v3213
    %3223 = vmatprep.subr.mxu0 0.0
    %3224 = vmatpush1.xpose.msra.mxu0 %v3216
    %3225 = vmatprep.subr.mxu0 0.0
    %3226 = vmatpush1.xpose.msra.mxu0 %v3219
    %3227 = vmatprep.subr.mxu0 0.0
    %3228 = vmatpush1.xpose.msra.mxu0 0.0
    %3229 = vmatprep.subr.mxu0 0.0
    %3230 = vmatpush1.xpose.msra.mxu0 0.0
    %3231 = vmatprep.subr.mxu0 0.0
    %3232 = vmatpush1.xpose.msra.mxu0 0.0
    %3233 = vmatprep.subr.mxu0 0.0
    %3234 = vmatpush1.xpose.msra.mxu0 0.0
    %3235 = vmatprep.subr.mxu0 0.0
    %3236 = vmatpush1.xpose.msra.mxu0 0.0
    %3237 = vmatprep.subr.mxu0 0.0
    %3238 = vmatpush1.xpose.msra.mxu0 0.0
    %3239 = vmatprep.subr.mxu0 0.0
    %3240 = vmatpush1.xpose.msra.mxu0 0.0
    %3241 = vmatprep.subr.mxu0 0.0
    %3242 = vmatpush1.xpose.msra.mxu0 0.0
    %3243 = vmatprep.subr.mxu0 0.0
    %3244 = vmatpush1.xpose.msra.mxu0 0.0
    %3245 = vmatprep.subr.mxu0 0.0
    %3246 = vmatpush1.xpose.msra.mxu0 0.0
    %3247 = vmatprep.subr.mxu0 0.0
    %3248 = vmatpush1.xpose.msra.mxu0 0.0
    %3249 = vmatprep.subr.mxu0 0.0
    %3250 = vmatpush1.xpose.msra.mxu0 0.0
    %3251 = vmatprep.subr.mxu0 0.0
    %3252 = vmatpush1.xpose.msra.mxu0 0.0
    %3253 = vmatprep.subr.mxu0 0.0
    %3254 = vmatpush1.xpose.msra.mxu0 0.0
    %3255 = vmatprep.subr.mxu0 0.0
    %3256 = vmatpush1.xpose.msra.mxu0 0.0
    %3257 = vmatprep.subr.mxu0 0.0
    %3258 = vmatpush1.xpose.msra.mxu0 0.0
    %3259 = vmatprep.subr.mxu0 0.0
    %3260 = vmatpush1.xpose.msra.mxu0 0.0
    %3261 = vmatprep.subr.mxu0 0.0
    %3262 = vmatpush1.xpose.msra.mxu0 0.0
    %3263 = vmatprep.subr.mxu0 0.0
    %3264 = vmatpush1.xpose.msra.mxu0 0.0
    %3265 = vmatprep.subr.mxu0 0.0
    %3266 = vmatpush1.xpose.msra.mxu0 0.0
    %3267 = vmatprep.subr.mxu0 0.0
    %3268 = vmatpush1.xpose.msra.mxu0 0.0
    %3269 = vmatprep.subr.mxu0 0.0
    %3270 = vmatpush1.xpose.msra.mxu0 0.0
    %3271 = vmatprep.subr.mxu0 0.0
    %3272 = vmatpush1.xpose.msra.mxu0 0.0
    %3273 = vmatprep.subr.mxu0 0.0
    %3274 = vmatpush1.xpose.msra.mxu0 0.0
    %3275 = vmatprep.subr.mxu0 0.0
    %3276 = vmatpush1.xpose.msra.mxu0 0.0
    %3277 = vmatprep.subr.mxu0 0.0
    %3278 = vmatpush1.xpose.msra.mxu0 0.0
    %3279 = vmatprep.subr.mxu0 0.0
    %3280 = vmatpush1.xpose.msra.mxu0 0.0
    %3281 = vmatprep.subr.mxu0 0.0
    %3282 = vmatpush1.xpose.msra.mxu0 0.0
    %3283 = vmatprep.subr.mxu0 0.0
    %3284 = vmatpush1.xpose.msra.mxu0 0.0
    %3285 = vmatprep.mubr.f32.mxu0 0.0
    %3286 = vmatmul.mubr.f32.gmra.mrb[0].mxu0 %v3204
    %v3287 = vpop.f32.mrb[0].mxu0
    %v3288 = vadd.f32 0.0, %v3287
    %v3289 = vpop.f32.mrb[0].mxu0
    %3290 = vmatprep.mubr.f32.mxu0 0.0
    %3291 = vmatmul.mubr.f32.gmra.mrb[0].mxu0 %v3207
    %v3292 = vpop.f32.mrb[0].mxu0
    %v3293 = vadd.f32 0.0, %v3292
    %v3294 = vpop.f32.mrb[0].mxu0
    %3295 = vmatprep.mubr.f32.mxu0 0.0
    %3296 = vmatmul.mubr.f32.gmra.mrb[0].mxu0 %v3210
    %v3297 = vpop.f32.mrb[0].mxu0
    %v3298 = vadd.f32 0.0, %v3297
    %v3299 = vpop.f32.mrb[0].mxu0
    %3300 = vdwg.mxu0
    %v3301 = vmul.f32 %v3288, 0.125
    %v3302 = vmul.f32 %v3293, 0.125
    %v3303 = vmul.f32 %v3298, 0.125
    %v3304 = vld [vmem:[%s14] sm:$0xff]
    %v3305 = vld [vmem:[%s14 + $0x8] sm:$0xff]
    %v3306 = vld [vmem:[%s14 + $0x10] sm:$0xff]
    %v3307 = vadd.f32 %v3301, %v3304
    %v3308 = vadd.f32 %v3302, %v3305
    %v3309 = vadd.f32 %v3303, %v3306
    %vm3310 = vcmask 195584
    %v3311 = vsel %vm3310, %v3307, -inf
    %3312 = vmax.xlane.f32.xlu0 %v3311
    %v3313 = vpop.xlane.xlu0 %3312
    %v3314 = vsel %vm3310, %v3308, -inf
    %3315 = vmax.xlane.f32.xlu0 %v3314
    %v3316 = vpop.xlane.xlu0 %3315
    %v3317 = vsel %vm3310, %v3309, -inf
    %3318 = vmax.xlane.f32.xlu0 %v3317
    %v3319 = vpop.xlane.xlu0 %3318
    %v3320 = vsub.f32 %v3307, %v3313
    %v3321 = vsub.f32 %v3308, %v3316
    %v3322 = vsub.f32 %v3309, %v3319
    %v3323 = vmul.f32 %v3320, 1.442695
    %v3324 = vpow.pop %v3323
    %v3325 = vmul.f32 %v3321, 1.442695
    %v3326 = vpow.pop %v3325
    %v3327 = vmul.f32 %v3322, 1.442695
    %v3328 = vpow.pop %v3327
    %v3329 = vsel %vm3310, %v3324, 0.0
    %3330 = vadd.xlane.f32.xlu0 %v3329
    %v3331 = vpop.xlane.xlu0 %3330
    %v3332 = vsel %vm3310, %v3326, 0.0
    %3333 = vadd.xlane.f32.xlu0 %v3332
    %v3334 = vpop.xlane.xlu0 %3333
    %v3335 = vsel %vm3310, %v3328, 0.0
    %3336 = vadd.xlane.f32.xlu0 %v3335
    %v3337 = vpop.xlane.xlu0 %3336
    %v3338 = vrcp.pop %v3331
    %v3339 = vmul.f32 %v3324, %v3338
    %v3340 = vrcp.pop %v3334
    %v3341 = vmul.f32 %v3326, %v3340
    %v3342 = vrcp.pop %v3337
    %v3343 = vmul.f32 %v3328, %v3342
    %v3345 = vsel %vm3310, %v3339, 0
    %v3348 = vsel %vm3310, %v3341, 0
    %v3351 = vsel %vm3310, %v3343, 0
    %3353 = vmatprep.subr.mxu0 0.0
    %3354 = vmatpush1.msra.mxu0 %v3189
    %3355 = vmatprep.subr.mxu0 0.0
    %3356 = vmatpush1.msra.mxu0 %v3194
    %3357 = vmatprep.subr.mxu0 0.0
    %3358 = vmatpush1.msra.mxu0 %v3199
    %3359 = vmatprep.subr.mxu0 0.0
    %3360 = vmatpush1.msra.mxu0 0.0
    %3361 = vmatprep.subr.mxu0 0.0
    %3362 = vmatpush1.msra.mxu0 0.0
    %3363 = vmatprep.subr.mxu0 0.0
    %3364 = vmatpush1.msra.mxu0 0.0
    %3365 = vmatprep.subr.mxu0 0.0
    %3366 = vmatpush1.msra.mxu0 0.0
    %3367 = vmatprep.subr.mxu0 0.0
    %3368 = vmatpush1.msra.mxu0 0.0
    %3369 = vmatprep.subr.mxu0 0.0
    %3370 = vmatpush1.msra.mxu0 0.0
    %3371 = vmatprep.subr.mxu0 0.0
    %3372 = vmatpush1.msra.mxu0 0.0
    %3373 = vmatprep.subr.mxu0 0.0
    %3374 = vmatpush1.msra.mxu0 0.0
    %3375 = vmatprep.subr.mxu0 0.0
    %3376 = vmatpush1.msra.mxu0 0.0
    %3377 = vmatprep.subr.mxu0 0.0
    %3378 = vmatpush1.msra.mxu0 0.0
    %3379 = vmatprep.subr.mxu0 0.0
    %3380 = vmatpush1.msra.mxu0 0.0
    %3381 = vmatprep.subr.mxu0 0.0
    %3382 = vmatpush1.msra.mxu0 0.0
    %3383 = vmatprep.subr.mxu0 0.0
    %3384 = vmatpush1.msra.mxu0 0.0
    %3385 = vmatprep.subr.mxu0 0.0
    %3386 = vmatpush1.msra.mxu0 0.0
    %3387 = vmatprep.subr.mxu0 0.0
    %3388 = vmatpush1.msra.mxu0 0.0
    %3389 = vmatprep.subr.mxu0 0.0
    %3390 = vmatpush1.msra.mxu0 0.0
    %3391 = vmatprep.subr.mxu0 0.0
    %3392 = vmatpush1.msra.mxu0 0.0
    %3393 = vmatprep.subr.mxu0 0.0
    %3394 = vmatpush1.msra.mxu0 0.0
    %3395 = vmatprep.subr.mxu0 0.0
    %3396 = vmatpush1.msra.mxu0 0.0
    %3397 = vmatprep.subr.mxu0 0.0
    %3398 = vmatpush1.msra.mxu0 0.0
    %3399 = vmatprep.subr.mxu0 0.0
    %3400 = vmatpush1.msra.mxu0 0.0
    %3401 = vmatprep.subr.mxu0 0.0
    %3402 = vmatpush1.msra.mxu0 0.0
    %3403 = vmatprep.subr.mxu0 0.0
    %3404 = vmatpush1.msra.mxu0 0.0
    %3405 = vmatprep.subr.mxu0 0.0
    %3406 = vmatpush1.msra.mxu0 0.0
    %3407 = vmatprep.subr.mxu0 0.0
    %3408 = vmatpush1.msra.mxu0 0.0
    %3409 = vmatprep.subr.mxu0 0.0
    %3410 = vmatpush1.msra.mxu0 0.0
    %3411 = vmatprep.subr.mxu0 0.0
    %3412 = vmatpush1.msra.mxu0 0.0
    %3413 = vmatprep.subr.mxu0 0.0
    %3414 = vmatpush1.msra.mxu0 0.0
    %3415 = vmatprep.subr.mxu0 0.0
    %3416 = vmatpush1.msra.mxu0 0.0
    %3417 = vmatprep.mubr.f32.mxu0 0.0
    %3418 = vmatmul.mubr.f32.gmra.mrb[0].mxu0 %v3345
    %v3419 = vpop.f32.mrb[0].mxu0
    %v3420 = vadd.f32 0.0, %v3419
    %v3421 = vpop.f32.mrb[0].mxu0
    %3422 = vmatprep.mubr.f32.mxu0 0.0
    %3423 = vmatmul.mubr.f32.gmra.mrb[0].mxu0 %v3348
    %v3424 = vpop.f32.mrb[0].mxu0
    %v3425 = vadd.f32 0.0, %v3424
    %v3426 = vpop.f32.mrb[0].mxu0
    %3427 = vmatprep.mubr.f32.mxu0 0.0
    %3428 = vmatmul.mubr.f32.gmra.mrb[0].mxu0 %v3351
    %v3429 = vpop.f32.mrb[0].mxu0
    %v3430 = vadd.f32 0.0, %v3429
    %v3431 = vpop.f32.mrb[0].mxu0
    %3432 = vdwg.mxu0
    %v3433 = vld [vmem:[%s10] sm:$0xff]
    %v3434 = vld [vmem:[%s10 + $0x8] sm:$0xff]
    %v3435 = vld [vmem:[%s10 + $0x10] sm:$0xff]
    %v3436 = vld [vmem:[%s10 + $0x18] sm:$0xff]
    %v3437 = vld [vmem:[%s10 + $0x20] sm:$0xff]
    %v3438 = vld [vmem:[%s10 + $0x28] sm:$0xff]
    %v3439 = vld [vmem:[%s10 + $0x30] sm:$0xff]
    %v3440 = vld [vmem:[%s10 + $0x38] sm:$0xff]
    %v3441 = vld [vmem:[%s11] sm:$0x1]
    %v3443 = vlaneseq
    %v3444 = vshrl.u32 %v3443, 7
    %v3445 = vsub.s32 0, %v3444
    %v3446 = vrot.slane %v3441, %v3445
    %v3449 = vsel %vm3202, %v3420, 0
    %v3452 = vsel %vm3202, %v3425, 0
    %v3455 = vsel %vm3202, %v3430, 0
    %3457 = vmatprep.subr.mxu0 0.0
    %3458 = vmatpush1.msra.mxu0 %v3433
    %3459 = vmatprep.subr.mxu0 0.0
    %3460 = vmatpush1.msra.mxu0 %v3434
    %3461 = vmatprep.subr.mxu0 0.0
    %3462 = vmatpush1.msra.mxu0 %v3435
    %3463 = vmatprep.subr.mxu0 0.0
    %3464 = vmatpush1.msra.mxu0 %v3436
    %3465 = vmatprep.subr.mxu0 0.0
    %3466 = vmatpush1.msra.mxu0 %v3437
    %3467 = vmatprep.subr.mxu0 0.0
    %3468 = vmatpush1.msra.mxu0 %v3438
    %3469 = vmatprep.subr.mxu0 0.0
    %3470 = vmatpush1.msra.mxu0 %v3439
    %3471 = vmatprep.subr.mxu0 0.0
    %3472 = vmatpush1.msra.mxu0 %v3440
    %3473 = vmatprep.subr.mxu0 0.0
    %3474 = vmatpush1.msra.mxu0 0.0
    %3475 = vmatprep.subr.mxu0 0.0
    %3476 = vmatpush1.msra.mxu0 0.0
    %3477 = vmatprep.subr.mxu0 0.0
    %3478 = vmatpush1.msra.mxu0 0.0
    %3479 = vmatprep.subr.mxu0 0.0
    %3480 = vmatpush1.msra.mxu0 0.0
    %3481 = vmatprep.subr.mxu0 0.0
    %3482 = vmatpush1.msra.mxu0 0.0
    %3483 = vmatprep.subr.mxu0 0.0
    %3484 = vmatpush1.msra.mxu0 0.0
    %3485 = vmatprep.subr.mxu0 0.0
    %3486 = vmatpush1.msra.mxu0 0.0
    %3487 = vmatprep.subr.mxu0 0.0
    %3488 = vmatpush1.msra.mxu0 0.0
    %3489 = vmatprep.subr.mxu0 0.0
    %3490 = vmatpush1.msra.mxu0 0.0
    %3491 = vmatprep.subr.mxu0 0.0
    %3492 = vmatpush1.msra.mxu0 0.0
    %3493 = vmatprep.subr.mxu0 0.0
    %3494 = vmatpush1.msra.mxu0 0.0
    %3495 = vmatprep.subr.mxu0 0.0
    %3496 = vmatpush1.msra.mxu0 0.0
    %3497 = vmatprep.subr.mxu0 0.0
    %3498 = vmatpush1.msra.mxu0 0.0
    %3499 = vmatprep.subr.mxu0 0.0
    %3500 = vmatpush1.msra.mxu0 0.0
    %3501 = vmatprep.subr.mxu0 0.0
    %3502 = vmatpush1.msra.mxu0 0.0
    %3503 = vmatprep.subr.mxu0 0.0
    %3504 = vmatpush1.msra.mxu0 0.0
    %3505 = vmatprep.subr.mxu0 0.0
    %3506 = vmatpush1.msra.mxu0 0.0
    %3507 = vmatprep.subr.mxu0 0.0
    %3508 = vmatpush1.msra.mxu0 0.0
    %3509 = vmatprep.subr.mxu0 0.0
    %3510 = vmatpush1.msra.mxu0 0.0
    %3511 = vmatprep.subr.mxu0 0.0
    %3512 = vmatpush1.msra.mxu0 0.0
    %3513 = vmatprep.subr.mxu0 0.0
    %3514 = vmatpush1.msra.mxu0 0.0
    %3515 = vmatprep.subr.mxu0 0.0
    %3516 = vmatpush1.msra.mxu0 0.0
    %3517 = vmatprep.subr.mxu0 0.0
    %3518 = vmatpush1.msra.mxu0 0.0
    %3519 = vmatprep.subr.mxu0 0.0
    %3520 = vmatpush1.msra.mxu0 0.0
    %3521 = vmatprep.mubr.f32.mxu0 0.0
    %3522 = vmatmul.mubr.f32.gmra.mrb[0].mxu0 %v3449
    %v3523 = vpop.f32.mrb[0].mxu0
    %v3524 = vadd.f32 %v3446, %v3523
    %v3525 = vpop.f32.mrb[0].mxu0
    %3526 = vmatprep.mubr.f32.mxu0 0.0
    %3527 = vmatmul.mubr.f32.gmra.mrb[0].mxu0 %v3452
    %v3528 = vpop.f32.mrb[0].mxu0
    %v3529 = vadd.f32 %v3446, %v3528
    %v3530 = vpop.f32.mrb[0].mxu0
    %3531 = vmatprep.mubr.f32.mxu0 0.0
    %3532 = vmatmul.mubr.f32.gmra.mrb[0].mxu0 %v3455
    %v3533 = vpop.f32.mrb[0].mxu0
    %v3534 = vadd.f32 %v3446, %v3533
    %v3535 = vpop.f32.mrb[0].mxu0
    %3536 = vdwg.mxu0
    %vm3537 = vcmp.gt.f32.partialorder %v3524, 0.0
    %vm3538 = vcmp.gt.f32.partialorder %v3529, 0.0
    %vm3539 = vcmp.gt.f32.partialorder %v3534, 0.0
    %v3540 = vmul.f32 %v3524, 0.01
    %v3541 = vmul.f32 %v3529, 0.01
    %v3542 = vmul.f32 %v3534, 0.01
    %v3543 = vsel %vm3537, %v3524, %v3540
    %v3544 = vsel %vm3538, %v3529, %v3541
    %v3545 = vsel %vm3539, %v3534, %v3542
    %3546 = vst [vmem:[#allocation3] sm:$0xff] 0.0
    %vm3547 = vcmask 130048
    %3548 = vst.msk [vmem:[#allocation3 + $0x8] sm:$0xff] %vm3547, 0.0
    %vm3549 = vcmask 123904
    %3550 = vst.msk [vmem:[#allocation3] sm:$0x3] %vm3549, %v3543
    %v3552 = vrot.slane %v3543, 2
    %3553 = vrot.lane.b32.xlu0 %v3552, 16
    %v3554 = vpop.permute.xlu0 %3553
    %vm3556 = vcmask 255104
    %3557 = vst.msk [vmem:[#allocation3] sm:$0x3] %vm3556, %v3554
    %v3558 = vrot.slane %v3543, 4
    %3559 = vrot.lane.b32.xlu0 %v3558, 32
    %v3560 = vpop.permute.xlu0 %3559
    %vm3562 = vcmask 386304
    %3563 = vst.msk [vmem:[#allocation3] sm:$0x3] %vm3562, %v3560
    %v3564 = vrot.slane %v3543, 6
    %3565 = vrot.lane.b32.xlu0 %v3564, 48
    %v3566 = vpop.permute.xlu0 %3565
    %vm3568 = vcmask 517504
    %3569 = vst.msk [vmem:[#allocation3] sm:$0x3] %vm3568, %v3566
    %3571 = vrot.lane.b32.xlu0 %v3544, 64
    %v3572 = vpop.permute.xlu0 %3571
    %vm3574 = vcmask 648704
    %3575 = vst.msk [vmem:[#allocation3] sm:$0x3] %vm3574, %v3572
    %v3576 = vrot.slane %v3544, 2
    %3577 = vrot.lane.b32.xlu0 %v3576, 80
    %v3578 = vpop.permute.xlu0 %3577
    %vm3580 = vcmask 779904
    %3581 = vst.msk [vmem:[#allocation3] sm:$0x3] %vm3580, %v3578
    %v3582 = vrot.slane %v3544, 4
    %3583 = vrot.lane.b32.xlu0 %v3582, 96
    %v3584 = vpop.permute.xlu0 %3583
    %vm3586 = vcmask 911104
    %3587 = vst.msk [vmem:[#allocation3] sm:$0x3] %vm3586, %v3584
    %v3588 = vrot.slane %v3544, 6
    %3589 = vrot.lane.b32.xlu0 %v3588, 112
    %v3590 = vpop.permute.xlu0 %3589
    %vm3592 = vcmask 1042304
    %3593 = vst.msk [vmem:[#allocation3] sm:$0x3] %vm3592, %v3590
    %3594 = vst.msk [vmem:[#allocation3 + $0x8] sm:$0x3] %vm3549, %v3545
    %v3595 = vld [vmem:[#allocation3] sm:$0xff]
    %v3596 = vld [vmem:[#allocation3 + $0x8] sm:$0xff]
    %v3597 = vld [vmem:[%s12] sm:$0xff]
    %v3598 = vld [vmem:[%s12 + $0x8] sm:$0xff]
    %v3599 = vld [vmem:[%s12 + $0x10] sm:$0xff]
    %v3600 = vld [vmem:[%s12 + $0x18] sm:$0xff]
    %v3601 = vld [vmem:[%s12 + $0x20] sm:$0xff]
    %v3602 = vld [vmem:[%s12 + $0x28] sm:$0xff]
    %v3603 = vld [vmem:[%s12 + $0x30] sm:$0xff]
    %v3604 = vld [vmem:[%s12 + $0x38] sm:$0xff]
    %v3605 = vld [vmem:[%s12 + $0x40] sm:$0xff]
    %v3606 = vld [vmem:[%s12 + $0x48] sm:$0xff]
    %v3607 = vld [vmem:[%s12 + $0x50] sm:$0xff]
    %v3608 = vld [vmem:[%s12 + $0x58] sm:$0xff]
    %v3609 = vld [vmem:[%s12 + $0x60] sm:$0xff]
    %v3610 = vld [vmem:[%s12 + $0x68] sm:$0xff]
    %v3611 = vld [vmem:[%s12 + $0x70] sm:$0xff]
    %v3612 = vld [vmem:[%s12 + $0x78] sm:$0xff]
    %v3613 = vld [vmem:[%s12 + $0x80] sm:$0xff]
    %v3614 = vld [vmem:[%s12 + $0x88] sm:$0xff]
    %v3615 = vld [vmem:[%s13] sm:$0x1]
    %v3617 = vlaneseq
    %v3618 = vshrl.u32 %v3617, 7
    %v3619 = vsub.s32 0, %v3618
    %v3620 = vrot.slane %v3615, %v3619
    %v3623 = vsel %vm3547, %v3596, 0
    %3625 = vmatprep.subr.mxu0 0.0
    %3626 = vmatpush1.msra.mxu0 %v3597
    %3627 = vmatprep.subr.mxu0 0.0
    %3628 = vmatpush1.msra.mxu0 %v3598
    %3629 = vmatprep.subr.mxu0 0.0
    %3630 = vmatpush1.msra.mxu0 %v3599
    %3631 = vmatprep.subr.mxu0 0.0
    %3632 = vmatpush1.msra.mxu0 %v3600
    %3633 = vmatprep.subr.mxu0 0.0
    %3634 = vmatpush1.msra.mxu0 %v3601
    %3635 = vmatprep.subr.mxu0 0.0
    %3636 = vmatpush1.msra.mxu0 %v3602
    %3637 = vmatprep.subr.mxu0 0.0
    %3638 = vmatpush1.msra.mxu0 %v3603
    %3639 = vmatprep.subr.mxu0 0.0
    %3640 = vmatpush1.msra.mxu0 %v3604
    %3641 = vmatprep.subr.mxu0 0.0
    %3642 = vmatpush1.msra.mxu0 %v3605
    %3643 = vmatprep.subr.mxu0 0.0
    %3644 = vmatpush1.msra.mxu0 %v3606
    %3645 = vmatprep.subr.mxu0 0.0
    %3646 = vmatpush1.msra.mxu0 %v3607
    %3647 = vmatprep.subr.mxu0 0.0
    %3648 = vmatpush1.msra.mxu0 %v3608
    %3649 = vmatprep.subr.mxu0 0.0
    %3650 = vmatpush1.msra.mxu0 %v3609
    %3651 = vmatprep.subr.mxu0 0.0
    %3652 = vmatpush1.msra.mxu0 %v3610
    %3653 = vmatprep.subr.mxu0 0.0
    %3654 = vmatpush1.msra.mxu0 %v3611
    %3655 = vmatprep.subr.mxu0 0.0
    %3656 = vmatpush1.msra.mxu0 %v3612
    %3657 = vmatprep.subr.mxu0 0.0
    %3658 = vmatpush1.msra.mxu0 %v3613
    %3659 = vmatprep.subr.mxu0 0.0
    %3660 = vmatpush1.msra.mxu0 %v3614
    %3661 = vmatprep.subr.mxu0 0.0
    %3662 = vmatpush1.msra.mxu0 0.0
    %3663 = vmatprep.subr.mxu0 0.0
    %3664 = vmatpush1.msra.mxu0 0.0
    %3665 = vmatprep.subr.mxu0 0.0
    %3666 = vmatpush1.msra.mxu0 0.0
    %3667 = vmatprep.subr.mxu0 0.0
    %3668 = vmatpush1.msra.mxu0 0.0
    %3669 = vmatprep.subr.mxu0 0.0
    %3670 = vmatpush1.msra.mxu0 0.0
    %3671 = vmatprep.subr.mxu0 0.0
    %3672 = vmatpush1.msra.mxu0 0.0
    %3673 = vmatprep.subr.mxu0 0.0
    %3674 = vmatpush1.msra.mxu0 0.0
    %3675 = vmatprep.subr.mxu0 0.0
    %3676 = vmatpush1.msra.mxu0 0.0
    %3677 = vmatprep.subr.mxu0 0.0
    %3678 = vmatpush1.msra.mxu0 0.0
    %3679 = vmatprep.subr.mxu0 0.0
    %3680 = vmatpush1.msra.mxu0 0.0
    %3681 = vmatprep.subr.mxu0 0.0
    %3682 = vmatpush1.msra.mxu0 0.0
    %3683 = vmatprep.subr.mxu0 0.0
    %3684 = vmatpush1.msra.mxu0 0.0
    %3685 = vmatprep.subr.mxu0 0.0
    %3686 = vmatpush1.msra.mxu0 0.0
    %3687 = vmatprep.subr.mxu0 0.0
    %3688 = vmatpush1.msra.mxu0 0.0
    %3689 = vmatprep.mubr.f32.mxu0 %v3623
    %3690 = vmatmul.mubr.f32.gmra.mrb[0].mxu0 %v3595
    %v3691 = vpop.f32.mrb[0].mxu0
    %v3692 = vadd.f32 %v3620, %v3691
    %v3693 = vpop.f32.mrb[0].mxu0
    %3694 = vdwg.mxu0
    %3695 = vst [vmem:[#allocation4] sm:$0xff] %v3692
    // Predicated region
    $region62: #{tpu_custom_call.1} parent=1 // pred_check
      _
    $region63: #{tpu_custom_call.1} parent=1 // pred_check_branch
      %3697 = sbr.rel (0) target = $region65
    $region64: #{tpu_custom_call.1} parent=1 // pred_region
      %s3699 = ssub.s32 128, 128
      %3700 = vsyncadd [#allocation5], %s3699
      %s3702 = sshll.u32 [#allocation4], 4
      %s3703 = int_to_ptr.vmem [resolvable:$true] %s3702
      %3705 = dma.vmem_to_hbm [thread:$0]  %s3703, 128, %s15, [#allocation5]
    $region65: #{tpu_custom_call.1} parent=1 // pred_fallthru
      _
    // Predicated region
    $region66: #{tpu_custom_call.1} parent=1 // pred_check
      _
    $region67: #{tpu_custom_call.1} parent=1 // pred_check_branch
      %3707 = sbr.rel (0) target = $region69
    $region68: #{tpu_custom_call.1} parent=1 // pred_region
      %3708 = dma.done [#allocation5], 128
    $region69: #{tpu_custom_call.1} parent=1 // pred_fallthru
      _
    %3709 = vsyncpa [#allocation5], 1

</llo_original>
